<compile_context>
chip_gen: v7x
topology: tpu7x:2x2x1
jax: 0.10.0
libtpu: 0.0.40
codegen_flags: <defaults>
</compile_context>

<pallas_src>
import functools

import jax
import jax.numpy as jnp
from jax.experimental import pallas as pl
from jax.experimental.pallas import tpu as pltpu


def _round_up(x, m):
    return (x + m - 1) // m * m


# ----------------------------------------------------------------------------
# Fused kernel: 4 LSTM layers, full time loop, single invocation (no grid).
# ----------------------------------------------------------------------------
def _decoder_kernel(layer_cfg, T, B, x_ref, w_ref, b_ref, out_ref, *act_scratch):
    """layer_cfg: tuple of (d_in, H, wih_row_off, whh_row_off) per layer.

    x_ref       : (T*B, E)      time-major flattened input
    w_ref       : (Wrows, G)    bf16 slab of pre-transposed weights
    b_ref       : (L, G)        f32 fused biases (b_ih + b_hh), zero padded
    out_ref     : (B, T*H_last) lane-dense output slab
    act_scratch : one (T, B, H_l) f32 scratch per non-final layer
    """
    num_layers = len(layer_cfg)
    bias_all = b_ref[...]                                        # (L, G) f32

    # Current layer input as a time-major flattened (T*B, D_in) bf16 value.
    x = x_ref[...].astype(jnp.bfloat16)

    for l, (d_in, H, wih_off, whh_off) in enumerate(layer_cfg):
        wih = w_ref[wih_off:wih_off + d_in, :]                   # (D_in, G) bf16
        whh = w_ref[whh_off:whh_off + H, :]                      # (H,    G) bf16
        bias = bias_all[l:l + 1, :]                              # (1,    G) f32

        # Hoisted input->gates projection for ALL time steps in one MXU matmul,
        # fused bias added once.  Kept time-major so gx[t] is a contiguous
        # (B, G) block on the recurrent critical path.
        gx = jnp.dot(x, wih, preferred_element_type=jnp.float32) + bias
        gx = gx.reshape(T, B, -1)                                # (T, B, G) f32

        last = (l == num_layers - 1)
        s = None if last else act_scratch[l]

        h = jnp.zeros((B, H), jnp.float32)
        c = jnp.zeros((B, H), jnp.float32)

        # TODO(synk): hold whh resident in the MXU across the time loop via
        # pltpu.matmul_push_rhs / matmul_acc_lhs instead of re-pushing the RHS
        # every step; kept on the jnp.dot path here for lowering safety.
        for t in range(T):                                       # static, unrolled
            gates = gx[t] + jnp.dot(h.astype(jnp.bfloat16), whh,
                                    preferred_element_type=jnp.float32)  # (B, G)
            # Full-vreg activations: sigmoid(x) = 0.5*tanh(0.5*x) + 0.5, so the
            # whole gates value needs only 2 EUP pushes per step, then cheap
            # lane slices pick out the i/f/g/o blocks (PyTorch gate order).
            sg = jnp.tanh(gates * 0.5) * 0.5 + 0.5               # "sigmoid" lanes
            tg = jnp.tanh(gates)                                 # "tanh"    lanes
            i_g = sg[:, 0 * H:1 * H]
            f_g = sg[:, 1 * H:2 * H]
            g_g = tg[:, 2 * H:3 * H]
            o_g = sg[:, 3 * H:4 * H]
            c = f_g * c + i_g * g_g
            h = o_g * jnp.tanh(c)
            if last:
                # lane-offset write into the lane-dense (B, T*H) output slab
                out_ref[:, t * H:(t + 1) * H] = h.astype(out_ref.dtype)
            else:
                s[t] = h                                         # time-major scratch

        if not last:
            # Next layer's input: time-major scratch with leading dims collapsed.
            x = s[...].reshape(T * B, H).astype(jnp.bfloat16)


# ----------------------------------------------------------------------------
# Parameter construction (deterministic, PyTorch-style U(-1/sqrt(H), 1/sqrt(H)))
# ----------------------------------------------------------------------------
def _init_lstm_params(key, input_dim, hidden_dim, num_layers):
    params = []
    k = 1.0 / float(hidden_dim) ** 0.5
    for layer in range(num_layers):
        d_in = input_dim if layer == 0 else hidden_dim
        key, k1, k2, k3, k4 = jax.random.split(key, 5)
        params.append(dict(
            w_ih=jax.random.uniform(k1, (4 * hidden_dim, d_in), jnp.float32, -k, k),
            w_hh=jax.random.uniform(k2, (4 * hidden_dim, hidden_dim), jnp.float32, -k, k),
            b_ih=jax.random.uniform(k3, (4 * hidden_dim,), jnp.float32, -k, k),
            b_hh=jax.random.uniform(k4, (4 * hidden_dim,), jnp.float32, -k, k),
        ))
    return params, key


class DecoderPallas:
    """Mirror of the PyTorch Decoder: lstm1 (2 layers) -> lstm2 (2 layers)."""

    _ALIGN = 16  # bf16 sublane packing: keep slab row blocks tile-aligned

    def __init__(self, encoded_dim, hidden_dim1, output_dim, dropout, key):
        del dropout  # inference forward: nn.LSTM dropout is a no-op at eval
        self.lstm1, key = _init_lstm_params(key, encoded_dim, hidden_dim1, 2)
        self.lstm2, key = _init_lstm_params(key, hidden_dim1, output_dim, 2)
        self._out_dim = output_dim

        params = self.lstm1 + self.lstm2
        gmax = _round_up(max(4 * hidden_dim1, 4 * output_dim), 128)

        blocks, biases, cfg = [], [], []
        off = 0

        def _append(block):
            nonlocal off
            blocks.append(block)
            off += block.shape[0]
            pad = _round_up(off, self._ALIGN) - off
            if pad:
                blocks.append(jnp.zeros((pad, gmax), jnp.float32))
                off += pad

        for p in params:
            w_ih = jnp.asarray(p["w_ih"], jnp.float32)           # (4H, D_in)
            w_hh = jnp.asarray(p["w_hh"], jnp.float32)           # (4H, H)
            four_h, d_in = w_ih.shape
            hdim = w_hh.shape[1]

            wih_t = jnp.zeros((d_in, gmax), jnp.float32).at[:, :four_h].set(w_ih.T)
            whh_t = jnp.zeros((hdim, gmax), jnp.float32).at[:, :four_h].set(w_hh.T)
            fused_b = jnp.zeros((gmax,), jnp.float32).at[:four_h].set(
                jnp.asarray(p["b_ih"], jnp.float32) + jnp.asarray(p["b_hh"], jnp.float32))

            wih_off = off
            _append(wih_t)
            whh_off = off
            _append(whh_t)
            cfg.append((d_in, hdim, wih_off, whh_off))
            biases.append(fused_b)

        self._layer_cfg = tuple(cfg)
        # One contiguous bf16 weight slab (MXU operands) + one f32 bias slab:
        # 3 input DMAs total (x, weights, biases) instead of 13.
        self._w_slab = jnp.concatenate(blocks, axis=0).astype(jnp.bfloat16)
        self._b_slab = jnp.stack(biases, axis=0)                 # (L, gmax) f32

    def __call__(self, x):
        # x: (B, T, encoded_dim), batch_first exactly like the PyTorch module.
        B, T, E = x.shape
        # Time-major flatten once on the wrapper side (tiny), so every gx[t]
        # read inside the kernel is contiguous.
        x_tm = jnp.transpose(x, (1, 0, 2)).reshape(T * B, E)

        kernel = functools.partial(_decoder_kernel, self._layer_cfg, T, B)
        scratch = [pltpu.VMEM((T, B, H), jnp.float32)
                   for (_, H, _, _) in self._layer_cfg[:-1]]

        out_flat = pl.pallas_call(
            kernel,
            out_shape=jax.ShapeDtypeStruct((B, T * self._out_dim), x.dtype),
            scratch_shapes=scratch,
            compiler_params=pltpu.CompilerParams(
                vmem_limit_bytes=32 * 1024 * 1024),
        )(x_tm, self._w_slab, self._b_slab)

        # (B, T*out) -> (B, T, out): free bitcast-level reshape in the wrapper.
        return out_flat.reshape(B, T, self._out_dim)


# ----------------------------------------------------------------------------
# Pure-JAX f32 reference (lax.scan) for correctness check.
# ----------------------------------------------------------------------------
def _lstm_layer_ref(x_tbd, w_ih, w_hh, b_ih, b_hh):
    H = w_hh.shape[1]
    B = x_tbd.shape[1]

    def step(carry, x_t):
        h, c = carry
        gates = x_t @ w_ih.T + h @ w_hh.T + b_ih + b_hh
        i = jax.nn.sigmoid(gates[:, 0 * H:1 * H])
        f = jax.nn.sigmoid(gates[:, 1 * H:2 * H])
        g = jnp.tanh(gates[:, 2 * H:3 * H])
        o = jax.nn.sigmoid(gates[:, 3 * H:4 * H])
        c = f * c + i * g
        h = o * jnp.tanh(c)
        return (h, c), h

    init = (jnp.zeros((B, H), jnp.float32), jnp.zeros((B, H), jnp.float32))
    _, ys = jax.lax.scan(step, init, x_tbd)
    return ys


def decoder_ref(decoder, x_btd):
    x = jnp.transpose(x_btd, (1, 0, 2))   # time-major for scan
    for p in decoder.lstm1:
        x = _lstm_layer_ref(x, p["w_ih"], p["w_hh"], p["b_ih"], p["b_hh"])
    for p in decoder.lstm2:
        x = _lstm_layer_ref(x, p["w_ih"], p["w_hh"], p["b_ih"], p["b_hh"])
    return jnp.transpose(x, (1, 0, 2))


if __name__ == "__main__":
    key = jax.random.PRNGKey(0)
    key, xkey, pkey = jax.random.split(key, 3)

    B, T = 2, 8
    encoded_dim, hidden_dim1, output_dim = 8, 32, 16

    x = jax.random.normal(xkey, (B, T, encoded_dim), jnp.float32)

    decoder = DecoderPallas(encoded_dim, hidden_dim1, output_dim,
                            dropout=0.25, key=pkey)

    out = jax.block_until_ready(decoder(x))
    assert out.shape == (B, T, output_dim), out.shape

    ref = jax.block_until_ready(decoder_ref(decoder, x))
    # bf16 MXU operands (f32 accumulation) -> tolerance loosened vs pure f32.
    err = float(jnp.max(jnp.abs(out - ref)))
    assert err < 4e-2, f"max abs error {err}"

    print("KERNEL_OK")
</pallas_src>

<mosaic_0001>
module attributes {stable_mosaic.version = 11 : i64} {
  func.func @_decoder_kernel(%arg0: memref<16x8xf32, #tpu.memory_space<vmem>>, %arg1: memref<192x128xbf16, #tpu.memory_space<vmem>>, %arg2: memref<4x128xf32, #tpu.memory_space<vmem>>, %arg3: memref<2x128xf32, #tpu.memory_space<vmem>>, %arg4: memref<8x2x32xf32, #tpu.memory_space<vmem>>, %arg5: memref<8x2x32xf32, #tpu.memory_space<vmem>>, %arg6: memref<8x2x16xf32, #tpu.memory_space<vmem>>) attributes {dimension_semantics = [], scalar_prefetch = 0 : i64, scratch_operands = 3 : i64, tpu.core_type = #tpu.core_type<tc>} {
    %c0 = arith.constant 0 : index
    %c0_0 = arith.constant 0 : index
    %0 = vector.load %arg2[%c0, %c0_0] : memref<4x128xf32, #tpu.memory_space<vmem>>, vector<4x128xf32>
    %c0_1 = arith.constant 0 : index
    %c0_2 = arith.constant 0 : index
    %1 = vector.load %arg0[%c0_1, %c0_2] : memref<16x8xf32, #tpu.memory_space<vmem>>, vector<16x8xf32>
    %2 = arith.truncf %1 : vector<16x8xf32> to vector<16x8xbf16>
    %c0_3 = arith.constant 0 : index
    %c0_4 = arith.constant 0 : index
    %3 = vector.load %arg1[%c0_3, %c0_4] : memref<192x128xbf16, #tpu.memory_space<vmem>>, vector<8x128xbf16>
    %c16 = arith.constant 16 : index
    %c0_5 = arith.constant 0 : index
    %4 = vector.load %arg1[%c16, %c0_5] : memref<192x128xbf16, #tpu.memory_space<vmem>>, vector<32x128xbf16>
    %5 = vector.extract_strided_slice %0 {offsets = [0, 0], sizes = [1, 128], strides = [1, 1]} : vector<4x128xf32> to vector<1x128xf32>
    %cst = arith.constant dense<0.000000e+00> : vector<16x128xf32>
    %6 = tpu.matmul %2, %3, %cst {dimension_numbers = #tpu.dot_dimension_numbers<[1], [0], [0], [1], [0, 0, 1, 1], [], []>} : vector<16x8xbf16>, vector<8x128xbf16>, vector<16x128xf32> -> vector<16x128xf32>
    %7 = vector.broadcast %5 : vector<1x128xf32> to vector<16x128xf32>
    %8 = arith.addf %6, %7 : vector<16x128xf32>
    %9 = vector.shape_cast %8 : vector<16x128xf32> to vector<8x2x128xf32>
    %cst_6 = arith.constant 0.000000e+00 : f32
    %10 = vector.broadcast %cst_6 : f32 to vector<2x32xf32>
    %cst_7 = arith.constant 0.000000e+00 : f32
    %11 = vector.broadcast %cst_7 : f32 to vector<2x32xf32>
    %12 = vector.extract_strided_slice %9 {offsets = [0, 0, 0], sizes = [1, 2, 128], strides = [1, 1, 1]} : vector<8x2x128xf32> to vector<1x2x128xf32>
    %13 = vector.shape_cast %12 : vector<1x2x128xf32> to vector<2x128xf32>
    %14 = arith.truncf %10 : vector<2x32xf32> to vector<2x32xbf16>
    %cst_8 = arith.constant dense<0.000000e+00> : vector<2x128xf32>
    %15 = tpu.matmul %14, %4, %cst_8 {dimension_numbers = #tpu.dot_dimension_numbers<[1], [0], [0], [1], [0, 0, 1, 1], [], []>} : vector<2x32xbf16>, vector<32x128xbf16>, vector<2x128xf32> -> vector<2x128xf32>
    %16 = arith.addf %13, %15 : vector<2x128xf32>
    %cst_9 = arith.constant 5.000000e-01 : f32
    %17 = vector.broadcast %cst_9 : f32 to vector<2x128xf32>
    %18 = arith.mulf %16, %17 : vector<2x128xf32>
    %19 = math.tanh %18 : vector<2x128xf32>
    %cst_10 = arith.constant 5.000000e-01 : f32
    %20 = vector.broadcast %cst_10 : f32 to vector<2x128xf32>
    %21 = arith.mulf %19, %20 : vector<2x128xf32>
    %cst_11 = arith.constant 5.000000e-01 : f32
    %22 = vector.broadcast %cst_11 : f32 to vector<2x128xf32>
    %23 = arith.addf %21, %22 : vector<2x128xf32>
    %24 = math.tanh %16 : vector<2x128xf32>
    %25 = vector.extract_strided_slice %23 {offsets = [0, 0], sizes = [2, 32], strides = [1, 1]} : vector<2x128xf32> to vector<2x32xf32>
    %26 = vector.extract_strided_slice %23 {offsets = [0, 32], sizes = [2, 32], strides = [1, 1]} : vector<2x128xf32> to vector<2x32xf32>
    %27 = vector.extract_strided_slice %24 {offsets = [0, 64], sizes = [2, 32], strides = [1, 1]} : vector<2x128xf32> to vector<2x32xf32>
    %28 = vector.extract_strided_slice %23 {offsets = [0, 96], sizes = [2, 32], strides = [1, 1]} : vector<2x128xf32> to vector<2x32xf32>
    %29 = arith.mulf %26, %11 : vector<2x32xf32>
    %30 = arith.mulf %25, %27 : vector<2x32xf32>
    %31 = arith.addf %29, %30 : vector<2x32xf32>
    %32 = math.tanh %31 : vector<2x32xf32>
    %33 = arith.mulf %28, %32 : vector<2x32xf32>
    %c0_12 = arith.constant 0 : index
    %c0_13 = arith.constant 0 : index
    %c0_14 = arith.constant 0 : index
    %34 = vector.load %arg4[%c0_12, %c0_13, %c0_14] : memref<8x2x32xf32, #tpu.memory_space<vmem>>, vector<1x2x32xf32>
    %35 = vector.shape_cast %34 : vector<1x2x32xf32> to vector<2x32xf32>
    %36 = vector.shape_cast %33 : vector<2x32xf32> to vector<1x2x32xf32>
    tpu.vector_store %arg4[%c0_12, %c0_13, %c0_14], %36 {strides = array<i32>} : memref<8x2x32xf32, #tpu.memory_space<vmem>>, vector<1x2x32xf32>,
    %37 = vector.extract_strided_slice %9 {offsets = [1, 0, 0], sizes = [1, 2, 128], strides = [1, 1, 1]} : vector<8x2x128xf32> to vector<1x2x128xf32>
    %38 = vector.shape_cast %37 : vector<1x2x128xf32> to vector<2x128xf32>
    %39 = arith.truncf %33 : vector<2x32xf32> to vector<2x32xbf16>
    %cst_15 = arith.constant dense<0.000000e+00> : vector<2x128xf32>
    %40 = tpu.matmul %39, %4, %cst_15 {dimension_numbers = #tpu.dot_dimension_numbers<[1], [0], [0], [1], [0, 0, 1, 1], [], []>} : vector<2x32xbf16>, vector<32x128xbf16>, vector<2x128xf32> -> vector<2x128xf32>
    %41 = arith.addf %38, %40 : vector<2x128xf32>
    %cst_16 = arith.constant 5.000000e-01 : f32
    %42 = vector.broadcast %cst_16 : f32 to vector<2x128xf32>
    %43 = arith.mulf %41, %42 : vector<2x128xf32>
    %44 = math.tanh %43 : vector<2x128xf32>
    %cst_17 = arith.constant 5.000000e-01 : f32
    %45 = vector.broadcast %cst_17 : f32 to vector<2x128xf32>
    %46 = arith.mulf %44, %45 : vector<2x128xf32>
    %cst_18 = arith.constant 5.000000e-01 : f32
    %47 = vector.broadcast %cst_18 : f32 to vector<2x128xf32>
    %48 = arith.addf %46, %47 : vector<2x128xf32>
    %49 = math.tanh %41 : vector<2x128xf32>
    %50 = vector.extract_strided_slice %48 {offsets = [0, 0], sizes = [2, 32], strides = [1, 1]} : vector<2x128xf32> to vector<2x32xf32>
    %51 = vector.extract_strided_slice %48 {offsets = [0, 32], sizes = [2, 32], strides = [1, 1]} : vector<2x128xf32> to vector<2x32xf32>
    %52 = vector.extract_strided_slice %49 {offsets = [0, 64], sizes = [2, 32], strides = [1, 1]} : vector<2x128xf32> to vector<2x32xf32>
    %53 = vector.extract_strided_slice %48 {offsets = [0, 96], sizes = [2, 32], strides = [1, 1]} : vector<2x128xf32> to vector<2x32xf32>
    %54 = arith.mulf %51, %31 : vector<2x32xf32>
    %55 = arith.mulf %50, %52 : vector<2x32xf32>
    %56 = arith.addf %54, %55 : vector<2x32xf32>
    %57 = math.tanh %56 : vector<2x32xf32>
    %58 = arith.mulf %53, %57 : vector<2x32xf32>
    %c1 = arith.constant 1 : index
    %c0_19 = arith.constant 0 : index
    %c0_20 = arith.constant 0 : index
    %59 = vector.load %arg4[%c1, %c0_19, %c0_20] : memref<8x2x32xf32, #tpu.memory_space<vmem>>, vector<1x2x32xf32>
    %60 = vector.shape_cast %59 : vector<1x2x32xf32> to vector<2x32xf32>
    %61 = vector.shape_cast %58 : vector<2x32xf32> to vector<1x2x32xf32>
    tpu.vector_store %arg4[%c1, %c0_19, %c0_20], %61 {strides = array<i32>} : memref<8x2x32xf32, #tpu.memory_space<vmem>>, vector<1x2x32xf32>,
    %62 = vector.extract_strided_slice %9 {offsets = [2, 0, 0], sizes = [1, 2, 128], strides = [1, 1, 1]} : vector<8x2x128xf32> to vector<1x2x128xf32>
    %63 = vector.shape_cast %62 : vector<1x2x128xf32> to vector<2x128xf32>
    %64 = arith.truncf %58 : vector<2x32xf32> to vector<2x32xbf16>
    %cst_21 = arith.constant dense<0.000000e+00> : vector<2x128xf32>
    %65 = tpu.matmul %64, %4, %cst_21 {dimension_numbers = #tpu.dot_dimension_numbers<[1], [0], [0], [1], [0, 0, 1, 1], [], []>} : vector<2x32xbf16>, vector<32x128xbf16>, vector<2x128xf32> -> vector<2x128xf32>
    %66 = arith.addf %63, %65 : vector<2x128xf32>
    %cst_22 = arith.constant 5.000000e-01 : f32
    %67 = vector.broadcast %cst_22 : f32 to vector<2x128xf32>
    %68 = arith.mulf %66, %67 : vector<2x128xf32>
    %69 = math.tanh %68 : vector<2x128xf32>
    %cst_23 = arith.constant 5.000000e-01 : f32
    %70 = vector.broadcast %cst_23 : f32 to vector<2x128xf32>
    %71 = arith.mulf %69, %70 : vector<2x128xf32>
    %cst_24 = arith.constant 5.000000e-01 : f32
    %72 = vector.broadcast %cst_24 : f32 to vector<2x128xf32>
    %73 = arith.addf %71, %72 : vector<2x128xf32>
    %74 = math.tanh %66 : vector<2x128xf32>
    %75 = vector.extract_strided_slice %73 {offsets = [0, 0], sizes = [2, 32], strides = [1, 1]} : vector<2x128xf32> to vector<2x32xf32>
    %76 = vector.extract_strided_slice %73 {offsets = [0, 32], sizes = [2, 32], strides = [1, 1]} : vector<2x128xf32> to vector<2x32xf32>
    %77 = vector.extract_strided_slice %74 {offsets = [0, 64], sizes = [2, 32], strides = [1, 1]} : vector<2x128xf32> to vector<2x32xf32>
    %78 = vector.extract_strided_slice %73 {offsets = [0, 96], sizes = [2, 32], strides = [1, 1]} : vector<2x128xf32> to vector<2x32xf32>
    %79 = arith.mulf %76, %56 : vector<2x32xf32>
    %80 = arith.mulf %75, %77 : vector<2x32xf32>
    %81 = arith.addf %79, %80 : vector<2x32xf32>
    %82 = math.tanh %81 : vector<2x32xf32>
    %83 = arith.mulf %78, %82 : vector<2x32xf32>
    %c2 = arith.constant 2 : index
    %c0_25 = arith.constant 0 : index
    %c0_26 = arith.constant 0 : index
    %84 = vector.load %arg4[%c2, %c0_25, %c0_26] : memref<8x2x32xf32, #tpu.memory_space<vmem>>, vector<1x2x32xf32>
    %85 = vector.shape_cast %84 : vector<1x2x32xf32> to vector<2x32xf32>
    %86 = vector.shape_cast %83 : vector<2x32xf32> to vector<1x2x32xf32>
    tpu.vector_store %arg4[%c2, %c0_25, %c0_26], %86 {strides = array<i32>} : memref<8x2x32xf32, #tpu.memory_space<vmem>>, vector<1x2x32xf32>,
    %87 = vector.extract_strided_slice %9 {offsets = [3, 0, 0], sizes = [1, 2, 128], strides = [1, 1, 1]} : vector<8x2x128xf32> to vector<1x2x128xf32>
    %88 = vector.shape_cast %87 : vector<1x2x128xf32> to vector<2x128xf32>
    %89 = arith.truncf %83 : vector<2x32xf32> to vector<2x32xbf16>
    %cst_27 = arith.constant dense<0.000000e+00> : vector<2x128xf32>
    %90 = tpu.matmul %89, %4, %cst_27 {dimension_numbers = #tpu.dot_dimension_numbers<[1], [0], [0], [1], [0, 0, 1, 1], [], []>} : vector<2x32xbf16>, vector<32x128xbf16>, vector<2x128xf32> -> vector<2x128xf32>
    %91 = arith.addf %88, %90 : vector<2x128xf32>
    %cst_28 = arith.constant 5.000000e-01 : f32
    %92 = vector.broadcast %cst_28 : f32 to vector<2x128xf32>
    %93 = arith.mulf %91, %92 : vector<2x128xf32>
    %94 = math.tanh %93 : vector<2x128xf32>
    %cst_29 = arith.constant 5.000000e-01 : f32
    %95 = vector.broadcast %cst_29 : f32 to vector<2x128xf32>
    %96 = arith.mulf %94, %95 : vector<2x128xf32>
    %cst_30 = arith.constant 5.000000e-01 : f32
    %97 = vector.broadcast %cst_30 : f32 to vector<2x128xf32>
    %98 = arith.addf %96, %97 : vector<2x128xf32>
    %99 = math.tanh %91 : vector<2x128xf32>
    %100 = vector.extract_strided_slice %98 {offsets = [0, 0], sizes = [2, 32], strides = [1, 1]} : vector<2x128xf32> to vector<2x32xf32>
    %101 = vector.extract_strided_slice %98 {offsets = [0, 32], sizes = [2, 32], strides = [1, 1]} : vector<2x128xf32> to vector<2x32xf32>
    %102 = vector.extract_strided_slice %99 {offsets = [0, 64], sizes = [2, 32], strides = [1, 1]} : vector<2x128xf32> to vector<2x32xf32>
    %103 = vector.extract_strided_slice %98 {offsets = [0, 96], sizes = [2, 32], strides = [1, 1]} : vector<2x128xf32> to vector<2x32xf32>
    %104 = arith.mulf %101, %81 : vector<2x32xf32>
    %105 = arith.mulf %100, %102 : vector<2x32xf32>
    %106 = arith.addf %104, %105 : vector<2x32xf32>
    %107 = math.tanh %106 : vector<2x32xf32>
    %108 = arith.mulf %103, %107 : vector<2x32xf32>
    %c3 = arith.constant 3 : index
    %c0_31 = arith.constant 0 : index
    %c0_32 = arith.constant 0 : index
    %109 = vector.load %arg4[%c3, %c0_31, %c0_32] : memref<8x2x32xf32, #tpu.memory_space<vmem>>, vector<1x2x32xf32>
    %110 = vector.shape_cast %109 : vector<1x2x32xf32> to vector<2x32xf32>
    %111 = vector.shape_cast %108 : vector<2x32xf32> to vector<1x2x32xf32>
    tpu.vector_store %arg4[%c3, %c0_31, %c0_32], %111 {strides = array<i32>} : memref<8x2x32xf32, #tpu.memory_space<vmem>>, vector<1x2x32xf32>,
    %112 = vector.extract_strided_slice %9 {offsets = [4, 0, 0], sizes = [1, 2, 128], strides = [1, 1, 1]} : vector<8x2x128xf32> to vector<1x2x128xf32>
    %113 = vector.shape_cast %112 : vector<1x2x128xf32> to vector<2x128xf32>
    %114 = arith.truncf %108 : vector<2x32xf32> to vector<2x32xbf16>
    %cst_33 = arith.constant dense<0.000000e+00> : vector<2x128xf32>
    %115 = tpu.matmul %114, %4, %cst_33 {dimension_numbers = #tpu.dot_dimension_numbers<[1], [0], [0], [1], [0, 0, 1, 1], [], []>} : vector<2x32xbf16>, vector<32x128xbf16>, vector<2x128xf32> -> vector<2x128xf32>
    %116 = arith.addf %113, %115 : vector<2x128xf32>
    %cst_34 = arith.constant 5.000000e-01 : f32
    %117 = vector.broadcast %cst_34 : f32 to vector<2x128xf32>
    %118 = arith.mulf %116, %117 : vector<2x128xf32>
    %119 = math.tanh %118 : vector<2x128xf32>
    %cst_35 = arith.constant 5.000000e-01 : f32
    %120 = vector.broadcast %cst_35 : f32 to vector<2x128xf32>
    %121 = arith.mulf %119, %120 : vector<2x128xf32>
    %cst_36 = arith.constant 5.000000e-01 : f32
    %122 = vector.broadcast %cst_36 : f32 to vector<2x128xf32>
    %123 = arith.addf %121, %122 : vector<2x128xf32>
    %124 = math.tanh %116 : vector<2x128xf32>
    %125 = vector.extract_strided_slice %123 {offsets = [0, 0], sizes = [2, 32], strides = [1, 1]} : vector<2x128xf32> to vector<2x32xf32>
    %126 = vector.extract_strided_slice %123 {offsets = [0, 32], sizes = [2, 32], strides = [1, 1]} : vector<2x128xf32> to vector<2x32xf32>
    %127 = vector.extract_strided_slice %124 {offsets = [0, 64], sizes = [2, 32], strides = [1, 1]} : vector<2x128xf32> to vector<2x32xf32>
    %128 = vector.extract_strided_slice %123 {offsets = [0, 96], sizes = [2, 32], strides = [1, 1]} : vector<2x128xf32> to vector<2x32xf32>
    %129 = arith.mulf %126, %106 : vector<2x32xf32>
    %130 = arith.mulf %125, %127 : vector<2x32xf32>
    %131 = arith.addf %129, %130 : vector<2x32xf32>
    %132 = math.tanh %131 : vector<2x32xf32>
    %133 = arith.mulf %128, %132 : vector<2x32xf32>
    %c4 = arith.constant 4 : index
    %c0_37 = arith.constant 0 : index
    %c0_38 = arith.constant 0 : index
    %134 = vector.load %arg4[%c4, %c0_37, %c0_38] : memref<8x2x32xf32, #tpu.memory_space<vmem>>, vector<1x2x32xf32>
    %135 = vector.shape_cast %134 : vector<1x2x32xf32> to vector<2x32xf32>
    %136 = vector.shape_cast %133 : vector<2x32xf32> to vector<1x2x32xf32>
    tpu.vector_store %arg4[%c4, %c0_37, %c0_38], %136 {strides = array<i32>} : memref<8x2x32xf32, #tpu.memory_space<vmem>>, vector<1x2x32xf32>,
    %137 = vector.extract_strided_slice %9 {offsets = [5, 0, 0], sizes = [1, 2, 128], strides = [1, 1, 1]} : vector<8x2x128xf32> to vector<1x2x128xf32>
    %138 = vector.shape_cast %137 : vector<1x2x128xf32> to vector<2x128xf32>
    %139 = arith.truncf %133 : vector<2x32xf32> to vector<2x32xbf16>
    %cst_39 = arith.constant dense<0.000000e+00> : vector<2x128xf32>
    %140 = tpu.matmul %139, %4, %cst_39 {dimension_numbers = #tpu.dot_dimension_numbers<[1], [0], [0], [1], [0, 0, 1, 1], [], []>} : vector<2x32xbf16>, vector<32x128xbf16>, vector<2x128xf32> -> vector<2x128xf32>
    %141 = arith.addf %138, %140 : vector<2x128xf32>
    %cst_40 = arith.constant 5.000000e-01 : f32
    %142 = vector.broadcast %cst_40 : f32 to vector<2x128xf32>
    %143 = arith.mulf %141, %142 : vector<2x128xf32>
    %144 = math.tanh %143 : vector<2x128xf32>
    %cst_41 = arith.constant 5.000000e-01 : f32
    %145 = vector.broadcast %cst_41 : f32 to vector<2x128xf32>
    %146 = arith.mulf %144, %145 : vector<2x128xf32>
    %cst_42 = arith.constant 5.000000e-01 : f32
    %147 = vector.broadcast %cst_42 : f32 to vector<2x128xf32>
    %148 = arith.addf %146, %147 : vector<2x128xf32>
    %149 = math.tanh %141 : vector<2x128xf32>
    %150 = vector.extract_strided_slice %148 {offsets = [0, 0], sizes = [2, 32], strides = [1, 1]} : vector<2x128xf32> to vector<2x32xf32>
    %151 = vector.extract_strided_slice %148 {offsets = [0, 32], sizes = [2, 32], strides = [1, 1]} : vector<2x128xf32> to vector<2x32xf32>
    %152 = vector.extract_strided_slice %149 {offsets = [0, 64], sizes = [2, 32], strides = [1, 1]} : vector<2x128xf32> to vector<2x32xf32>
    %153 = vector.extract_strided_slice %148 {offsets = [0, 96], sizes = [2, 32], strides = [1, 1]} : vector<2x128xf32> to vector<2x32xf32>
    %154 = arith.mulf %151, %131 : vector<2x32xf32>
    %155 = arith.mulf %150, %152 : vector<2x32xf32>
    %156 = arith.addf %154, %155 : vector<2x32xf32>
    %157 = math.tanh %156 : vector<2x32xf32>
    %158 = arith.mulf %153, %157 : vector<2x32xf32>
    %c5 = arith.constant 5 : index
    %c0_43 = arith.constant 0 : index
    %c0_44 = arith.constant 0 : index
    %159 = vector.load %arg4[%c5, %c0_43, %c0_44] : memref<8x2x32xf32, #tpu.memory_space<vmem>>, vector<1x2x32xf32>
    %160 = vector.shape_cast %159 : vector<1x2x32xf32> to vector<2x32xf32>
    %161 = vector.shape_cast %158 : vector<2x32xf32> to vector<1x2x32xf32>
    tpu.vector_store %arg4[%c5, %c0_43, %c0_44], %161 {strides = array<i32>} : memref<8x2x32xf32, #tpu.memory_space<vmem>>, vector<1x2x32xf32>,
    %162 = vector.extract_strided_slice %9 {offsets = [6, 0, 0], sizes = [1, 2, 128], strides = [1, 1, 1]} : vector<8x2x128xf32> to vector<1x2x128xf32>
    %163 = vector.shape_cast %162 : vector<1x2x128xf32> to vector<2x128xf32>
    %164 = arith.truncf %158 : vector<2x32xf32> to vector<2x32xbf16>
    %cst_45 = arith.constant dense<0.000000e+00> : vector<2x128xf32>
    %165 = tpu.matmul %164, %4, %cst_45 {dimension_numbers = #tpu.dot_dimension_numbers<[1], [0], [0], [1], [0, 0, 1, 1], [], []>} : vector<2x32xbf16>, vector<32x128xbf16>, vector<2x128xf32> -> vector<2x128xf32>
    %166 = arith.addf %163, %165 : vector<2x128xf32>
    %cst_46 = arith.constant 5.000000e-01 : f32
    %167 = vector.broadcast %cst_46 : f32 to vector<2x128xf32>
    %168 = arith.mulf %166, %167 : vector<2x128xf32>
    %169 = math.tanh %168 : vector<2x128xf32>
    %cst_47 = arith.constant 5.000000e-01 : f32
    %170 = vector.broadcast %cst_47 : f32 to vector<2x128xf32>
    %171 = arith.mulf %169, %170 : vector<2x128xf32>
    %cst_48 = arith.constant 5.000000e-01 : f32
    %172 = vector.broadcast %cst_48 : f32 to vector<2x128xf32>
    %173 = arith.addf %171, %172 : vector<2x128xf32>
    %174 = math.tanh %166 : vector<2x128xf32>
    %175 = vector.extract_strided_slice %173 {offsets = [0, 0], sizes = [2, 32], strides = [1, 1]} : vector<2x128xf32> to vector<2x32xf32>
    %176 = vector.extract_strided_slice %173 {offsets = [0, 32], sizes = [2, 32], strides = [1, 1]} : vector<2x128xf32> to vector<2x32xf32>
    %177 = vector.extract_strided_slice %174 {offsets = [0, 64], sizes = [2, 32], strides = [1, 1]} : vector<2x128xf32> to vector<2x32xf32>
    %178 = vector.extract_strided_slice %173 {offsets = [0, 96], sizes = [2, 32], strides = [1, 1]} : vector<2x128xf32> to vector<2x32xf32>
    %179 = arith.mulf %176, %156 : vector<2x32xf32>
    %180 = arith.mulf %175, %177 : vector<2x32xf32>
    %181 = arith.addf %179, %180 : vector<2x32xf32>
    %182 = math.tanh %181 : vector<2x32xf32>
    %183 = arith.mulf %178, %182 : vector<2x32xf32>
    %c6 = arith.constant 6 : index
    %c0_49 = arith.constant 0 : index
    %c0_50 = arith.constant 0 : index
    %184 = vector.load %arg4[%c6, %c0_49, %c0_50] : memref<8x2x32xf32, #tpu.memory_space<vmem>>, vector<1x2x32xf32>
    %185 = vector.shape_cast %184 : vector<1x2x32xf32> to vector<2x32xf32>
    %186 = vector.shape_cast %183 : vector<2x32xf32> to vector<1x2x32xf32>
    tpu.vector_store %arg4[%c6, %c0_49, %c0_50], %186 {strides = array<i32>} : memref<8x2x32xf32, #tpu.memory_space<vmem>>, vector<1x2x32xf32>,
    %187 = vector.extract_strided_slice %9 {offsets = [7, 0, 0], sizes = [1, 2, 128], strides = [1, 1, 1]} : vector<8x2x128xf32> to vector<1x2x128xf32>
    %188 = vector.shape_cast %187 : vector<1x2x128xf32> to vector<2x128xf32>
    %189 = arith.truncf %183 : vector<2x32xf32> to vector<2x32xbf16>
    %cst_51 = arith.constant dense<0.000000e+00> : vector<2x128xf32>
    %190 = tpu.matmul %189, %4, %cst_51 {dimension_numbers = #tpu.dot_dimension_numbers<[1], [0], [0], [1], [0, 0, 1, 1], [], []>} : vector<2x32xbf16>, vector<32x128xbf16>, vector<2x128xf32> -> vector<2x128xf32>
    %191 = arith.addf %188, %190 : vector<2x128xf32>
    %cst_52 = arith.constant 5.000000e-01 : f32
    %192 = vector.broadcast %cst_52 : f32 to vector<2x128xf32>
    %193 = arith.mulf %191, %192 : vector<2x128xf32>
    %194 = math.tanh %193 : vector<2x128xf32>
    %cst_53 = arith.constant 5.000000e-01 : f32
    %195 = vector.broadcast %cst_53 : f32 to vector<2x128xf32>
    %196 = arith.mulf %194, %195 : vector<2x128xf32>
    %cst_54 = arith.constant 5.000000e-01 : f32
    %197 = vector.broadcast %cst_54 : f32 to vector<2x128xf32>
    %198 = arith.addf %196, %197 : vector<2x128xf32>
    %199 = math.tanh %191 : vector<2x128xf32>
    %200 = vector.extract_strided_slice %198 {offsets = [0, 0], sizes = [2, 32], strides = [1, 1]} : vector<2x128xf32> to vector<2x32xf32>
    %201 = vector.extract_strided_slice %198 {offsets = [0, 32], sizes = [2, 32], strides = [1, 1]} : vector<2x128xf32> to vector<2x32xf32>
    %202 = vector.extract_strided_slice %199 {offsets = [0, 64], sizes = [2, 32], strides = [1, 1]} : vector<2x128xf32> to vector<2x32xf32>
    %203 = vector.extract_strided_slice %198 {offsets = [0, 96], sizes = [2, 32], strides = [1, 1]} : vector<2x128xf32> to vector<2x32xf32>
    %204 = arith.mulf %201, %181 : vector<2x32xf32>
    %205 = arith.mulf %200, %202 : vector<2x32xf32>
    %206 = arith.addf %204, %205 : vector<2x32xf32>
    %207 = math.tanh %206 : vector<2x32xf32>
    %208 = arith.mulf %203, %207 : vector<2x32xf32>
    %c7 = arith.constant 7 : index
    %c0_55 = arith.constant 0 : index
    %c0_56 = arith.constant 0 : index
    %209 = vector.load %arg4[%c7, %c0_55, %c0_56] : memref<8x2x32xf32, #tpu.memory_space<vmem>>, vector<1x2x32xf32>
    %210 = vector.shape_cast %209 : vector<1x2x32xf32> to vector<2x32xf32>
    %211 = vector.shape_cast %208 : vector<2x32xf32> to vector<1x2x32xf32>
    tpu.vector_store %arg4[%c7, %c0_55, %c0_56], %211 {strides = array<i32>} : memref<8x2x32xf32, #tpu.memory_space<vmem>>, vector<1x2x32xf32>,
    %c0_57 = arith.constant 0 : index
    %c0_58 = arith.constant 0 : index
    %c0_59 = arith.constant 0 : index
    %212 = vector.load %arg4[%c0_57, %c0_58, %c0_59] : memref<8x2x32xf32, #tpu.memory_space<vmem>>, vector<8x2x32xf32>
    %213 = vector.shape_cast %212 : vector<8x2x32xf32> to vector<16x32xf32>
    %214 = arith.truncf %213 : vector<16x32xf32> to vector<16x32xbf16>
    %c48 = arith.constant 48 : index
    %c0_60 = arith.constant 0 : index
    %215 = vector.load %arg1[%c48, %c0_60] : memref<192x128xbf16, #tpu.memory_space<vmem>>, vector<32x128xbf16>
    %c80 = arith.constant 80 : index
    %c0_61 = arith.constant 0 : index
    %216 = vector.load %arg1[%c80, %c0_61] : memref<192x128xbf16, #tpu.memory_space<vmem>>, vector<32x128xbf16>
    %217 = vector.extract_strided_slice %0 {offsets = [1, 0], sizes = [1, 128], strides = [1, 1]} : vector<4x128xf32> to vector<1x128xf32>
    %cst_62 = arith.constant dense<0.000000e+00> : vector<16x128xf32>
    %218 = tpu.matmul %214, %215, %cst_62 {dimension_numbers = #tpu.dot_dimension_numbers<[1], [0], [0], [1], [0, 0, 1, 1], [], []>} : vector<16x32xbf16>, vector<32x128xbf16>, vector<16x128xf32> -> vector<16x128xf32>
    %219 = vector.broadcast %217 : vector<1x128xf32> to vector<16x128xf32>
    %220 = arith.addf %218, %219 : vector<16x128xf32>
    %221 = vector.shape_cast %220 : vector<16x128xf32> to vector<8x2x128xf32>
    %cst_63 = arith.constant 0.000000e+00 : f32
    %222 = vector.broadcast %cst_63 : f32 to vector<2x32xf32>
    %cst_64 = arith.constant 0.000000e+00 : f32
    %223 = vector.broadcast %cst_64 : f32 to vector<2x32xf32>
    %224 = vector.extract_strided_slice %221 {offsets = [0, 0, 0], sizes = [1, 2, 128], strides = [1, 1, 1]} : vector<8x2x128xf32> to vector<1x2x128xf32>
    %225 = vector.shape_cast %224 : vector<1x2x128xf32> to vector<2x128xf32>
    %226 = arith.truncf %222 : vector<2x32xf32> to vector<2x32xbf16>
    %cst_65 = arith.constant dense<0.000000e+00> : vector<2x128xf32>
    %227 = tpu.matmul %226, %216, %cst_65 {dimension_numbers = #tpu.dot_dimension_numbers<[1], [0], [0], [1], [0, 0, 1, 1], [], []>} : vector<2x32xbf16>, vector<32x128xbf16>, vector<2x128xf32> -> vector<2x128xf32>
    %228 = arith.addf %225, %227 : vector<2x128xf32>
    %cst_66 = arith.constant 5.000000e-01 : f32
    %229 = vector.broadcast %cst_66 : f32 to vector<2x128xf32>
    %230 = arith.mulf %228, %229 : vector<2x128xf32>
    %231 = math.tanh %230 : vector<2x128xf32>
    %cst_67 = arith.constant 5.000000e-01 : f32
    %232 = vector.broadcast %cst_67 : f32 to vector<2x128xf32>
    %233 = arith.mulf %231, %232 : vector<2x128xf32>
    %cst_68 = arith.constant 5.000000e-01 : f32
    %234 = vector.broadcast %cst_68 : f32 to vector<2x128xf32>
    %235 = arith.addf %233, %234 : vector<2x128xf32>
    %236 = math.tanh %228 : vector<2x128xf32>
    %237 = vector.extract_strided_slice %235 {offsets = [0, 0], sizes = [2, 32], strides = [1, 1]} : vector<2x128xf32> to vector<2x32xf32>
    %238 = vector.extract_strided_slice %235 {offsets = [0, 32], sizes = [2, 32], strides = [1, 1]} : vector<2x128xf32> to vector<2x32xf32>
    %239 = vector.extract_strided_slice %236 {offsets = [0, 64], sizes = [2, 32], strides = [1, 1]} : vector<2x128xf32> to vector<2x32xf32>
    %240 = vector.extract_strided_slice %235 {offsets = [0, 96], sizes = [2, 32], strides = [1, 1]} : vector<2x128xf32> to vector<2x32xf32>
    %241 = arith.mulf %238, %223 : vector<2x32xf32>
    %242 = arith.mulf %237, %239 : vector<2x32xf32>
    %243 = arith.addf %241, %242 : vector<2x32xf32>
    %244 = math.tanh %243 : vector<2x32xf32>
    %245 = arith.mulf %240, %244 : vector<2x32xf32>
    %c0_69 = arith.constant 0 : index
    %c0_70 = arith.constant 0 : index
    %c0_71 = arith.constant 0 : index
    %246 = vector.load %arg5[%c0_69, %c0_70, %c0_71] : memref<8x2x32xf32, #tpu.memory_space<vmem>>, vector<1x2x32xf32>
    %247 = vector.shape_cast %246 : vector<1x2x32xf32> to vector<2x32xf32>
    %248 = vector.shape_cast %245 : vector<2x32xf32> to vector<1x2x32xf32>
    tpu.vector_store %arg5[%c0_69, %c0_70, %c0_71], %248 {strides = array<i32>} : memref<8x2x32xf32, #tpu.memory_space<vmem>>, vector<1x2x32xf32>,
    %249 = vector.extract_strided_slice %221 {offsets = [1, 0, 0], sizes = [1, 2, 128], strides = [1, 1, 1]} : vector<8x2x128xf32> to vector<1x2x128xf32>
    %250 = vector.shape_cast %249 : vector<1x2x128xf32> to vector<2x128xf32>
    %251 = arith.truncf %245 : vector<2x32xf32> to vector<2x32xbf16>
    %cst_72 = arith.constant dense<0.000000e+00> : vector<2x128xf32>
    %252 = tpu.matmul %251, %216, %cst_72 {dimension_numbers = #tpu.dot_dimension_numbers<[1], [0], [0], [1], [0, 0, 1, 1], [], []>} : vector<2x32xbf16>, vector<32x128xbf16>, vector<2x128xf32> -> vector<2x128xf32>
    %253 = arith.addf %250, %252 : vector<2x128xf32>
    %cst_73 = arith.constant 5.000000e-01 : f32
    %254 = vector.broadcast %cst_73 : f32 to vector<2x128xf32>
    %255 = arith.mulf %253, %254 : vector<2x128xf32>
    %256 = math.tanh %255 : vector<2x128xf32>
    %cst_74 = arith.constant 5.000000e-01 : f32
    %257 = vector.broadcast %cst_74 : f32 to vector<2x128xf32>
    %258 = arith.mulf %256, %257 : vector<2x128xf32>
    %cst_75 = arith.constant 5.000000e-01 : f32
    %259 = vector.broadcast %cst_75 : f32 to vector<2x128xf32>
    %260 = arith.addf %258, %259 : vector<2x128xf32>
    %261 = math.tanh %253 : vector<2x128xf32>
    %262 = vector.extract_strided_slice %260 {offsets = [0, 0], sizes = [2, 32], strides = [1, 1]} : vector<2x128xf32> to vector<2x32xf32>
    %263 = vector.extract_strided_slice %260 {offsets = [0, 32], sizes = [2, 32], strides = [1, 1]} : vector<2x128xf32> to vector<2x32xf32>
    %264 = vector.extract_strided_slice %261 {offsets = [0, 64], sizes = [2, 32], strides = [1, 1]} : vector<2x128xf32> to vector<2x32xf32>
    %265 = vector.extract_strided_slice %260 {offsets = [0, 96], sizes = [2, 32], strides = [1, 1]} : vector<2x128xf32> to vector<2x32xf32>
    %266 = arith.mulf %263, %243 : vector<2x32xf32>
    %267 = arith.mulf %262, %264 : vector<2x32xf32>
    %268 = arith.addf %266, %267 : vector<2x32xf32>
    %269 = math.tanh %268 : vector<2x32xf32>
    %270 = arith.mulf %265, %269 : vector<2x32xf32>
    %c1_76 = arith.constant 1 : index
    %c0_77 = arith.constant 0 : index
    %c0_78 = arith.constant 0 : index
    %271 = vector.load %arg5[%c1_76, %c0_77, %c0_78] : memref<8x2x32xf32, #tpu.memory_space<vmem>>, vector<1x2x32xf32>
    %272 = vector.shape_cast %271 : vector<1x2x32xf32> to vector<2x32xf32>
    %273 = vector.shape_cast %270 : vector<2x32xf32> to vector<1x2x32xf32>
    tpu.vector_store %arg5[%c1_76, %c0_77, %c0_78], %273 {strides = array<i32>} : memref<8x2x32xf32, #tpu.memory_space<vmem>>, vector<1x2x32xf32>,
    %274 = vector.extract_strided_slice %221 {offsets = [2, 0, 0], sizes = [1, 2, 128], strides = [1, 1, 1]} : vector<8x2x128xf32> to vector<1x2x128xf32>
    %275 = vector.shape_cast %274 : vector<1x2x128xf32> to vector<2x128xf32>
    %276 = arith.truncf %270 : vector<2x32xf32> to vector<2x32xbf16>
    %cst_79 = arith.constant dense<0.000000e+00> : vector<2x128xf32>
    %277 = tpu.matmul %276, %216, %cst_79 {dimension_numbers = #tpu.dot_dimension_numbers<[1], [0], [0], [1], [0, 0, 1, 1], [], []>} : vector<2x32xbf16>, vector<32x128xbf16>, vector<2x128xf32> -> vector<2x128xf32>
    %278 = arith.addf %275, %277 : vector<2x128xf32>
    %cst_80 = arith.constant 5.000000e-01 : f32
    %279 = vector.broadcast %cst_80 : f32 to vector<2x128xf32>
    %280 = arith.mulf %278, %279 : vector<2x128xf32>
    %281 = math.tanh %280 : vector<2x128xf32>
    %cst_81 = arith.constant 5.000000e-01 : f32
    %282 = vector.broadcast %cst_81 : f32 to vector<2x128xf32>
    %283 = arith.mulf %281, %282 : vector<2x128xf32>
    %cst_82 = arith.constant 5.000000e-01 : f32
    %284 = vector.broadcast %cst_82 : f32 to vector<2x128xf32>
    %285 = arith.addf %283, %284 : vector<2x128xf32>
    %286 = math.tanh %278 : vector<2x128xf32>
    %287 = vector.extract_strided_slice %285 {offsets = [0, 0], sizes = [2, 32], strides = [1, 1]} : vector<2x128xf32> to vector<2x32xf32>
    %288 = vector.extract_strided_slice %285 {offsets = [0, 32], sizes = [2, 32], strides = [1, 1]} : vector<2x128xf32> to vector<2x32xf32>
    %289 = vector.extract_strided_slice %286 {offsets = [0, 64], sizes = [2, 32], strides = [1, 1]} : vector<2x128xf32> to vector<2x32xf32>
    %290 = vector.extract_strided_slice %285 {offsets = [0, 96], sizes = [2, 32], strides = [1, 1]} : vector<2x128xf32> to vector<2x32xf32>
    %291 = arith.mulf %288, %268 : vector<2x32xf32>
    %292 = arith.mulf %287, %289 : vector<2x32xf32>
    %293 = arith.addf %291, %292 : vector<2x32xf32>
    %294 = math.tanh %293 : vector<2x32xf32>
    %295 = arith.mulf %290, %294 : vector<2x32xf32>
    %c2_83 = arith.constant 2 : index
    %c0_84 = arith.constant 0 : index
    %c0_85 = arith.constant 0 : index
    %296 = vector.load %arg5[%c2_83, %c0_84, %c0_85] : memref<8x2x32xf32, #tpu.memory_space<vmem>>, vector<1x2x32xf32>
    %297 = vector.shape_cast %296 : vector<1x2x32xf32> to vector<2x32xf32>
    %298 = vector.shape_cast %295 : vector<2x32xf32> to vector<1x2x32xf32>
    tpu.vector_store %arg5[%c2_83, %c0_84, %c0_85], %298 {strides = array<i32>} : memref<8x2x32xf32, #tpu.memory_space<vmem>>, vector<1x2x32xf32>,
    %299 = vector.extract_strided_slice %221 {offsets = [3, 0, 0], sizes = [1, 2, 128], strides = [1, 1, 1]} : vector<8x2x128xf32> to vector<1x2x128xf32>
    %300 = vector.shape_cast %299 : vector<1x2x128xf32> to vector<2x128xf32>
    %301 = arith.truncf %295 : vector<2x32xf32> to vector<2x32xbf16>
    %cst_86 = arith.constant dense<0.000000e+00> : vector<2x128xf32>
    %302 = tpu.matmul %301, %216, %cst_86 {dimension_numbers = #tpu.dot_dimension_numbers<[1], [0], [0], [1], [0, 0, 1, 1], [], []>} : vector<2x32xbf16>, vector<32x128xbf16>, vector<2x128xf32> -> vector<2x128xf32>
    %303 = arith.addf %300, %302 : vector<2x128xf32>
    %cst_87 = arith.constant 5.000000e-01 : f32
    %304 = vector.broadcast %cst_87 : f32 to vector<2x128xf32>
    %305 = arith.mulf %303, %304 : vector<2x128xf32>
    %306 = math.tanh %305 : vector<2x128xf32>
    %cst_88 = arith.constant 5.000000e-01 : f32
    %307 = vector.broadcast %cst_88 : f32 to vector<2x128xf32>
    %308 = arith.mulf %306, %307 : vector<2x128xf32>
    %cst_89 = arith.constant 5.000000e-01 : f32
    %309 = vector.broadcast %cst_89 : f32 to vector<2x128xf32>
    %310 = arith.addf %308, %309 : vector<2x128xf32>
    %311 = math.tanh %303 : vector<2x128xf32>
    %312 = vector.extract_strided_slice %310 {offsets = [0, 0], sizes = [2, 32], strides = [1, 1]} : vector<2x128xf32> to vector<2x32xf32>
    %313 = vector.extract_strided_slice %310 {offsets = [0, 32], sizes = [2, 32], strides = [1, 1]} : vector<2x128xf32> to vector<2x32xf32>
    %314 = vector.extract_strided_slice %311 {offsets = [0, 64], sizes = [2, 32], strides = [1, 1]} : vector<2x128xf32> to vector<2x32xf32>
    %315 = vector.extract_strided_slice %310 {offsets = [0, 96], sizes = [2, 32], strides = [1, 1]} : vector<2x128xf32> to vector<2x32xf32>
    %316 = arith.mulf %313, %293 : vector<2x32xf32>
    %317 = arith.mulf %312, %314 : vector<2x32xf32>
    %318 = arith.addf %316, %317 : vector<2x32xf32>
    %319 = math.tanh %318 : vector<2x32xf32>
    %320 = arith.mulf %315, %319 : vector<2x32xf32>
    %c3_90 = arith.constant 3 : index
    %c0_91 = arith.constant 0 : index
    %c0_92 = arith.constant 0 : index
    %321 = vector.load %arg5[%c3_90, %c0_91, %c0_92] : memref<8x2x32xf32, #tpu.memory_space<vmem>>, vector<1x2x32xf32>
    %322 = vector.shape_cast %321 : vector<1x2x32xf32> to vector<2x32xf32>
    %323 = vector.shape_cast %320 : vector<2x32xf32> to vector<1x2x32xf32>
    tpu.vector_store %arg5[%c3_90, %c0_91, %c0_92], %323 {strides = array<i32>} : memref<8x2x32xf32, #tpu.memory_space<vmem>>, vector<1x2x32xf32>,
    %324 = vector.extract_strided_slice %221 {offsets = [4, 0, 0], sizes = [1, 2, 128], strides = [1, 1, 1]} : vector<8x2x128xf32> to vector<1x2x128xf32>
    %325 = vector.shape_cast %324 : vector<1x2x128xf32> to vector<2x128xf32>
    %326 = arith.truncf %320 : vector<2x32xf32> to vector<2x32xbf16>
    %cst_93 = arith.constant dense<0.000000e+00> : vector<2x128xf32>
    %327 = tpu.matmul %326, %216, %cst_93 {dimension_numbers = #tpu.dot_dimension_numbers<[1], [0], [0], [1], [0, 0, 1, 1], [], []>} : vector<2x32xbf16>, vector<32x128xbf16>, vector<2x128xf32> -> vector<2x128xf32>
    %328 = arith.addf %325, %327 : vector<2x128xf32>
    %cst_94 = arith.constant 5.000000e-01 : f32
    %329 = vector.broadcast %cst_94 : f32 to vector<2x128xf32>
    %330 = arith.mulf %328, %329 : vector<2x128xf32>
    %331 = math.tanh %330 : vector<2x128xf32>
    %cst_95 = arith.constant 5.000000e-01 : f32
    %332 = vector.broadcast %cst_95 : f32 to vector<2x128xf32>
    %333 = arith.mulf %331, %332 : vector<2x128xf32>
    %cst_96 = arith.constant 5.000000e-01 : f32
    %334 = vector.broadcast %cst_96 : f32 to vector<2x128xf32>
    %335 = arith.addf %333, %334 : vector<2x128xf32>
    %336 = math.tanh %328 : vector<2x128xf32>
    %337 = vector.extract_strided_slice %335 {offsets = [0, 0], sizes = [2, 32], strides = [1, 1]} : vector<2x128xf32> to vector<2x32xf32>
    %338 = vector.extract_strided_slice %335 {offsets = [0, 32], sizes = [2, 32], strides = [1, 1]} : vector<2x128xf32> to vector<2x32xf32>
    %339 = vector.extract_strided_slice %336 {offsets = [0, 64], sizes = [2, 32], strides = [1, 1]} : vector<2x128xf32> to vector<2x32xf32>
    %340 = vector.extract_strided_slice %335 {offsets = [0, 96], sizes = [2, 32], strides = [1, 1]} : vector<2x128xf32> to vector<2x32xf32>
    %341 = arith.mulf %338, %318 : vector<2x32xf32>
    %342 = arith.mulf %337, %339 : vector<2x32xf32>
    %343 = arith.addf %341, %342 : vector<2x32xf32>
    %344 = math.tanh %343 : vector<2x32xf32>
    %345 = arith.mulf %340, %344 : vector<2x32xf32>
    %c4_97 = arith.constant 4 : index
    %c0_98 = arith.constant 0 : index
    %c0_99 = arith.constant 0 : index
    %346 = vector.load %arg5[%c4_97, %c0_98, %c0_99] : memref<8x2x32xf32, #tpu.memory_space<vmem>>, vector<1x2x32xf32>
    %347 = vector.shape_cast %346 : vector<1x2x32xf32> to vector<2x32xf32>
    %348 = vector.shape_cast %345 : vector<2x32xf32> to vector<1x2x32xf32>
    tpu.vector_store %arg5[%c4_97, %c0_98, %c0_99], %348 {strides = array<i32>} : memref<8x2x32xf32, #tpu.memory_space<vmem>>, vector<1x2x32xf32>,
    %349 = vector.extract_strided_slice %221 {offsets = [5, 0, 0], sizes = [1, 2, 128], strides = [1, 1, 1]} : vector<8x2x128xf32> to vector<1x2x128xf32>
    %350 = vector.shape_cast %349 : vector<1x2x128xf32> to vector<2x128xf32>
    %351 = arith.truncf %345 : vector<2x32xf32> to vector<2x32xbf16>
    %cst_100 = arith.constant dense<0.000000e+00> : vector<2x128xf32>
    %352 = tpu.matmul %351, %216, %cst_100 {dimension_numbers = #tpu.dot_dimension_numbers<[1], [0], [0], [1], [0, 0, 1, 1], [], []>} : vector<2x32xbf16>, vector<32x128xbf16>, vector<2x128xf32> -> vector<2x128xf32>
    %353 = arith.addf %350, %352 : vector<2x128xf32>
    %cst_101 = arith.constant 5.000000e-01 : f32
    %354 = vector.broadcast %cst_101 : f32 to vector<2x128xf32>
    %355 = arith.mulf %353, %354 : vector<2x128xf32>
    %356 = math.tanh %355 : vector<2x128xf32>
    %cst_102 = arith.constant 5.000000e-01 : f32
    %357 = vector.broadcast %cst_102 : f32 to vector<2x128xf32>
    %358 = arith.mulf %356, %357 : vector<2x128xf32>
    %cst_103 = arith.constant 5.000000e-01 : f32
    %359 = vector.broadcast %cst_103 : f32 to vector<2x128xf32>
    %360 = arith.addf %358, %359 : vector<2x128xf32>
    %361 = math.tanh %353 : vector<2x128xf32>
    %362 = vector.extract_strided_slice %360 {offsets = [0, 0], sizes = [2, 32], strides = [1, 1]} : vector<2x128xf32> to vector<2x32xf32>
    %363 = vector.extract_strided_slice %360 {offsets = [0, 32], sizes = [2, 32], strides = [1, 1]} : vector<2x128xf32> to vector<2x32xf32>
    %364 = vector.extract_strided_slice %361 {offsets = [0, 64], sizes = [2, 32], strides = [1, 1]} : vector<2x128xf32> to vector<2x32xf32>
    %365 = vector.extract_strided_slice %360 {offsets = [0, 96], sizes = [2, 32], strides = [1, 1]} : vector<2x128xf32> to vector<2x32xf32>
    %366 = arith.mulf %363, %343 : vector<2x32xf32>
    %367 = arith.mulf %362, %364 : vector<2x32xf32>
    %368 = arith.addf %366, %367 : vector<2x32xf32>
    %369 = math.tanh %368 : vector<2x32xf32>
    %370 = arith.mulf %365, %369 : vector<2x32xf32>
    %c5_104 = arith.constant 5 : index
    %c0_105 = arith.constant 0 : index
    %c0_106 = arith.constant 0 : index
    %371 = vector.load %arg5[%c5_104, %c0_105, %c0_106] : memref<8x2x32xf32, #tpu.memory_space<vmem>>, vector<1x2x32xf32>
    %372 = vector.shape_cast %371 : vector<1x2x32xf32> to vector<2x32xf32>
    %373 = vector.shape_cast %370 : vector<2x32xf32> to vector<1x2x32xf32>
    tpu.vector_store %arg5[%c5_104, %c0_105, %c0_106], %373 {strides = array<i32>} : memref<8x2x32xf32, #tpu.memory_space<vmem>>, vector<1x2x32xf32>,
    %374 = vector.extract_strided_slice %221 {offsets = [6, 0, 0], sizes = [1, 2, 128], strides = [1, 1, 1]} : vector<8x2x128xf32> to vector<1x2x128xf32>
    %375 = vector.shape_cast %374 : vector<1x2x128xf32> to vector<2x128xf32>
    %376 = arith.truncf %370 : vector<2x32xf32> to vector<2x32xbf16>
    %cst_107 = arith.constant dense<0.000000e+00> : vector<2x128xf32>
    %377 = tpu.matmul %376, %216, %cst_107 {dimension_numbers = #tpu.dot_dimension_numbers<[1], [0], [0], [1], [0, 0, 1, 1], [], []>} : vector<2x32xbf16>, vector<32x128xbf16>, vector<2x128xf32> -> vector<2x128xf32>
    %378 = arith.addf %375, %377 : vector<2x128xf32>
    %cst_108 = arith.constant 5.000000e-01 : f32
    %379 = vector.broadcast %cst_108 : f32 to vector<2x128xf32>
    %380 = arith.mulf %378, %379 : vector<2x128xf32>
    %381 = math.tanh %380 : vector<2x128xf32>
    %cst_109 = arith.constant 5.000000e-01 : f32
    %382 = vector.broadcast %cst_109 : f32 to vector<2x128xf32>
    %383 = arith.mulf %381, %382 : vector<2x128xf32>
    %cst_110 = arith.constant 5.000000e-01 : f32
    %384 = vector.broadcast %cst_110 : f32 to vector<2x128xf32>
    %385 = arith.addf %383, %384 : vector<2x128xf32>
    %386 = math.tanh %378 : vector<2x128xf32>
    %387 = vector.extract_strided_slice %385 {offsets = [0, 0], sizes = [2, 32], strides = [1, 1]} : vector<2x128xf32> to vector<2x32xf32>
    %388 = vector.extract_strided_slice %385 {offsets = [0, 32], sizes = [2, 32], strides = [1, 1]} : vector<2x128xf32> to vector<2x32xf32>
    %389 = vector.extract_strided_slice %386 {offsets = [0, 64], sizes = [2, 32], strides = [1, 1]} : vector<2x128xf32> to vector<2x32xf32>
    %390 = vector.extract_strided_slice %385 {offsets = [0, 96], sizes = [2, 32], strides = [1, 1]} : vector<2x128xf32> to vector<2x32xf32>
    %391 = arith.mulf %388, %368 : vector<2x32xf32>
    %392 = arith.mulf %387, %389 : vector<2x32xf32>
    %393 = arith.addf %391, %392 : vector<2x32xf32>
    %394 = math.tanh %393 : vector<2x32xf32>
    %395 = arith.mulf %390, %394 : vector<2x32xf32>
    %c6_111 = arith.constant 6 : index
    %c0_112 = arith.constant 0 : index
    %c0_113 = arith.constant 0 : index
    %396 = vector.load %arg5[%c6_111, %c0_112, %c0_113] : memref<8x2x32xf32, #tpu.memory_space<vmem>>, vector<1x2x32xf32>
    %397 = vector.shape_cast %396 : vector<1x2x32xf32> to vector<2x32xf32>
    %398 = vector.shape_cast %395 : vector<2x32xf32> to vector<1x2x32xf32>
    tpu.vector_store %arg5[%c6_111, %c0_112, %c0_113], %398 {strides = array<i32>} : memref<8x2x32xf32, #tpu.memory_space<vmem>>, vector<1x2x32xf32>,
    %399 = vector.extract_strided_slice %221 {offsets = [7, 0, 0], sizes = [1, 2, 128], strides = [1, 1, 1]} : vector<8x2x128xf32> to vector<1x2x128xf32>
    %400 = vector.shape_cast %399 : vector<1x2x128xf32> to vector<2x128xf32>
    %401 = arith.truncf %395 : vector<2x32xf32> to vector<2x32xbf16>
    %cst_114 = arith.constant dense<0.000000e+00> : vector<2x128xf32>
    %402 = tpu.matmul %401, %216, %cst_114 {dimension_numbers = #tpu.dot_dimension_numbers<[1], [0], [0], [1], [0, 0, 1, 1], [], []>} : vector<2x32xbf16>, vector<32x128xbf16>, vector<2x128xf32> -> vector<2x128xf32>
    %403 = arith.addf %400, %402 : vector<2x128xf32>
    %cst_115 = arith.constant 5.000000e-01 : f32
    %404 = vector.broadcast %cst_115 : f32 to vector<2x128xf32>
    %405 = arith.mulf %403, %404 : vector<2x128xf32>
    %406 = math.tanh %405 : vector<2x128xf32>
    %cst_116 = arith.constant 5.000000e-01 : f32
    %407 = vector.broadcast %cst_116 : f32 to vector<2x128xf32>
    %408 = arith.mulf %406, %407 : vector<2x128xf32>
    %cst_117 = arith.constant 5.000000e-01 : f32
    %409 = vector.broadcast %cst_117 : f32 to vector<2x128xf32>
    %410 = arith.addf %408, %409 : vector<2x128xf32>
    %411 = math.tanh %403 : vector<2x128xf32>
    %412 = vector.extract_strided_slice %410 {offsets = [0, 0], sizes = [2, 32], strides = [1, 1]} : vector<2x128xf32> to vector<2x32xf32>
    %413 = vector.extract_strided_slice %410 {offsets = [0, 32], sizes = [2, 32], strides = [1, 1]} : vector<2x128xf32> to vector<2x32xf32>
    %414 = vector.extract_strided_slice %411 {offsets = [0, 64], sizes = [2, 32], strides = [1, 1]} : vector<2x128xf32> to vector<2x32xf32>
    %415 = vector.extract_strided_slice %410 {offsets = [0, 96], sizes = [2, 32], strides = [1, 1]} : vector<2x128xf32> to vector<2x32xf32>
    %416 = arith.mulf %413, %393 : vector<2x32xf32>
    %417 = arith.mulf %412, %414 : vector<2x32xf32>
    %418 = arith.addf %416, %417 : vector<2x32xf32>
    %419 = math.tanh %418 : vector<2x32xf32>
    %420 = arith.mulf %415, %419 : vector<2x32xf32>
    %c7_118 = arith.constant 7 : index
    %c0_119 = arith.constant 0 : index
    %c0_120 = arith.constant 0 : index
    %421 = vector.load %arg5[%c7_118, %c0_119, %c0_120] : memref<8x2x32xf32, #tpu.memory_space<vmem>>, vector<1x2x32xf32>
    %422 = vector.shape_cast %421 : vector<1x2x32xf32> to vector<2x32xf32>
    %423 = vector.shape_cast %420 : vector<2x32xf32> to vector<1x2x32xf32>
    tpu.vector_store %arg5[%c7_118, %c0_119, %c0_120], %423 {strides = array<i32>} : memref<8x2x32xf32, #tpu.memory_space<vmem>>, vector<1x2x32xf32>,
    %c0_121 = arith.constant 0 : index
    %c0_122 = arith.constant 0 : index
    %c0_123 = arith.constant 0 : index
    %424 = vector.load %arg5[%c0_121, %c0_122, %c0_123] : memref<8x2x32xf32, #tpu.memory_space<vmem>>, vector<8x2x32xf32>
    %425 = vector.shape_cast %424 : vector<8x2x32xf32> to vector<16x32xf32>
    %426 = arith.truncf %425 : vector<16x32xf32> to vector<16x32xbf16>
    %c112 = arith.constant 112 : index
    %c0_124 = arith.constant 0 : index
    %427 = vector.load %arg1[%c112, %c0_124] : memref<192x128xbf16, #tpu.memory_space<vmem>>, vector<32x128xbf16>
    %c144 = arith.constant 144 : index
    %c0_125 = arith.constant 0 : index
    %428 = vector.load %arg1[%c144, %c0_125] : memref<192x128xbf16, #tpu.memory_space<vmem>>, vector<16x128xbf16>
    %429 = vector.extract_strided_slice %0 {offsets = [2, 0], sizes = [1, 128], strides = [1, 1]} : vector<4x128xf32> to vector<1x128xf32>
    %cst_126 = arith.constant dense<0.000000e+00> : vector<16x128xf32>
    %430 = tpu.matmul %426, %427, %cst_126 {dimension_numbers = #tpu.dot_dimension_numbers<[1], [0], [0], [1], [0, 0, 1, 1], [], []>} : vector<16x32xbf16>, vector<32x128xbf16>, vector<16x128xf32> -> vector<16x128xf32>
    %431 = vector.broadcast %429 : vector<1x128xf32> to vector<16x128xf32>
    %432 = arith.addf %430, %431 : vector<16x128xf32>
    %433 = vector.shape_cast %432 : vector<16x128xf32> to vector<8x2x128xf32>
    %cst_127 = arith.constant 0.000000e+00 : f32
    %434 = vector.broadcast %cst_127 : f32 to vector<2x16xf32>
    %cst_128 = arith.constant 0.000000e+00 : f32
    %435 = vector.broadcast %cst_128 : f32 to vector<2x16xf32>
    %436 = vector.extract_strided_slice %433 {offsets = [0, 0, 0], sizes = [1, 2, 128], strides = [1, 1, 1]} : vector<8x2x128xf32> to vector<1x2x128xf32>
    %437 = vector.shape_cast %436 : vector<1x2x128xf32> to vector<2x128xf32>
    %438 = arith.truncf %434 : vector<2x16xf32> to vector<2x16xbf16>
    %cst_129 = arith.constant dense<0.000000e+00> : vector<2x128xf32>
    %439 = tpu.matmul %438, %428, %cst_129 {dimension_numbers = #tpu.dot_dimension_numbers<[1], [0], [0], [1], [0, 0, 1, 1], [], []>} : vector<2x16xbf16>, vector<16x128xbf16>, vector<2x128xf32> -> vector<2x128xf32>
    %440 = arith.addf %437, %439 : vector<2x128xf32>
    %cst_130 = arith.constant 5.000000e-01 : f32
    %441 = vector.broadcast %cst_130 : f32 to vector<2x128xf32>
    %442 = arith.mulf %440, %441 : vector<2x128xf32>
    %443 = math.tanh %442 : vector<2x128xf32>
    %cst_131 = arith.constant 5.000000e-01 : f32
    %444 = vector.broadcast %cst_131 : f32 to vector<2x128xf32>
    %445 = arith.mulf %443, %444 : vector<2x128xf32>
    %cst_132 = arith.constant 5.000000e-01 : f32
    %446 = vector.broadcast %cst_132 : f32 to vector<2x128xf32>
    %447 = arith.addf %445, %446 : vector<2x128xf32>
    %448 = math.tanh %440 : vector<2x128xf32>
    %449 = vector.extract_strided_slice %447 {offsets = [0, 0], sizes = [2, 16], strides = [1, 1]} : vector<2x128xf32> to vector<2x16xf32>
    %450 = vector.extract_strided_slice %447 {offsets = [0, 16], sizes = [2, 16], strides = [1, 1]} : vector<2x128xf32> to vector<2x16xf32>
    %451 = vector.extract_strided_slice %448 {offsets = [0, 32], sizes = [2, 16], strides = [1, 1]} : vector<2x128xf32> to vector<2x16xf32>
    %452 = vector.extract_strided_slice %447 {offsets = [0, 48], sizes = [2, 16], strides = [1, 1]} : vector<2x128xf32> to vector<2x16xf32>
    %453 = arith.mulf %450, %435 : vector<2x16xf32>
    %454 = arith.mulf %449, %451 : vector<2x16xf32>
    %455 = arith.addf %453, %454 : vector<2x16xf32>
    %456 = math.tanh %455 : vector<2x16xf32>
    %457 = arith.mulf %452, %456 : vector<2x16xf32>
    %c0_133 = arith.constant 0 : index
    %c0_134 = arith.constant 0 : index
    %c0_135 = arith.constant 0 : index
    %458 = vector.load %arg6[%c0_133, %c0_134, %c0_135] : memref<8x2x16xf32, #tpu.memory_space<vmem>>, vector<1x2x16xf32>
    %459 = vector.shape_cast %458 : vector<1x2x16xf32> to vector<2x16xf32>
    %460 = vector.shape_cast %457 : vector<2x16xf32> to vector<1x2x16xf32>
    tpu.vector_store %arg6[%c0_133, %c0_134, %c0_135], %460 {strides = array<i32>} : memref<8x2x16xf32, #tpu.memory_space<vmem>>, vector<1x2x16xf32>,
    %461 = vector.extract_strided_slice %433 {offsets = [1, 0, 0], sizes = [1, 2, 128], strides = [1, 1, 1]} : vector<8x2x128xf32> to vector<1x2x128xf32>
    %462 = vector.shape_cast %461 : vector<1x2x128xf32> to vector<2x128xf32>
    %463 = arith.truncf %457 : vector<2x16xf32> to vector<2x16xbf16>
    %cst_136 = arith.constant dense<0.000000e+00> : vector<2x128xf32>
    %464 = tpu.matmul %463, %428, %cst_136 {dimension_numbers = #tpu.dot_dimension_numbers<[1], [0], [0], [1], [0, 0, 1, 1], [], []>} : vector<2x16xbf16>, vector<16x128xbf16>, vector<2x128xf32> -> vector<2x128xf32>
    %465 = arith.addf %462, %464 : vector<2x128xf32>
    %cst_137 = arith.constant 5.000000e-01 : f32
    %466 = vector.broadcast %cst_137 : f32 to vector<2x128xf32>
    %467 = arith.mulf %465, %466 : vector<2x128xf32>
    %468 = math.tanh %467 : vector<2x128xf32>
    %cst_138 = arith.constant 5.000000e-01 : f32
    %469 = vector.broadcast %cst_138 : f32 to vector<2x128xf32>
    %470 = arith.mulf %468, %469 : vector<2x128xf32>
    %cst_139 = arith.constant 5.000000e-01 : f32
    %471 = vector.broadcast %cst_139 : f32 to vector<2x128xf32>
    %472 = arith.addf %470, %471 : vector<2x128xf32>
    %473 = math.tanh %465 : vector<2x128xf32>
    %474 = vector.extract_strided_slice %472 {offsets = [0, 0], sizes = [2, 16], strides = [1, 1]} : vector<2x128xf32> to vector<2x16xf32>
    %475 = vector.extract_strided_slice %472 {offsets = [0, 16], sizes = [2, 16], strides = [1, 1]} : vector<2x128xf32> to vector<2x16xf32>
    %476 = vector.extract_strided_slice %473 {offsets = [0, 32], sizes = [2, 16], strides = [1, 1]} : vector<2x128xf32> to vector<2x16xf32>
    %477 = vector.extract_strided_slice %472 {offsets = [0, 48], sizes = [2, 16], strides = [1, 1]} : vector<2x128xf32> to vector<2x16xf32>
    %478 = arith.mulf %475, %455 : vector<2x16xf32>
    %479 = arith.mulf %474, %476 : vector<2x16xf32>
    %480 = arith.addf %478, %479 : vector<2x16xf32>
    %481 = math.tanh %480 : vector<2x16xf32>
    %482 = arith.mulf %477, %481 : vector<2x16xf32>
    %c1_140 = arith.constant 1 : index
    %c0_141 = arith.constant 0 : index
    %c0_142 = arith.constant 0 : index
    %483 = vector.load %arg6[%c1_140, %c0_141, %c0_142] : memref<8x2x16xf32, #tpu.memory_space<vmem>>, vector<1x2x16xf32>
    %484 = vector.shape_cast %483 : vector<1x2x16xf32> to vector<2x16xf32>
    %485 = vector.shape_cast %482 : vector<2x16xf32> to vector<1x2x16xf32>
    tpu.vector_store %arg6[%c1_140, %c0_141, %c0_142], %485 {strides = array<i32>} : memref<8x2x16xf32, #tpu.memory_space<vmem>>, vector<1x2x16xf32>,
    %486 = vector.extract_strided_slice %433 {offsets = [2, 0, 0], sizes = [1, 2, 128], strides = [1, 1, 1]} : vector<8x2x128xf32> to vector<1x2x128xf32>
    %487 = vector.shape_cast %486 : vector<1x2x128xf32> to vector<2x128xf32>
    %488 = arith.truncf %482 : vector<2x16xf32> to vector<2x16xbf16>
    %cst_143 = arith.constant dense<0.000000e+00> : vector<2x128xf32>
    %489 = tpu.matmul %488, %428, %cst_143 {dimension_numbers = #tpu.dot_dimension_numbers<[1], [0], [0], [1], [0, 0, 1, 1], [], []>} : vector<2x16xbf16>, vector<16x128xbf16>, vector<2x128xf32> -> vector<2x128xf32>
    %490 = arith.addf %487, %489 : vector<2x128xf32>
    %cst_144 = arith.constant 5.000000e-01 : f32
    %491 = vector.broadcast %cst_144 : f32 to vector<2x128xf32>
    %492 = arith.mulf %490, %491 : vector<2x128xf32>
    %493 = math.tanh %492 : vector<2x128xf32>
    %cst_145 = arith.constant 5.000000e-01 : f32
    %494 = vector.broadcast %cst_145 : f32 to vector<2x128xf32>
    %495 = arith.mulf %493, %494 : vector<2x128xf32>
    %cst_146 = arith.constant 5.000000e-01 : f32
    %496 = vector.broadcast %cst_146 : f32 to vector<2x128xf32>
    %497 = arith.addf %495, %496 : vector<2x128xf32>
    %498 = math.tanh %490 : vector<2x128xf32>
    %499 = vector.extract_strided_slice %497 {offsets = [0, 0], sizes = [2, 16], strides = [1, 1]} : vector<2x128xf32> to vector<2x16xf32>
    %500 = vector.extract_strided_slice %497 {offsets = [0, 16], sizes = [2, 16], strides = [1, 1]} : vector<2x128xf32> to vector<2x16xf32>
    %501 = vector.extract_strided_slice %498 {offsets = [0, 32], sizes = [2, 16], strides = [1, 1]} : vector<2x128xf32> to vector<2x16xf32>
    %502 = vector.extract_strided_slice %497 {offsets = [0, 48], sizes = [2, 16], strides = [1, 1]} : vector<2x128xf32> to vector<2x16xf32>
    %503 = arith.mulf %500, %480 : vector<2x16xf32>
    %504 = arith.mulf %499, %501 : vector<2x16xf32>
    %505 = arith.addf %503, %504 : vector<2x16xf32>
    %506 = math.tanh %505 : vector<2x16xf32>
    %507 = arith.mulf %502, %506 : vector<2x16xf32>
    %c2_147 = arith.constant 2 : index
    %c0_148 = arith.constant 0 : index
    %c0_149 = arith.constant 0 : index
    %508 = vector.load %arg6[%c2_147, %c0_148, %c0_149] : memref<8x2x16xf32, #tpu.memory_space<vmem>>, vector<1x2x16xf32>
    %509 = vector.shape_cast %508 : vector<1x2x16xf32> to vector<2x16xf32>
    %510 = vector.shape_cast %507 : vector<2x16xf32> to vector<1x2x16xf32>
    tpu.vector_store %arg6[%c2_147, %c0_148, %c0_149], %510 {strides = array<i32>} : memref<8x2x16xf32, #tpu.memory_space<vmem>>, vector<1x2x16xf32>,
    %511 = vector.extract_strided_slice %433 {offsets = [3, 0, 0], sizes = [1, 2, 128], strides = [1, 1, 1]} : vector<8x2x128xf32> to vector<1x2x128xf32>
    %512 = vector.shape_cast %511 : vector<1x2x128xf32> to vector<2x128xf32>
    %513 = arith.truncf %507 : vector<2x16xf32> to vector<2x16xbf16>
    %cst_150 = arith.constant dense<0.000000e+00> : vector<2x128xf32>
    %514 = tpu.matmul %513, %428, %cst_150 {dimension_numbers = #tpu.dot_dimension_numbers<[1], [0], [0], [1], [0, 0, 1, 1], [], []>} : vector<2x16xbf16>, vector<16x128xbf16>, vector<2x128xf32> -> vector<2x128xf32>
    %515 = arith.addf %512, %514 : vector<2x128xf32>
    %cst_151 = arith.constant 5.000000e-01 : f32
    %516 = vector.broadcast %cst_151 : f32 to vector<2x128xf32>
    %517 = arith.mulf %515, %516 : vector<2x128xf32>
    %518 = math.tanh %517 : vector<2x128xf32>
    %cst_152 = arith.constant 5.000000e-01 : f32
    %519 = vector.broadcast %cst_152 : f32 to vector<2x128xf32>
    %520 = arith.mulf %518, %519 : vector<2x128xf32>
    %cst_153 = arith.constant 5.000000e-01 : f32
    %521 = vector.broadcast %cst_153 : f32 to vector<2x128xf32>
    %522 = arith.addf %520, %521 : vector<2x128xf32>
    %523 = math.tanh %515 : vector<2x128xf32>
    %524 = vector.extract_strided_slice %522 {offsets = [0, 0], sizes = [2, 16], strides = [1, 1]} : vector<2x128xf32> to vector<2x16xf32>
    %525 = vector.extract_strided_slice %522 {offsets = [0, 16], sizes = [2, 16], strides = [1, 1]} : vector<2x128xf32> to vector<2x16xf32>
    %526 = vector.extract_strided_slice %523 {offsets = [0, 32], sizes = [2, 16], strides = [1, 1]} : vector<2x128xf32> to vector<2x16xf32>
    %527 = vector.extract_strided_slice %522 {offsets = [0, 48], sizes = [2, 16], strides = [1, 1]} : vector<2x128xf32> to vector<2x16xf32>
    %528 = arith.mulf %525, %505 : vector<2x16xf32>
    %529 = arith.mulf %524, %526 : vector<2x16xf32>
    %530 = arith.addf %528, %529 : vector<2x16xf32>
    %531 = math.tanh %530 : vector<2x16xf32>
    %532 = arith.mulf %527, %531 : vector<2x16xf32>
    %c3_154 = arith.constant 3 : index
    %c0_155 = arith.constant 0 : index
    %c0_156 = arith.constant 0 : index
    %533 = vector.load %arg6[%c3_154, %c0_155, %c0_156] : memref<8x2x16xf32, #tpu.memory_space<vmem>>, vector<1x2x16xf32>
    %534 = vector.shape_cast %533 : vector<1x2x16xf32> to vector<2x16xf32>
    %535 = vector.shape_cast %532 : vector<2x16xf32> to vector<1x2x16xf32>
    tpu.vector_store %arg6[%c3_154, %c0_155, %c0_156], %535 {strides = array<i32>} : memref<8x2x16xf32, #tpu.memory_space<vmem>>, vector<1x2x16xf32>,
    %536 = vector.extract_strided_slice %433 {offsets = [4, 0, 0], sizes = [1, 2, 128], strides = [1, 1, 1]} : vector<8x2x128xf32> to vector<1x2x128xf32>
    %537 = vector.shape_cast %536 : vector<1x2x128xf32> to vector<2x128xf32>
    %538 = arith.truncf %532 : vector<2x16xf32> to vector<2x16xbf16>
    %cst_157 = arith.constant dense<0.000000e+00> : vector<2x128xf32>
    %539 = tpu.matmul %538, %428, %cst_157 {dimension_numbers = #tpu.dot_dimension_numbers<[1], [0], [0], [1], [0, 0, 1, 1], [], []>} : vector<2x16xbf16>, vector<16x128xbf16>, vector<2x128xf32> -> vector<2x128xf32>
    %540 = arith.addf %537, %539 : vector<2x128xf32>
    %cst_158 = arith.constant 5.000000e-01 : f32
    %541 = vector.broadcast %cst_158 : f32 to vector<2x128xf32>
    %542 = arith.mulf %540, %541 : vector<2x128xf32>
    %543 = math.tanh %542 : vector<2x128xf32>
    %cst_159 = arith.constant 5.000000e-01 : f32
    %544 = vector.broadcast %cst_159 : f32 to vector<2x128xf32>
    %545 = arith.mulf %543, %544 : vector<2x128xf32>
    %cst_160 = arith.constant 5.000000e-01 : f32
    %546 = vector.broadcast %cst_160 : f32 to vector<2x128xf32>
    %547 = arith.addf %545, %546 : vector<2x128xf32>
    %548 = math.tanh %540 : vector<2x128xf32>
    %549 = vector.extract_strided_slice %547 {offsets = [0, 0], sizes = [2, 16], strides = [1, 1]} : vector<2x128xf32> to vector<2x16xf32>
    %550 = vector.extract_strided_slice %547 {offsets = [0, 16], sizes = [2, 16], strides = [1, 1]} : vector<2x128xf32> to vector<2x16xf32>
    %551 = vector.extract_strided_slice %548 {offsets = [0, 32], sizes = [2, 16], strides = [1, 1]} : vector<2x128xf32> to vector<2x16xf32>
    %552 = vector.extract_strided_slice %547 {offsets = [0, 48], sizes = [2, 16], strides = [1, 1]} : vector<2x128xf32> to vector<2x16xf32>
    %553 = arith.mulf %550, %530 : vector<2x16xf32>
    %554 = arith.mulf %549, %551 : vector<2x16xf32>
    %555 = arith.addf %553, %554 : vector<2x16xf32>
    %556 = math.tanh %555 : vector<2x16xf32>
    %557 = arith.mulf %552, %556 : vector<2x16xf32>
    %c4_161 = arith.constant 4 : index
    %c0_162 = arith.constant 0 : index
    %c0_163 = arith.constant 0 : index
    %558 = vector.load %arg6[%c4_161, %c0_162, %c0_163] : memref<8x2x16xf32, #tpu.memory_space<vmem>>, vector<1x2x16xf32>
    %559 = vector.shape_cast %558 : vector<1x2x16xf32> to vector<2x16xf32>
    %560 = vector.shape_cast %557 : vector<2x16xf32> to vector<1x2x16xf32>
    tpu.vector_store %arg6[%c4_161, %c0_162, %c0_163], %560 {strides = array<i32>} : memref<8x2x16xf32, #tpu.memory_space<vmem>>, vector<1x2x16xf32>,
    %561 = vector.extract_strided_slice %433 {offsets = [5, 0, 0], sizes = [1, 2, 128], strides = [1, 1, 1]} : vector<8x2x128xf32> to vector<1x2x128xf32>
    %562 = vector.shape_cast %561 : vector<1x2x128xf32> to vector<2x128xf32>
    %563 = arith.truncf %557 : vector<2x16xf32> to vector<2x16xbf16>
    %cst_164 = arith.constant dense<0.000000e+00> : vector<2x128xf32>
    %564 = tpu.matmul %563, %428, %cst_164 {dimension_numbers = #tpu.dot_dimension_numbers<[1], [0], [0], [1], [0, 0, 1, 1], [], []>} : vector<2x16xbf16>, vector<16x128xbf16>, vector<2x128xf32> -> vector<2x128xf32>
    %565 = arith.addf %562, %564 : vector<2x128xf32>
    %cst_165 = arith.constant 5.000000e-01 : f32
    %566 = vector.broadcast %cst_165 : f32 to vector<2x128xf32>
    %567 = arith.mulf %565, %566 : vector<2x128xf32>
    %568 = math.tanh %567 : vector<2x128xf32>
    %cst_166 = arith.constant 5.000000e-01 : f32
    %569 = vector.broadcast %cst_166 : f32 to vector<2x128xf32>
    %570 = arith.mulf %568, %569 : vector<2x128xf32>
    %cst_167 = arith.constant 5.000000e-01 : f32
    %571 = vector.broadcast %cst_167 : f32 to vector<2x128xf32>
    %572 = arith.addf %570, %571 : vector<2x128xf32>
    %573 = math.tanh %565 : vector<2x128xf32>
    %574 = vector.extract_strided_slice %572 {offsets = [0, 0], sizes = [2, 16], strides = [1, 1]} : vector<2x128xf32> to vector<2x16xf32>
    %575 = vector.extract_strided_slice %572 {offsets = [0, 16], sizes = [2, 16], strides = [1, 1]} : vector<2x128xf32> to vector<2x16xf32>
    %576 = vector.extract_strided_slice %573 {offsets = [0, 32], sizes = [2, 16], strides = [1, 1]} : vector<2x128xf32> to vector<2x16xf32>
    %577 = vector.extract_strided_slice %572 {offsets = [0, 48], sizes = [2, 16], strides = [1, 1]} : vector<2x128xf32> to vector<2x16xf32>
    %578 = arith.mulf %575, %555 : vector<2x16xf32>
    %579 = arith.mulf %574, %576 : vector<2x16xf32>
    %580 = arith.addf %578, %579 : vector<2x16xf32>
    %581 = math.tanh %580 : vector<2x16xf32>
    %582 = arith.mulf %577, %581 : vector<2x16xf32>
    %c5_168 = arith.constant 5 : index
    %c0_169 = arith.constant 0 : index
    %c0_170 = arith.constant 0 : index
    %583 = vector.load %arg6[%c5_168, %c0_169, %c0_170] : memref<8x2x16xf32, #tpu.memory_space<vmem>>, vector<1x2x16xf32>
    %584 = vector.shape_cast %583 : vector<1x2x16xf32> to vector<2x16xf32>
    %585 = vector.shape_cast %582 : vector<2x16xf32> to vector<1x2x16xf32>
    tpu.vector_store %arg6[%c5_168, %c0_169, %c0_170], %585 {strides = array<i32>} : memref<8x2x16xf32, #tpu.memory_space<vmem>>, vector<1x2x16xf32>,
    %586 = vector.extract_strided_slice %433 {offsets = [6, 0, 0], sizes = [1, 2, 128], strides = [1, 1, 1]} : vector<8x2x128xf32> to vector<1x2x128xf32>
    %587 = vector.shape_cast %586 : vector<1x2x128xf32> to vector<2x128xf32>
    %588 = arith.truncf %582 : vector<2x16xf32> to vector<2x16xbf16>
    %cst_171 = arith.constant dense<0.000000e+00> : vector<2x128xf32>
    %589 = tpu.matmul %588, %428, %cst_171 {dimension_numbers = #tpu.dot_dimension_numbers<[1], [0], [0], [1], [0, 0, 1, 1], [], []>} : vector<2x16xbf16>, vector<16x128xbf16>, vector<2x128xf32> -> vector<2x128xf32>
    %590 = arith.addf %587, %589 : vector<2x128xf32>
    %cst_172 = arith.constant 5.000000e-01 : f32
    %591 = vector.broadcast %cst_172 : f32 to vector<2x128xf32>
    %592 = arith.mulf %590, %591 : vector<2x128xf32>
    %593 = math.tanh %592 : vector<2x128xf32>
    %cst_173 = arith.constant 5.000000e-01 : f32
    %594 = vector.broadcast %cst_173 : f32 to vector<2x128xf32>
    %595 = arith.mulf %593, %594 : vector<2x128xf32>
    %cst_174 = arith.constant 5.000000e-01 : f32
    %596 = vector.broadcast %cst_174 : f32 to vector<2x128xf32>
    %597 = arith.addf %595, %596 : vector<2x128xf32>
    %598 = math.tanh %590 : vector<2x128xf32>
    %599 = vector.extract_strided_slice %597 {offsets = [0, 0], sizes = [2, 16], strides = [1, 1]} : vector<2x128xf32> to vector<2x16xf32>
    %600 = vector.extract_strided_slice %597 {offsets = [0, 16], sizes = [2, 16], strides = [1, 1]} : vector<2x128xf32> to vector<2x16xf32>
    %601 = vector.extract_strided_slice %598 {offsets = [0, 32], sizes = [2, 16], strides = [1, 1]} : vector<2x128xf32> to vector<2x16xf32>
    %602 = vector.extract_strided_slice %597 {offsets = [0, 48], sizes = [2, 16], strides = [1, 1]} : vector<2x128xf32> to vector<2x16xf32>
    %603 = arith.mulf %600, %580 : vector<2x16xf32>
    %604 = arith.mulf %599, %601 : vector<2x16xf32>
    %605 = arith.addf %603, %604 : vector<2x16xf32>
    %606 = math.tanh %605 : vector<2x16xf32>
    %607 = arith.mulf %602, %606 : vector<2x16xf32>
    %c6_175 = arith.constant 6 : index
    %c0_176 = arith.constant 0 : index
    %c0_177 = arith.constant 0 : index
    %608 = vector.load %arg6[%c6_175, %c0_176, %c0_177] : memref<8x2x16xf32, #tpu.memory_space<vmem>>, vector<1x2x16xf32>
    %609 = vector.shape_cast %608 : vector<1x2x16xf32> to vector<2x16xf32>
    %610 = vector.shape_cast %607 : vector<2x16xf32> to vector<1x2x16xf32>
    tpu.vector_store %arg6[%c6_175, %c0_176, %c0_177], %610 {strides = array<i32>} : memref<8x2x16xf32, #tpu.memory_space<vmem>>, vector<1x2x16xf32>,
    %611 = vector.extract_strided_slice %433 {offsets = [7, 0, 0], sizes = [1, 2, 128], strides = [1, 1, 1]} : vector<8x2x128xf32> to vector<1x2x128xf32>
    %612 = vector.shape_cast %611 : vector<1x2x128xf32> to vector<2x128xf32>
    %613 = arith.truncf %607 : vector<2x16xf32> to vector<2x16xbf16>
    %cst_178 = arith.constant dense<0.000000e+00> : vector<2x128xf32>
    %614 = tpu.matmul %613, %428, %cst_178 {dimension_numbers = #tpu.dot_dimension_numbers<[1], [0], [0], [1], [0, 0, 1, 1], [], []>} : vector<2x16xbf16>, vector<16x128xbf16>, vector<2x128xf32> -> vector<2x128xf32>
    %615 = arith.addf %612, %614 : vector<2x128xf32>
    %cst_179 = arith.constant 5.000000e-01 : f32
    %616 = vector.broadcast %cst_179 : f32 to vector<2x128xf32>
    %617 = arith.mulf %615, %616 : vector<2x128xf32>
    %618 = math.tanh %617 : vector<2x128xf32>
    %cst_180 = arith.constant 5.000000e-01 : f32
    %619 = vector.broadcast %cst_180 : f32 to vector<2x128xf32>
    %620 = arith.mulf %618, %619 : vector<2x128xf32>
    %cst_181 = arith.constant 5.000000e-01 : f32
    %621 = vector.broadcast %cst_181 : f32 to vector<2x128xf32>
    %622 = arith.addf %620, %621 : vector<2x128xf32>
    %623 = math.tanh %615 : vector<2x128xf32>
    %624 = vector.extract_strided_slice %622 {offsets = [0, 0], sizes = [2, 16], strides = [1, 1]} : vector<2x128xf32> to vector<2x16xf32>
    %625 = vector.extract_strided_slice %622 {offsets = [0, 16], sizes = [2, 16], strides = [1, 1]} : vector<2x128xf32> to vector<2x16xf32>
    %626 = vector.extract_strided_slice %623 {offsets = [0, 32], sizes = [2, 16], strides = [1, 1]} : vector<2x128xf32> to vector<2x16xf32>
    %627 = vector.extract_strided_slice %622 {offsets = [0, 48], sizes = [2, 16], strides = [1, 1]} : vector<2x128xf32> to vector<2x16xf32>
    %628 = arith.mulf %625, %605 : vector<2x16xf32>
    %629 = arith.mulf %624, %626 : vector<2x16xf32>
    %630 = arith.addf %628, %629 : vector<2x16xf32>
    %631 = math.tanh %630 : vector<2x16xf32>
    %632 = arith.mulf %627, %631 : vector<2x16xf32>
    %c7_182 = arith.constant 7 : index
    %c0_183 = arith.constant 0 : index
    %c0_184 = arith.constant 0 : index
    %633 = vector.load %arg6[%c7_182, %c0_183, %c0_184] : memref<8x2x16xf32, #tpu.memory_space<vmem>>, vector<1x2x16xf32>
    %634 = vector.shape_cast %633 : vector<1x2x16xf32> to vector<2x16xf32>
    %635 = vector.shape_cast %632 : vector<2x16xf32> to vector<1x2x16xf32>
    tpu.vector_store %arg6[%c7_182, %c0_183, %c0_184], %635 {strides = array<i32>} : memref<8x2x16xf32, #tpu.memory_space<vmem>>, vector<1x2x16xf32>,
    %c0_185 = arith.constant 0 : index
    %c0_186 = arith.constant 0 : index
    %c0_187 = arith.constant 0 : index
    %636 = vector.load %arg6[%c0_185, %c0_186, %c0_187] : memref<8x2x16xf32, #tpu.memory_space<vmem>>, vector<8x2x16xf32>
    %637 = vector.shape_cast %636 : vector<8x2x16xf32> to vector<16x16xf32>
    %638 = arith.truncf %637 : vector<16x16xf32> to vector<16x16xbf16>
    %c160 = arith.constant 160 : index
    %c0_188 = arith.constant 0 : index
    %639 = vector.load %arg1[%c160, %c0_188] : memref<192x128xbf16, #tpu.memory_space<vmem>>, vector<16x128xbf16>
    %c176 = arith.constant 176 : index
    %c0_189 = arith.constant 0 : index
    %640 = vector.load %arg1[%c176, %c0_189] : memref<192x128xbf16, #tpu.memory_space<vmem>>, vector<16x128xbf16>
    %641 = vector.extract_strided_slice %0 {offsets = [3, 0], sizes = [1, 128], strides = [1, 1]} : vector<4x128xf32> to vector<1x128xf32>
    %cst_190 = arith.constant dense<0.000000e+00> : vector<16x128xf32>
    %642 = tpu.matmul %638, %639, %cst_190 {dimension_numbers = #tpu.dot_dimension_numbers<[1], [0], [0], [1], [0, 0, 1, 1], [], []>} : vector<16x16xbf16>, vector<16x128xbf16>, vector<16x128xf32> -> vector<16x128xf32>
    %643 = vector.broadcast %641 : vector<1x128xf32> to vector<16x128xf32>
    %644 = arith.addf %642, %643 : vector<16x128xf32>
    %645 = vector.shape_cast %644 : vector<16x128xf32> to vector<8x2x128xf32>
    %cst_191 = arith.constant 0.000000e+00 : f32
    %646 = vector.broadcast %cst_191 : f32 to vector<2x16xf32>
    %cst_192 = arith.constant 0.000000e+00 : f32
    %647 = vector.broadcast %cst_192 : f32 to vector<2x16xf32>
    %648 = vector.extract_strided_slice %645 {offsets = [0, 0, 0], sizes = [1, 2, 128], strides = [1, 1, 1]} : vector<8x2x128xf32> to vector<1x2x128xf32>
    %649 = vector.shape_cast %648 : vector<1x2x128xf32> to vector<2x128xf32>
    %650 = arith.truncf %646 : vector<2x16xf32> to vector<2x16xbf16>
    %cst_193 = arith.constant dense<0.000000e+00> : vector<2x128xf32>
    %651 = tpu.matmul %650, %640, %cst_193 {dimension_numbers = #tpu.dot_dimension_numbers<[1], [0], [0], [1], [0, 0, 1, 1], [], []>} : vector<2x16xbf16>, vector<16x128xbf16>, vector<2x128xf32> -> vector<2x128xf32>
    %652 = arith.addf %649, %651 : vector<2x128xf32>
    %cst_194 = arith.constant 5.000000e-01 : f32
    %653 = vector.broadcast %cst_194 : f32 to vector<2x128xf32>
    %654 = arith.mulf %652, %653 : vector<2x128xf32>
    %655 = math.tanh %654 : vector<2x128xf32>
    %cst_195 = arith.constant 5.000000e-01 : f32
    %656 = vector.broadcast %cst_195 : f32 to vector<2x128xf32>
    %657 = arith.mulf %655, %656 : vector<2x128xf32>
    %cst_196 = arith.constant 5.000000e-01 : f32
    %658 = vector.broadcast %cst_196 : f32 to vector<2x128xf32>
    %659 = arith.addf %657, %658 : vector<2x128xf32>
    %660 = math.tanh %652 : vector<2x128xf32>
    %661 = vector.extract_strided_slice %659 {offsets = [0, 0], sizes = [2, 16], strides = [1, 1]} : vector<2x128xf32> to vector<2x16xf32>
    %662 = vector.extract_strided_slice %659 {offsets = [0, 16], sizes = [2, 16], strides = [1, 1]} : vector<2x128xf32> to vector<2x16xf32>
    %663 = vector.extract_strided_slice %660 {offsets = [0, 32], sizes = [2, 16], strides = [1, 1]} : vector<2x128xf32> to vector<2x16xf32>
    %664 = vector.extract_strided_slice %659 {offsets = [0, 48], sizes = [2, 16], strides = [1, 1]} : vector<2x128xf32> to vector<2x16xf32>
    %665 = arith.mulf %662, %647 : vector<2x16xf32>
    %666 = arith.mulf %661, %663 : vector<2x16xf32>
    %667 = arith.addf %665, %666 : vector<2x16xf32>
    %668 = math.tanh %667 : vector<2x16xf32>
    %669 = arith.mulf %664, %668 : vector<2x16xf32>
    %c0_197 = arith.constant 0 : index
    %c0_198 = arith.constant 0 : index
    %670 = vector.load %arg3[%c0_197, %c0_198] : memref<2x128xf32, #tpu.memory_space<vmem>>, vector<2x16xf32>
    tpu.vector_store %arg3[%c0_197, %c0_198], %669 {strides = array<i32>} : memref<2x128xf32, #tpu.memory_space<vmem>>, vector<2x16xf32>,
    %671 = vector.extract_strided_slice %645 {offsets = [1, 0, 0], sizes = [1, 2, 128], strides = [1, 1, 1]} : vector<8x2x128xf32> to vector<1x2x128xf32>
    %672 = vector.shape_cast %671 : vector<1x2x128xf32> to vector<2x128xf32>
    %673 = arith.truncf %669 : vector<2x16xf32> to vector<2x16xbf16>
    %cst_199 = arith.constant dense<0.000000e+00> : vector<2x128xf32>
    %674 = tpu.matmul %673, %640, %cst_199 {dimension_numbers = #tpu.dot_dimension_numbers<[1], [0], [0], [1], [0, 0, 1, 1], [], []>} : vector<2x16xbf16>, vector<16x128xbf16>, vector<2x128xf32> -> vector<2x128xf32>
    %675 = arith.addf %672, %674 : vector<2x128xf32>
    %cst_200 = arith.constant 5.000000e-01 : f32
    %676 = vector.broadcast %cst_200 : f32 to vector<2x128xf32>
    %677 = arith.mulf %675, %676 : vector<2x128xf32>
    %678 = math.tanh %677 : vector<2x128xf32>
    %cst_201 = arith.constant 5.000000e-01 : f32
    %679 = vector.broadcast %cst_201 : f32 to vector<2x128xf32>
    %680 = arith.mulf %678, %679 : vector<2x128xf32>
    %cst_202 = arith.constant 5.000000e-01 : f32
    %681 = vector.broadcast %cst_202 : f32 to vector<2x128xf32>
    %682 = arith.addf %680, %681 : vector<2x128xf32>
    %683 = math.tanh %675 : vector<2x128xf32>
    %684 = vector.extract_strided_slice %682 {offsets = [0, 0], sizes = [2, 16], strides = [1, 1]} : vector<2x128xf32> to vector<2x16xf32>
    %685 = vector.extract_strided_slice %682 {offsets = [0, 16], sizes = [2, 16], strides = [1, 1]} : vector<2x128xf32> to vector<2x16xf32>
    %686 = vector.extract_strided_slice %683 {offsets = [0, 32], sizes = [2, 16], strides = [1, 1]} : vector<2x128xf32> to vector<2x16xf32>
    %687 = vector.extract_strided_slice %682 {offsets = [0, 48], sizes = [2, 16], strides = [1, 1]} : vector<2x128xf32> to vector<2x16xf32>
    %688 = arith.mulf %685, %667 : vector<2x16xf32>
    %689 = arith.mulf %684, %686 : vector<2x16xf32>
    %690 = arith.addf %688, %689 : vector<2x16xf32>
    %691 = math.tanh %690 : vector<2x16xf32>
    %692 = arith.mulf %687, %691 : vector<2x16xf32>
    %c0_203 = arith.constant 0 : index
    %c16_204 = arith.constant 16 : index
    %693 = vector.load %arg3[%c0_203, %c16_204] : memref<2x128xf32, #tpu.memory_space<vmem>>, vector<2x16xf32>
    tpu.vector_store %arg3[%c0_203, %c16_204], %692 {strides = array<i32>} : memref<2x128xf32, #tpu.memory_space<vmem>>, vector<2x16xf32>,
    %694 = vector.extract_strided_slice %645 {offsets = [2, 0, 0], sizes = [1, 2, 128], strides = [1, 1, 1]} : vector<8x2x128xf32> to vector<1x2x128xf32>
    %695 = vector.shape_cast %694 : vector<1x2x128xf32> to vector<2x128xf32>
    %696 = arith.truncf %692 : vector<2x16xf32> to vector<2x16xbf16>
    %cst_205 = arith.constant dense<0.000000e+00> : vector<2x128xf32>
    %697 = tpu.matmul %696, %640, %cst_205 {dimension_numbers = #tpu.dot_dimension_numbers<[1], [0], [0], [1], [0, 0, 1, 1], [], []>} : vector<2x16xbf16>, vector<16x128xbf16>, vector<2x128xf32> -> vector<2x128xf32>
    %698 = arith.addf %695, %697 : vector<2x128xf32>
    %cst_206 = arith.constant 5.000000e-01 : f32
    %699 = vector.broadcast %cst_206 : f32 to vector<2x128xf32>
    %700 = arith.mulf %698, %699 : vector<2x128xf32>
    %701 = math.tanh %700 : vector<2x128xf32>
    %cst_207 = arith.constant 5.000000e-01 : f32
    %702 = vector.broadcast %cst_207 : f32 to vector<2x128xf32>
    %703 = arith.mulf %701, %702 : vector<2x128xf32>
    %cst_208 = arith.constant 5.000000e-01 : f32
    %704 = vector.broadcast %cst_208 : f32 to vector<2x128xf32>
    %705 = arith.addf %703, %704 : vector<2x128xf32>
    %706 = math.tanh %698 : vector<2x128xf32>
    %707 = vector.extract_strided_slice %705 {offsets = [0, 0], sizes = [2, 16], strides = [1, 1]} : vector<2x128xf32> to vector<2x16xf32>
    %708 = vector.extract_strided_slice %705 {offsets = [0, 16], sizes = [2, 16], strides = [1, 1]} : vector<2x128xf32> to vector<2x16xf32>
    %709 = vector.extract_strided_slice %706 {offsets = [0, 32], sizes = [2, 16], strides = [1, 1]} : vector<2x128xf32> to vector<2x16xf32>
    %710 = vector.extract_strided_slice %705 {offsets = [0, 48], sizes = [2, 16], strides = [1, 1]} : vector<2x128xf32> to vector<2x16xf32>
    %711 = arith.mulf %708, %690 : vector<2x16xf32>
    %712 = arith.mulf %707, %709 : vector<2x16xf32>
    %713 = arith.addf %711, %712 : vector<2x16xf32>
    %714 = math.tanh %713 : vector<2x16xf32>
    %715 = arith.mulf %710, %714 : vector<2x16xf32>
    %c0_209 = arith.constant 0 : index
    %c32 = arith.constant 32 : index
    %716 = vector.load %arg3[%c0_209, %c32] : memref<2x128xf32, #tpu.memory_space<vmem>>, vector<2x16xf32>
    tpu.vector_store %arg3[%c0_209, %c32], %715 {strides = array<i32>} : memref<2x128xf32, #tpu.memory_space<vmem>>, vector<2x16xf32>,
    %717 = vector.extract_strided_slice %645 {offsets = [3, 0, 0], sizes = [1, 2, 128], strides = [1, 1, 1]} : vector<8x2x128xf32> to vector<1x2x128xf32>
    %718 = vector.shape_cast %717 : vector<1x2x128xf32> to vector<2x128xf32>
    %719 = arith.truncf %715 : vector<2x16xf32> to vector<2x16xbf16>
    %cst_210 = arith.constant dense<0.000000e+00> : vector<2x128xf32>
    %720 = tpu.matmul %719, %640, %cst_210 {dimension_numbers = #tpu.dot_dimension_numbers<[1], [0], [0], [1], [0, 0, 1, 1], [], []>} : vector<2x16xbf16>, vector<16x128xbf16>, vector<2x128xf32> -> vector<2x128xf32>
    %721 = arith.addf %718, %720 : vector<2x128xf32>
    %cst_211 = arith.constant 5.000000e-01 : f32
    %722 = vector.broadcast %cst_211 : f32 to vector<2x128xf32>
    %723 = arith.mulf %721, %722 : vector<2x128xf32>
    %724 = math.tanh %723 : vector<2x128xf32>
    %cst_212 = arith.constant 5.000000e-01 : f32
    %725 = vector.broadcast %cst_212 : f32 to vector<2x128xf32>
    %726 = arith.mulf %724, %725 : vector<2x128xf32>
    %cst_213 = arith.constant 5.000000e-01 : f32
    %727 = vector.broadcast %cst_213 : f32 to vector<2x128xf32>
    %728 = arith.addf %726, %727 : vector<2x128xf32>
    %729 = math.tanh %721 : vector<2x128xf32>
    %730 = vector.extract_strided_slice %728 {offsets = [0, 0], sizes = [2, 16], strides = [1, 1]} : vector<2x128xf32> to vector<2x16xf32>
    %731 = vector.extract_strided_slice %728 {offsets = [0, 16], sizes = [2, 16], strides = [1, 1]} : vector<2x128xf32> to vector<2x16xf32>
    %732 = vector.extract_strided_slice %729 {offsets = [0, 32], sizes = [2, 16], strides = [1, 1]} : vector<2x128xf32> to vector<2x16xf32>
    %733 = vector.extract_strided_slice %728 {offsets = [0, 48], sizes = [2, 16], strides = [1, 1]} : vector<2x128xf32> to vector<2x16xf32>
    %734 = arith.mulf %731, %713 : vector<2x16xf32>
    %735 = arith.mulf %730, %732 : vector<2x16xf32>
    %736 = arith.addf %734, %735 : vector<2x16xf32>
    %737 = math.tanh %736 : vector<2x16xf32>
    %738 = arith.mulf %733, %737 : vector<2x16xf32>
    %c0_214 = arith.constant 0 : index
    %c48_215 = arith.constant 48 : index
    %739 = vector.load %arg3[%c0_214, %c48_215] : memref<2x128xf32, #tpu.memory_space<vmem>>, vector<2x16xf32>
    tpu.vector_store %arg3[%c0_214, %c48_215], %738 {strides = array<i32>} : memref<2x128xf32, #tpu.memory_space<vmem>>, vector<2x16xf32>,
    %740 = vector.extract_strided_slice %645 {offsets = [4, 0, 0], sizes = [1, 2, 128], strides = [1, 1, 1]} : vector<8x2x128xf32> to vector<1x2x128xf32>
    %741 = vector.shape_cast %740 : vector<1x2x128xf32> to vector<2x128xf32>
    %742 = arith.truncf %738 : vector<2x16xf32> to vector<2x16xbf16>
    %cst_216 = arith.constant dense<0.000000e+00> : vector<2x128xf32>
    %743 = tpu.matmul %742, %640, %cst_216 {dimension_numbers = #tpu.dot_dimension_numbers<[1], [0], [0], [1], [0, 0, 1, 1], [], []>} : vector<2x16xbf16>, vector<16x128xbf16>, vector<2x128xf32> -> vector<2x128xf32>
    %744 = arith.addf %741, %743 : vector<2x128xf32>
    %cst_217 = arith.constant 5.000000e-01 : f32
    %745 = vector.broadcast %cst_217 : f32 to vector<2x128xf32>
    %746 = arith.mulf %744, %745 : vector<2x128xf32>
    %747 = math.tanh %746 : vector<2x128xf32>
    %cst_218 = arith.constant 5.000000e-01 : f32
    %748 = vector.broadcast %cst_218 : f32 to vector<2x128xf32>
    %749 = arith.mulf %747, %748 : vector<2x128xf32>
    %cst_219 = arith.constant 5.000000e-01 : f32
    %750 = vector.broadcast %cst_219 : f32 to vector<2x128xf32>
    %751 = arith.addf %749, %750 : vector<2x128xf32>
    %752 = math.tanh %744 : vector<2x128xf32>
    %753 = vector.extract_strided_slice %751 {offsets = [0, 0], sizes = [2, 16], strides = [1, 1]} : vector<2x128xf32> to vector<2x16xf32>
    %754 = vector.extract_strided_slice %751 {offsets = [0, 16], sizes = [2, 16], strides = [1, 1]} : vector<2x128xf32> to vector<2x16xf32>
    %755 = vector.extract_strided_slice %752 {offsets = [0, 32], sizes = [2, 16], strides = [1, 1]} : vector<2x128xf32> to vector<2x16xf32>
    %756 = vector.extract_strided_slice %751 {offsets = [0, 48], sizes = [2, 16], strides = [1, 1]} : vector<2x128xf32> to vector<2x16xf32>
    %757 = arith.mulf %754, %736 : vector<2x16xf32>
    %758 = arith.mulf %753, %755 : vector<2x16xf32>
    %759 = arith.addf %757, %758 : vector<2x16xf32>
    %760 = math.tanh %759 : vector<2x16xf32>
    %761 = arith.mulf %756, %760 : vector<2x16xf32>
    %c0_220 = arith.constant 0 : index
    %c64 = arith.constant 64 : index
    %762 = vector.load %arg3[%c0_220, %c64] : memref<2x128xf32, #tpu.memory_space<vmem>>, vector<2x16xf32>
    tpu.vector_store %arg3[%c0_220, %c64], %761 {strides = array<i32>} : memref<2x128xf32, #tpu.memory_space<vmem>>, vector<2x16xf32>,
    %763 = vector.extract_strided_slice %645 {offsets = [5, 0, 0], sizes = [1, 2, 128], strides = [1, 1, 1]} : vector<8x2x128xf32> to vector<1x2x128xf32>
    %764 = vector.shape_cast %763 : vector<1x2x128xf32> to vector<2x128xf32>
    %765 = arith.truncf %761 : vector<2x16xf32> to vector<2x16xbf16>
    %cst_221 = arith.constant dense<0.000000e+00> : vector<2x128xf32>
    %766 = tpu.matmul %765, %640, %cst_221 {dimension_numbers = #tpu.dot_dimension_numbers<[1], [0], [0], [1], [0, 0, 1, 1], [], []>} : vector<2x16xbf16>, vector<16x128xbf16>, vector<2x128xf32> -> vector<2x128xf32>
    %767 = arith.addf %764, %766 : vector<2x128xf32>
    %cst_222 = arith.constant 5.000000e-01 : f32
    %768 = vector.broadcast %cst_222 : f32 to vector<2x128xf32>
    %769 = arith.mulf %767, %768 : vector<2x128xf32>
    %770 = math.tanh %769 : vector<2x128xf32>
    %cst_223 = arith.constant 5.000000e-01 : f32
    %771 = vector.broadcast %cst_223 : f32 to vector<2x128xf32>
    %772 = arith.mulf %770, %771 : vector<2x128xf32>
    %cst_224 = arith.constant 5.000000e-01 : f32
    %773 = vector.broadcast %cst_224 : f32 to vector<2x128xf32>
    %774 = arith.addf %772, %773 : vector<2x128xf32>
    %775 = math.tanh %767 : vector<2x128xf32>
    %776 = vector.extract_strided_slice %774 {offsets = [0, 0], sizes = [2, 16], strides = [1, 1]} : vector<2x128xf32> to vector<2x16xf32>
    %777 = vector.extract_strided_slice %774 {offsets = [0, 16], sizes = [2, 16], strides = [1, 1]} : vector<2x128xf32> to vector<2x16xf32>
    %778 = vector.extract_strided_slice %775 {offsets = [0, 32], sizes = [2, 16], strides = [1, 1]} : vector<2x128xf32> to vector<2x16xf32>
    %779 = vector.extract_strided_slice %774 {offsets = [0, 48], sizes = [2, 16], strides = [1, 1]} : vector<2x128xf32> to vector<2x16xf32>
    %780 = arith.mulf %777, %759 : vector<2x16xf32>
    %781 = arith.mulf %776, %778 : vector<2x16xf32>
    %782 = arith.addf %780, %781 : vector<2x16xf32>
    %783 = math.tanh %782 : vector<2x16xf32>
    %784 = arith.mulf %779, %783 : vector<2x16xf32>
    %c0_225 = arith.constant 0 : index
    %c80_226 = arith.constant 80 : index
    %785 = vector.load %arg3[%c0_225, %c80_226] : memref<2x128xf32, #tpu.memory_space<vmem>>, vector<2x16xf32>
    tpu.vector_store %arg3[%c0_225, %c80_226], %784 {strides = array<i32>} : memref<2x128xf32, #tpu.memory_space<vmem>>, vector<2x16xf32>,
    %786 = vector.extract_strided_slice %645 {offsets = [6, 0, 0], sizes = [1, 2, 128], strides = [1, 1, 1]} : vector<8x2x128xf32> to vector<1x2x128xf32>
    %787 = vector.shape_cast %786 : vector<1x2x128xf32> to vector<2x128xf32>
    %788 = arith.truncf %784 : vector<2x16xf32> to vector<2x16xbf16>
    %cst_227 = arith.constant dense<0.000000e+00> : vector<2x128xf32>
    %789 = tpu.matmul %788, %640, %cst_227 {dimension_numbers = #tpu.dot_dimension_numbers<[1], [0], [0], [1], [0, 0, 1, 1], [], []>} : vector<2x16xbf16>, vector<16x128xbf16>, vector<2x128xf32> -> vector<2x128xf32>
    %790 = arith.addf %787, %789 : vector<2x128xf32>
    %cst_228 = arith.constant 5.000000e-01 : f32
    %791 = vector.broadcast %cst_228 : f32 to vector<2x128xf32>
    %792 = arith.mulf %790, %791 : vector<2x128xf32>
    %793 = math.tanh %792 : vector<2x128xf32>
    %cst_229 = arith.constant 5.000000e-01 : f32
    %794 = vector.broadcast %cst_229 : f32 to vector<2x128xf32>
    %795 = arith.mulf %793, %794 : vector<2x128xf32>
    %cst_230 = arith.constant 5.000000e-01 : f32
    %796 = vector.broadcast %cst_230 : f32 to vector<2x128xf32>
    %797 = arith.addf %795, %796 : vector<2x128xf32>
    %798 = math.tanh %790 : vector<2x128xf32>
    %799 = vector.extract_strided_slice %797 {offsets = [0, 0], sizes = [2, 16], strides = [1, 1]} : vector<2x128xf32> to vector<2x16xf32>
    %800 = vector.extract_strided_slice %797 {offsets = [0, 16], sizes = [2, 16], strides = [1, 1]} : vector<2x128xf32> to vector<2x16xf32>
    %801 = vector.extract_strided_slice %798 {offsets = [0, 32], sizes = [2, 16], strides = [1, 1]} : vector<2x128xf32> to vector<2x16xf32>
    %802 = vector.extract_strided_slice %797 {offsets = [0, 48], sizes = [2, 16], strides = [1, 1]} : vector<2x128xf32> to vector<2x16xf32>
    %803 = arith.mulf %800, %782 : vector<2x16xf32>
    %804 = arith.mulf %799, %801 : vector<2x16xf32>
    %805 = arith.addf %803, %804 : vector<2x16xf32>
    %806 = math.tanh %805 : vector<2x16xf32>
    %807 = arith.mulf %802, %806 : vector<2x16xf32>
    %c0_231 = arith.constant 0 : index
    %c96 = arith.constant 96 : index
    %808 = vector.load %arg3[%c0_231, %c96] : memref<2x128xf32, #tpu.memory_space<vmem>>, vector<2x16xf32>
    tpu.vector_store %arg3[%c0_231, %c96], %807 {strides = array<i32>} : memref<2x128xf32, #tpu.memory_space<vmem>>, vector<2x16xf32>,
    %809 = vector.extract_strided_slice %645 {offsets = [7, 0, 0], sizes = [1, 2, 128], strides = [1, 1, 1]} : vector<8x2x128xf32> to vector<1x2x128xf32>
    %810 = vector.shape_cast %809 : vector<1x2x128xf32> to vector<2x128xf32>
    %811 = arith.truncf %807 : vector<2x16xf32> to vector<2x16xbf16>
    %cst_232 = arith.constant dense<0.000000e+00> : vector<2x128xf32>
    %812 = tpu.matmul %811, %640, %cst_232 {dimension_numbers = #tpu.dot_dimension_numbers<[1], [0], [0], [1], [0, 0, 1, 1], [], []>} : vector<2x16xbf16>, vector<16x128xbf16>, vector<2x128xf32> -> vector<2x128xf32>
    %813 = arith.addf %810, %812 : vector<2x128xf32>
    %cst_233 = arith.constant 5.000000e-01 : f32
    %814 = vector.broadcast %cst_233 : f32 to vector<2x128xf32>
    %815 = arith.mulf %813, %814 : vector<2x128xf32>
    %816 = math.tanh %815 : vector<2x128xf32>
    %cst_234 = arith.constant 5.000000e-01 : f32
    %817 = vector.broadcast %cst_234 : f32 to vector<2x128xf32>
    %818 = arith.mulf %816, %817 : vector<2x128xf32>
    %cst_235 = arith.constant 5.000000e-01 : f32
    %819 = vector.broadcast %cst_235 : f32 to vector<2x128xf32>
    %820 = arith.addf %818, %819 : vector<2x128xf32>
    %821 = math.tanh %813 : vector<2x128xf32>
    %822 = vector.extract_strided_slice %820 {offsets = [0, 0], sizes = [2, 16], strides = [1, 1]} : vector<2x128xf32> to vector<2x16xf32>
    %823 = vector.extract_strided_slice %820 {offsets = [0, 16], sizes = [2, 16], strides = [1, 1]} : vector<2x128xf32> to vector<2x16xf32>
    %824 = vector.extract_strided_slice %821 {offsets = [0, 32], sizes = [2, 16], strides = [1, 1]} : vector<2x128xf32> to vector<2x16xf32>
    %825 = vector.extract_strided_slice %820 {offsets = [0, 48], sizes = [2, 16], strides = [1, 1]} : vector<2x128xf32> to vector<2x16xf32>
    %826 = arith.mulf %823, %805 : vector<2x16xf32>
    %827 = arith.mulf %822, %824 : vector<2x16xf32>
    %828 = arith.addf %826, %827 : vector<2x16xf32>
    %829 = math.tanh %828 : vector<2x16xf32>
    %830 = arith.mulf %825, %829 : vector<2x16xf32>
    %c0_236 = arith.constant 0 : index
    %c112_237 = arith.constant 112 : index
    %831 = vector.load %arg3[%c0_236, %c112_237] : memref<2x128xf32, #tpu.memory_space<vmem>>, vector<2x16xf32>
    tpu.vector_store %arg3[%c0_236, %c112_237], %830 {strides = array<i32>} : memref<2x128xf32, #tpu.memory_space<vmem>>, vector<2x16xf32>,
    return
  }
}

</mosaic_0001>

<llo_original>
// kernel: tpu_custom_call.1
$region0: #{tpu_custom_call.1}
  #allocation0 [shape = 'u32[]', space=smem, size = 0x4, offset = 0x4, fixed_abs, tag = 'smem constant byte address 0x4 - core index']
  #allocation1 [shape = 'u32[144,128]{1,0:T(1,128)}', space=vmem, size = 0x12000, scoped, tag = 'internal scratch']
  #allocation2 [shape = 'f32[8,2,32]{2,1,0:T(2,128)}', space=vmem, size = 0x2000, scoped, tag = 'scratch operand']
  #allocation3 [shape = 'f32[8,2,32]{2,1,0:T(2,128)}', space=vmem, size = 0x2000, scoped, tag = 'scratch operand']
  #allocation4 [shape = 'f32[8,2,16]{2,1,0:T(2,128)}', space=vmem, size = 0x2000, scoped, tag = 'scratch operand']
  %s0 = inlined_call_operand.vmem [shape: f32[16,8], index: 0, kind: input, shape index: {}]
  %s1 = inlined_call_operand.hbm [shape: bf16[192,128], index: 1, kind: input, shape index: {}]
  %s2 = inlined_call_operand.vmem [shape: f32[4,128], index: 2, kind: input, shape index: {}]
  %s3 = inlined_call_operand.hbm [shape: f32[2,128], index: 3, kind: output, shape index: {}]
  %s4 = sld [smem:[#allocation0]]
  $region26: #{tpu_custom_call.1} parent=0
    _
  %s6 = ssub.s32 1, %s4
  %s7 = scalar_select 0, %s6, %s4
  $region1: #{tpu_custom_call.1} parent=0
    #allocation5 [shape = 'u8[49152]{0}', space=vmem, size = 0xc000, scoped, tag = 'input window, operand 1, single buffered']
    #allocation6 [shape = 's32[1]{0}', space=sflag, size = 0x4, scoped, tag = 'scoped memory for tpu_custom_call.1']
    #allocation7 [shape = 's32[1]{0}', space=sflag, size = 0x4, scoped, tag = 'scoped memory for tpu_custom_call.1']
    #allocation8 [shape = 'u8[1024]{0}', space=vmem, size = 0x400, scoped, tag = 'output window, operand 0, single buffered']
    %8 = vsyncpa [#allocation6], 0
    %9 = vsyncpa [#allocation7], 0
    // Predicated region
    $region2: #{tpu_custom_call.1} parent=1 // pred_check
      _
    $region3: #{tpu_custom_call.1} parent=1 // pred_check_branch
      %11 = sbr.rel (0) target = $region5
    $region4: #{tpu_custom_call.1} parent=1 // pred_region
      _
    $region5: #{tpu_custom_call.1} parent=1 // pred_fallthru
      _
    // Predicated region
    $region6: #{tpu_custom_call.1} parent=1 // pred_check
      _
    $region7: #{tpu_custom_call.1} parent=1 // pred_check_branch
      %13 = sbr.rel (0) target = $region9
    $region8: #{tpu_custom_call.1} parent=1 // pred_region
      %s15 = ssub.s32 1536, 1536
      %16 = vsyncadd [#allocation6], %s15
      %s17 = sshll.u32 [#allocation5], 4
      %s18 = int_to_ptr.vmem [resolvable:$true] %s17
      %23 = dma.hbm_to_vmem [thread:$0]  %s1, 1536, %s18, [#allocation6], 64, 64, 4
    $region9: #{tpu_custom_call.1} parent=1 // pred_fallthru
      _
    // Predicated region
    $region10: #{tpu_custom_call.1} parent=1 // pred_check
      _
    $region11: #{tpu_custom_call.1} parent=1 // pred_check_branch
      %25 = sbr.rel (0) target = $region13
    $region12: #{tpu_custom_call.1} parent=1 // pred_region
      _
    $region13: #{tpu_custom_call.1} parent=1 // pred_fallthru
      _
    // Predicated region
    $region14: #{tpu_custom_call.1} parent=1 // pred_check
      _
    $region15: #{tpu_custom_call.1} parent=1 // pred_check_branch
      %27 = sbr.rel (0) target = $region17
    $region16: #{tpu_custom_call.1} parent=1 // pred_region
      %28 = dma.done [#allocation6], 1536
    $region17: #{tpu_custom_call.1} parent=1 // pred_fallthru
      _
    %v30 = vld [vmem:[%s2] sm:$0xf]
    %v31 = vld [vmem:[%s0] sm:$0xff]
    %v32 = vld [vmem:[%s0 + $0x8] sm:$0xff]
    %v33 = vpack.c.bf16 %v32, %v31
    %v34 = vld [vmem:[#allocation5] sm:$0xf]
    %v35 = vld [vmem:[#allocation5 + $0x8] sm:$0xf]
    %v36 = vld [vmem:[#allocation5 + $0xc] sm:$0xf]
    %v37 = vld [vmem:[#allocation5 + $0x10] sm:$0xf]
    %v38 = vld [vmem:[#allocation5 + $0x14] sm:$0xf]
    %v39 = vlaneseq
    %v40 = vshrl.u32 %v39, 7
    %v41 = vsub.s32 0, %v40
    %v42 = vrot.slane %v30, %v41
    %vm43 = vcmask 64512
    %v45 = vsel %vm43, %v33, 0
    %vm47 = vcmask 1043456
    %v49 = vsel %vm47, %v34, 0
    %51 = vmatprep.subr.bf16.mxu0 0
    %52 = vmatpush1.bf16.msra.mxu0 %v49
    %53 = vmatprep.subr.bf16.mxu0 0
    %54 = vmatpush1.bf16.msra.mxu0 0
    %55 = vmatprep.subr.bf16.mxu0 0
    %56 = vmatpush1.bf16.msra.mxu0 0
    %57 = vmatprep.subr.bf16.mxu0 0
    %58 = vmatpush1.bf16.msra.mxu0 0
    %59 = vmatprep.subr.bf16.mxu0 0
    %60 = vmatpush1.bf16.msra.mxu0 0
    %61 = vmatprep.subr.bf16.mxu0 0
    %62 = vmatpush1.bf16.msra.mxu0 0
    %63 = vmatprep.subr.bf16.mxu0 0
    %64 = vmatpush1.bf16.msra.mxu0 0
    %65 = vmatprep.subr.bf16.mxu0 0
    %66 = vmatpush1.bf16.msra.mxu0 0
    %67 = vmatprep.subr.bf16.mxu0 0
    %68 = vmatpush1.bf16.msra.mxu0 0
    %69 = vmatprep.subr.bf16.mxu0 0
    %70 = vmatpush1.bf16.msra.mxu0 0
    %71 = vmatprep.subr.bf16.mxu0 0
    %72 = vmatpush1.bf16.msra.mxu0 0
    %73 = vmatprep.subr.bf16.mxu0 0
    %74 = vmatpush1.bf16.msra.mxu0 0
    %75 = vmatprep.subr.bf16.mxu0 0
    %76 = vmatpush1.bf16.msra.mxu0 0
    %77 = vmatprep.subr.bf16.mxu0 0
    %78 = vmatpush1.bf16.msra.mxu0 0
    %79 = vmatprep.subr.bf16.mxu0 0
    %80 = vmatpush1.bf16.msra.mxu0 0
    %81 = vmatprep.subr.bf16.mxu0 0
    %82 = vmatpush1.bf16.msra.mxu0 0
    %83 = vmatprep.mubr.bf16.mxu0 0
    %84 = vmatmul.mubr.bf16.gmra.mrb[0].mxu0 %v45
    %v85 = vpop.f32.mrb[0].mxu0
    %v86 = vadd.f32 %v42, %v85
    %v87 = vpop.f32.mrb[0].mxu0
    %v88 = vpop.f32.mrb[0].mxu0
    %v89 = vadd.f32 %v42, %v88
    %v90 = vpop.f32.mrb[0].mxu0
    %91 = vdwg.mxu0
    %v94 = vcombine.high %v86, %v86
    %v96 = vunpack.c.l.s4 1983009808
    %v97 = vunpack.c.0.s8 %v96
    %v98 = vlaneseq
    %v99 = vshrl.u32 %v98, 7
    %v100 = vsub.s32 %v97, %v99
    %v101 = vrot.slane %v86, %v100
    %v103 = vunpack.c.l.s4 1983009808
    %v104 = vunpack.c.0.s8 %v103
    %v105 = vlaneseq
    %v106 = vshrl.u32 %v105, 7
    %v107 = vsub.s32 %v104, %v106
    %v108 = vrot.slane %v94, %v107
    %v109 = vcombine.high %v101, %v101
    %v110 = vcombine.high %v108, %v108
    %v111 = vcombine.high %v89, %v89
    %v113 = vunpack.c.l.s4 1983009808
    %v114 = vunpack.c.0.s8 %v113
    %v115 = vlaneseq
    %v116 = vshrl.u32 %v115, 7
    %v117 = vsub.s32 %v114, %v116
    %v118 = vrot.slane %v89, %v117
    %v120 = vunpack.c.l.s4 1983009808
    %v121 = vunpack.c.0.s8 %v120
    %v122 = vlaneseq
    %v123 = vshrl.u32 %v122, 7
    %v124 = vsub.s32 %v121, %v123
    %v125 = vrot.slane %v111, %v124
    %v126 = vcombine.high %v118, %v118
    %v127 = vcombine.high %v125, %v125
    %v140 = vunpack.c.l.b16 %v35
    %v141 = vunpack.c.l.b16 %v36
    %v142 = vunpack.c.l.b16 %v37
    %v143 = vunpack.c.l.b16 %v38
    %v144 = vpack.c.b16 %v141, %v140
    %v145 = vpack.c.b16 %v143, %v142
    %vm148 = vcmask 261120
    %v150 = vsel %vm148, 0, 0
    %152 = vmatprep.subr.bf16.mxu0 0
    %153 = vmatpush1.bf16.msra.mxu0 %v144
    %154 = vmatprep.subr.bf16.mxu0 0
    %155 = vmatpush1.bf16.msra.mxu0 %v145
    %156 = vmatprep.subr.bf16.mxu0 0
    %157 = vmatpush1.bf16.msra.mxu0 0
    %158 = vmatprep.subr.bf16.mxu0 0
    %159 = vmatpush1.bf16.msra.mxu0 0
    %160 = vmatprep.subr.bf16.mxu0 0
    %161 = vmatpush1.bf16.msra.mxu0 0
    %162 = vmatprep.subr.bf16.mxu0 0
    %163 = vmatpush1.bf16.msra.mxu0 0
    %164 = vmatprep.subr.bf16.mxu0 0
    %165 = vmatpush1.bf16.msra.mxu0 0
    %166 = vmatprep.subr.bf16.mxu0 0
    %167 = vmatpush1.bf16.msra.mxu0 0
    %168 = vmatprep.subr.bf16.mxu0 0
    %169 = vmatpush1.bf16.msra.mxu0 0
    %170 = vmatprep.subr.bf16.mxu0 0
    %171 = vmatpush1.bf16.msra.mxu0 0
    %172 = vmatprep.subr.bf16.mxu0 0
    %173 = vmatpush1.bf16.msra.mxu0 0
    %174 = vmatprep.subr.bf16.mxu0 0
    %175 = vmatpush1.bf16.msra.mxu0 0
    %176 = vmatprep.subr.bf16.mxu0 0
    %177 = vmatpush1.bf16.msra.mxu0 0
    %178 = vmatprep.subr.bf16.mxu0 0
    %179 = vmatpush1.bf16.msra.mxu0 0
    %180 = vmatprep.subr.bf16.mxu0 0
    %181 = vmatpush1.bf16.msra.mxu0 0
    %182 = vmatprep.subr.bf16.mxu0 0
    %183 = vmatpush1.bf16.msra.mxu0 0
    %184 = vmatprep.mubr.bf16.mxu0 0
    %185 = vmatmul.mubr.bf16.gmra.mrb[0].mxu0 %v150
    %v186 = vpop.f32.mrb[0].mxu0
    %v187 = vadd.f32 0.0, %v186
    %v188 = vpop.f32.mrb[0].mxu0
    %v189 = vpop.f32.mrb[0].mxu0
    %v190 = vpop.f32.mrb[0].mxu0
    %191 = vdwg.mxu0
    %v192 = vadd.f32 %v101, %v187
    %v193 = vmul.f32 %v192, 0.5
    %v194 = vtanh.pop %v193
    %v195 = vmul.f32 %v194, 0.5
    %v196 = vadd.f32 %v195, 0.5
    %v197 = vtanh.pop %v192
    %v198 = vmul.f32 %v196, 0.0
    %200 = vrot.lane.b32.xlu0 %v197, 64
    %v201 = vpop.permute.xlu0 %200
    %v203 = vmul.f32 %v196, %v201
    %205 = vrot.lane.b32.xlu0 %v203, 32
    %v206 = vpop.permute.xlu0 %205
    %v208 = vadd.f32 %v198, %v206
    %v209 = vtanh.pop %v208
    %211 = vrot.lane.b32.xlu0 %v209, 64
    %v212 = vpop.permute.xlu0 %211
    %v214 = vmul.f32 %v196, %v212
    %v217 = vunpack.c.l.s4 1983009808
    %v218 = vunpack.c.0.s8 %v217
    %v219 = vlaneseq
    %v220 = vshrl.u32 %v219, 7
    %v221 = vsub.s32 %v218, %v220
    %v222 = vrot.slane %v214, %v221
    %223 = vrot.lane.b32.xlu0 %v222, 32
    %v224 = vpop.permute.xlu0 %223
    %vm226 = vcmask 254976
    %227 = vst.msk [vmem:[#allocation2] sm:$0x3] %vm226, %v224
    %v228 = vpack.c.bf16 %v214, %v214
    %230 = vrot.lane.b32.xlu0 %v228, 32
    %v231 = vpop.permute.xlu0 %230
    %v233 = vsel %vm148, %v231, 0
    %235 = vmatprep.subr.bf16.mxu0 0
    %236 = vmatpush1.bf16.msra.mxu0 %v144
    %237 = vmatprep.subr.bf16.mxu0 0
    %238 = vmatpush1.bf16.msra.mxu0 %v145
    %239 = vmatprep.subr.bf16.mxu0 0
    %240 = vmatpush1.bf16.msra.mxu0 0
    %241 = vmatprep.subr.bf16.mxu0 0
    %242 = vmatpush1.bf16.msra.mxu0 0
    %243 = vmatprep.subr.bf16.mxu0 0
    %244 = vmatpush1.bf16.msra.mxu0 0
    %245 = vmatprep.subr.bf16.mxu0 0
    %246 = vmatpush1.bf16.msra.mxu0 0
    %247 = vmatprep.subr.bf16.mxu0 0
    %248 = vmatpush1.bf16.msra.mxu0 0
    %249 = vmatprep.subr.bf16.mxu0 0
    %250 = vmatpush1.bf16.msra.mxu0 0
    %251 = vmatprep.subr.bf16.mxu0 0
    %252 = vmatpush1.bf16.msra.mxu0 0
    %253 = vmatprep.subr.bf16.mxu0 0
    %254 = vmatpush1.bf16.msra.mxu0 0
    %255 = vmatprep.subr.bf16.mxu0 0
    %256 = vmatpush1.bf16.msra.mxu0 0
    %257 = vmatprep.subr.bf16.mxu0 0
    %258 = vmatpush1.bf16.msra.mxu0 0
    %259 = vmatprep.subr.bf16.mxu0 0
    %260 = vmatpush1.bf16.msra.mxu0 0
    %261 = vmatprep.subr.bf16.mxu0 0
    %262 = vmatpush1.bf16.msra.mxu0 0
    %263 = vmatprep.subr.bf16.mxu0 0
    %264 = vmatpush1.bf16.msra.mxu0 0
    %265 = vmatprep.subr.bf16.mxu0 0
    %266 = vmatpush1.bf16.msra.mxu0 0
    %267 = vmatprep.mubr.bf16.mxu0 0
    %268 = vmatmul.mubr.bf16.gmra.mrb[0].mxu0 %v233
    %v269 = vpop.f32.mrb[0].mxu0
    %v270 = vadd.f32 0.0, %v269
    %v271 = vpop.f32.mrb[0].mxu0
    %v272 = vpop.f32.mrb[0].mxu0
    %v273 = vpop.f32.mrb[0].mxu0
    %274 = vdwg.mxu0
    %v275 = vadd.f32 %v109, %v270
    %v276 = vmul.f32 %v275, 0.5
    %v277 = vtanh.pop %v276
    %v278 = vmul.f32 %v277, 0.5
    %v279 = vadd.f32 %v278, 0.5
    %v280 = vtanh.pop %v275
    %v281 = vmul.f32 %v279, %v208
    %283 = vrot.lane.b32.xlu0 %v280, 64
    %v284 = vpop.permute.xlu0 %283
    %v286 = vmul.f32 %v279, %v284
    %288 = vrot.lane.b32.xlu0 %v286, 32
    %v289 = vpop.permute.xlu0 %288
    %v291 = vadd.f32 %v281, %v289
    %v292 = vtanh.pop %v291
    %294 = vrot.lane.b32.xlu0 %v292, 64
    %v295 = vpop.permute.xlu0 %294
    %v297 = vmul.f32 %v279, %v295
    %v300 = vunpack.c.l.s4 1983009808
    %v301 = vunpack.c.0.s8 %v300
    %v302 = vlaneseq
    %v303 = vshrl.u32 %v302, 7
    %v304 = vsub.s32 %v301, %v303
    %v305 = vrot.slane %v297, %v304
    %306 = vrot.lane.b32.xlu0 %v305, 32
    %v307 = vpop.permute.xlu0 %306
    %s309 = scalar_lea.vmem [#allocation2], 2
    %310 = vst.msk [vmem:[%s309] sm:$0x3] %vm226, %v307
    %v311 = vpack.c.bf16 %v297, %v297
    %313 = vrot.lane.b32.xlu0 %v311, 32
    %v314 = vpop.permute.xlu0 %313
    %v316 = vsel %vm148, %v314, 0
    %318 = vmatprep.subr.bf16.mxu0 0
    %319 = vmatpush1.bf16.msra.mxu0 %v144
    %320 = vmatprep.subr.bf16.mxu0 0
    %321 = vmatpush1.bf16.msra.mxu0 %v145
    %322 = vmatprep.subr.bf16.mxu0 0
    %323 = vmatpush1.bf16.msra.mxu0 0
    %324 = vmatprep.subr.bf16.mxu0 0
    %325 = vmatpush1.bf16.msra.mxu0 0
    %326 = vmatprep.subr.bf16.mxu0 0
    %327 = vmatpush1.bf16.msra.mxu0 0
    %328 = vmatprep.subr.bf16.mxu0 0
    %329 = vmatpush1.bf16.msra.mxu0 0
    %330 = vmatprep.subr.bf16.mxu0 0
    %331 = vmatpush1.bf16.msra.mxu0 0
    %332 = vmatprep.subr.bf16.mxu0 0
    %333 = vmatpush1.bf16.msra.mxu0 0
    %334 = vmatprep.subr.bf16.mxu0 0
    %335 = vmatpush1.bf16.msra.mxu0 0
    %336 = vmatprep.subr.bf16.mxu0 0
    %337 = vmatpush1.bf16.msra.mxu0 0
    %338 = vmatprep.subr.bf16.mxu0 0
    %339 = vmatpush1.bf16.msra.mxu0 0
    %340 = vmatprep.subr.bf16.mxu0 0
    %341 = vmatpush1.bf16.msra.mxu0 0
    %342 = vmatprep.subr.bf16.mxu0 0
    %343 = vmatpush1.bf16.msra.mxu0 0
    %344 = vmatprep.subr.bf16.mxu0 0
    %345 = vmatpush1.bf16.msra.mxu0 0
    %346 = vmatprep.subr.bf16.mxu0 0
    %347 = vmatpush1.bf16.msra.mxu0 0
    %348 = vmatprep.subr.bf16.mxu0 0
    %349 = vmatpush1.bf16.msra.mxu0 0
    %350 = vmatprep.mubr.bf16.mxu0 0
    %351 = vmatmul.mubr.bf16.gmra.mrb[0].mxu0 %v316
    %v352 = vpop.f32.mrb[0].mxu0
    %v353 = vadd.f32 0.0, %v352
    %v354 = vpop.f32.mrb[0].mxu0
    %v355 = vpop.f32.mrb[0].mxu0
    %v356 = vpop.f32.mrb[0].mxu0
    %357 = vdwg.mxu0
    %v358 = vadd.f32 %v108, %v353
    %v359 = vmul.f32 %v358, 0.5
    %v360 = vtanh.pop %v359
    %v361 = vmul.f32 %v360, 0.5
    %v362 = vadd.f32 %v361, 0.5
    %v363 = vtanh.pop %v358
    %v364 = vmul.f32 %v362, %v291
    %366 = vrot.lane.b32.xlu0 %v363, 64
    %v367 = vpop.permute.xlu0 %366
    %v369 = vmul.f32 %v362, %v367
    %371 = vrot.lane.b32.xlu0 %v369, 32
    %v372 = vpop.permute.xlu0 %371
    %v374 = vadd.f32 %v364, %v372
    %v375 = vtanh.pop %v374
    %377 = vrot.lane.b32.xlu0 %v375, 64
    %v378 = vpop.permute.xlu0 %377
    %v380 = vmul.f32 %v362, %v378
    %v383 = vunpack.c.l.s4 1983009808
    %v384 = vunpack.c.0.s8 %v383
    %v385 = vlaneseq
    %v386 = vshrl.u32 %v385, 7
    %v387 = vsub.s32 %v384, %v386
    %v388 = vrot.slane %v380, %v387
    %389 = vrot.lane.b32.xlu0 %v388, 32
    %v390 = vpop.permute.xlu0 %389
    %s392 = scalar_lea.vmem [#allocation2], 4
    %393 = vst.msk [vmem:[%s392] sm:$0x3] %vm226, %v390
    %v394 = vpack.c.bf16 %v380, %v380
    %396 = vrot.lane.b32.xlu0 %v394, 32
    %v397 = vpop.permute.xlu0 %396
    %v399 = vsel %vm148, %v397, 0
    %401 = vmatprep.subr.bf16.mxu0 0
    %402 = vmatpush1.bf16.msra.mxu0 %v144
    %403 = vmatprep.subr.bf16.mxu0 0
    %404 = vmatpush1.bf16.msra.mxu0 %v145
    %405 = vmatprep.subr.bf16.mxu0 0
    %406 = vmatpush1.bf16.msra.mxu0 0
    %407 = vmatprep.subr.bf16.mxu0 0
    %408 = vmatpush1.bf16.msra.mxu0 0
    %409 = vmatprep.subr.bf16.mxu0 0
    %410 = vmatpush1.bf16.msra.mxu0 0
    %411 = vmatprep.subr.bf16.mxu0 0
    %412 = vmatpush1.bf16.msra.mxu0 0
    %413 = vmatprep.subr.bf16.mxu0 0
    %414 = vmatpush1.bf16.msra.mxu0 0
    %415 = vmatprep.subr.bf16.mxu0 0
    %416 = vmatpush1.bf16.msra.mxu0 0
    %417 = vmatprep.subr.bf16.mxu0 0
    %418 = vmatpush1.bf16.msra.mxu0 0
    %419 = vmatprep.subr.bf16.mxu0 0
    %420 = vmatpush1.bf16.msra.mxu0 0
    %421 = vmatprep.subr.bf16.mxu0 0
    %422 = vmatpush1.bf16.msra.mxu0 0
    %423 = vmatprep.subr.bf16.mxu0 0
    %424 = vmatpush1.bf16.msra.mxu0 0
    %425 = vmatprep.subr.bf16.mxu0 0
    %426 = vmatpush1.bf16.msra.mxu0 0
    %427 = vmatprep.subr.bf16.mxu0 0
    %428 = vmatpush1.bf16.msra.mxu0 0
    %429 = vmatprep.subr.bf16.mxu0 0
    %430 = vmatpush1.bf16.msra.mxu0 0
    %431 = vmatprep.subr.bf16.mxu0 0
    %432 = vmatpush1.bf16.msra.mxu0 0
    %433 = vmatprep.mubr.bf16.mxu0 0
    %434 = vmatmul.mubr.bf16.gmra.mrb[0].mxu0 %v399
    %v435 = vpop.f32.mrb[0].mxu0
    %v436 = vadd.f32 0.0, %v435
    %v437 = vpop.f32.mrb[0].mxu0
    %v438 = vpop.f32.mrb[0].mxu0
    %v439 = vpop.f32.mrb[0].mxu0
    %440 = vdwg.mxu0
    %v441 = vadd.f32 %v110, %v436
    %v442 = vmul.f32 %v441, 0.5
    %v443 = vtanh.pop %v442
    %v444 = vmul.f32 %v443, 0.5
    %v445 = vadd.f32 %v444, 0.5
    %v446 = vtanh.pop %v441
    %v447 = vmul.f32 %v445, %v374
    %449 = vrot.lane.b32.xlu0 %v446, 64
    %v450 = vpop.permute.xlu0 %449
    %v452 = vmul.f32 %v445, %v450
    %454 = vrot.lane.b32.xlu0 %v452, 32
    %v455 = vpop.permute.xlu0 %454
    %v457 = vadd.f32 %v447, %v455
    %v458 = vtanh.pop %v457
    %460 = vrot.lane.b32.xlu0 %v458, 64
    %v461 = vpop.permute.xlu0 %460
    %v463 = vmul.f32 %v445, %v461
    %v466 = vunpack.c.l.s4 1983009808
    %v467 = vunpack.c.0.s8 %v466
    %v468 = vlaneseq
    %v469 = vshrl.u32 %v468, 7
    %v470 = vsub.s32 %v467, %v469
    %v471 = vrot.slane %v463, %v470
    %472 = vrot.lane.b32.xlu0 %v471, 32
    %v473 = vpop.permute.xlu0 %472
    %s475 = scalar_lea.vmem [#allocation2], 6
    %476 = vst.msk [vmem:[%s475] sm:$0x3] %vm226, %v473
    %v477 = vpack.c.bf16 %v463, %v463
    %479 = vrot.lane.b32.xlu0 %v477, 32
    %v480 = vpop.permute.xlu0 %479
    %v482 = vsel %vm148, %v480, 0
    %484 = vmatprep.subr.bf16.mxu0 0
    %485 = vmatpush1.bf16.msra.mxu0 %v144
    %486 = vmatprep.subr.bf16.mxu0 0
    %487 = vmatpush1.bf16.msra.mxu0 %v145
    %488 = vmatprep.subr.bf16.mxu0 0
    %489 = vmatpush1.bf16.msra.mxu0 0
    %490 = vmatprep.subr.bf16.mxu0 0
    %491 = vmatpush1.bf16.msra.mxu0 0
    %492 = vmatprep.subr.bf16.mxu0 0
    %493 = vmatpush1.bf16.msra.mxu0 0
    %494 = vmatprep.subr.bf16.mxu0 0
    %495 = vmatpush1.bf16.msra.mxu0 0
    %496 = vmatprep.subr.bf16.mxu0 0
    %497 = vmatpush1.bf16.msra.mxu0 0
    %498 = vmatprep.subr.bf16.mxu0 0
    %499 = vmatpush1.bf16.msra.mxu0 0
    %500 = vmatprep.subr.bf16.mxu0 0
    %501 = vmatpush1.bf16.msra.mxu0 0
    %502 = vmatprep.subr.bf16.mxu0 0
    %503 = vmatpush1.bf16.msra.mxu0 0
    %504 = vmatprep.subr.bf16.mxu0 0
    %505 = vmatpush1.bf16.msra.mxu0 0
    %506 = vmatprep.subr.bf16.mxu0 0
    %507 = vmatpush1.bf16.msra.mxu0 0
    %508 = vmatprep.subr.bf16.mxu0 0
    %509 = vmatpush1.bf16.msra.mxu0 0
    %510 = vmatprep.subr.bf16.mxu0 0
    %511 = vmatpush1.bf16.msra.mxu0 0
    %512 = vmatprep.subr.bf16.mxu0 0
    %513 = vmatpush1.bf16.msra.mxu0 0
    %514 = vmatprep.subr.bf16.mxu0 0
    %515 = vmatpush1.bf16.msra.mxu0 0
    %516 = vmatprep.mubr.bf16.mxu0 0
    %517 = vmatmul.mubr.bf16.gmra.mrb[0].mxu0 %v482
    %v518 = vpop.f32.mrb[0].mxu0
    %v519 = vadd.f32 0.0, %v518
    %v520 = vpop.f32.mrb[0].mxu0
    %v521 = vpop.f32.mrb[0].mxu0
    %v522 = vpop.f32.mrb[0].mxu0
    %523 = vdwg.mxu0
    %v524 = vadd.f32 %v118, %v519
    %v525 = vmul.f32 %v524, 0.5
    %v526 = vtanh.pop %v525
    %v527 = vmul.f32 %v526, 0.5
    %v528 = vadd.f32 %v527, 0.5
    %v529 = vtanh.pop %v524
    %v530 = vmul.f32 %v528, %v457
    %532 = vrot.lane.b32.xlu0 %v529, 64
    %v533 = vpop.permute.xlu0 %532
    %v535 = vmul.f32 %v528, %v533
    %537 = vrot.lane.b32.xlu0 %v535, 32
    %v538 = vpop.permute.xlu0 %537
    %v540 = vadd.f32 %v530, %v538
    %v541 = vtanh.pop %v540
    %543 = vrot.lane.b32.xlu0 %v541, 64
    %v544 = vpop.permute.xlu0 %543
    %v546 = vmul.f32 %v528, %v544
    %v549 = vunpack.c.l.s4 1983009808
    %v550 = vunpack.c.0.s8 %v549
    %v551 = vlaneseq
    %v552 = vshrl.u32 %v551, 7
    %v553 = vsub.s32 %v550, %v552
    %v554 = vrot.slane %v546, %v553
    %555 = vrot.lane.b32.xlu0 %v554, 32
    %v556 = vpop.permute.xlu0 %555
    %s558 = scalar_lea.vmem [#allocation2], 8
    %559 = vst.msk [vmem:[%s558] sm:$0x3] %vm226, %v556
    %v560 = vpack.c.bf16 %v546, %v546
    %562 = vrot.lane.b32.xlu0 %v560, 32
    %v563 = vpop.permute.xlu0 %562
    %v565 = vsel %vm148, %v563, 0
    %567 = vmatprep.subr.bf16.mxu0 0
    %568 = vmatpush1.bf16.msra.mxu0 %v144
    %569 = vmatprep.subr.bf16.mxu0 0
    %570 = vmatpush1.bf16.msra.mxu0 %v145
    %571 = vmatprep.subr.bf16.mxu0 0
    %572 = vmatpush1.bf16.msra.mxu0 0
    %573 = vmatprep.subr.bf16.mxu0 0
    %574 = vmatpush1.bf16.msra.mxu0 0
    %575 = vmatprep.subr.bf16.mxu0 0
    %576 = vmatpush1.bf16.msra.mxu0 0
    %577 = vmatprep.subr.bf16.mxu0 0
    %578 = vmatpush1.bf16.msra.mxu0 0
    %579 = vmatprep.subr.bf16.mxu0 0
    %580 = vmatpush1.bf16.msra.mxu0 0
    %581 = vmatprep.subr.bf16.mxu0 0
    %582 = vmatpush1.bf16.msra.mxu0 0
    %583 = vmatprep.subr.bf16.mxu0 0
    %584 = vmatpush1.bf16.msra.mxu0 0
    %585 = vmatprep.subr.bf16.mxu0 0
    %586 = vmatpush1.bf16.msra.mxu0 0
    %587 = vmatprep.subr.bf16.mxu0 0
    %588 = vmatpush1.bf16.msra.mxu0 0
    %589 = vmatprep.subr.bf16.mxu0 0
    %590 = vmatpush1.bf16.msra.mxu0 0
    %591 = vmatprep.subr.bf16.mxu0 0
    %592 = vmatpush1.bf16.msra.mxu0 0
    %593 = vmatprep.subr.bf16.mxu0 0
    %594 = vmatpush1.bf16.msra.mxu0 0
    %595 = vmatprep.subr.bf16.mxu0 0
    %596 = vmatpush1.bf16.msra.mxu0 0
    %597 = vmatprep.subr.bf16.mxu0 0
    %598 = vmatpush1.bf16.msra.mxu0 0
    %599 = vmatprep.mubr.bf16.mxu0 0
    %600 = vmatmul.mubr.bf16.gmra.mrb[0].mxu0 %v565
    %v601 = vpop.f32.mrb[0].mxu0
    %v602 = vadd.f32 0.0, %v601
    %v603 = vpop.f32.mrb[0].mxu0
    %v604 = vpop.f32.mrb[0].mxu0
    %v605 = vpop.f32.mrb[0].mxu0
    %606 = vdwg.mxu0
    %v607 = vadd.f32 %v126, %v602
    %v608 = vmul.f32 %v607, 0.5
    %v609 = vtanh.pop %v608
    %v610 = vmul.f32 %v609, 0.5
    %v611 = vadd.f32 %v610, 0.5
    %v612 = vtanh.pop %v607
    %v613 = vmul.f32 %v611, %v540
    %615 = vrot.lane.b32.xlu0 %v612, 64
    %v616 = vpop.permute.xlu0 %615
    %v618 = vmul.f32 %v611, %v616
    %620 = vrot.lane.b32.xlu0 %v618, 32
    %v621 = vpop.permute.xlu0 %620
    %v623 = vadd.f32 %v613, %v621
    %v624 = vtanh.pop %v623
    %626 = vrot.lane.b32.xlu0 %v624, 64
    %v627 = vpop.permute.xlu0 %626
    %v629 = vmul.f32 %v611, %v627
    %v632 = vunpack.c.l.s4 1983009808
    %v633 = vunpack.c.0.s8 %v632
    %v634 = vlaneseq
    %v635 = vshrl.u32 %v634, 7
    %v636 = vsub.s32 %v633, %v635
    %v637 = vrot.slane %v629, %v636
    %638 = vrot.lane.b32.xlu0 %v637, 32
    %v639 = vpop.permute.xlu0 %638
    %s641 = scalar_lea.vmem [#allocation2], 10
    %642 = vst.msk [vmem:[%s641] sm:$0x3] %vm226, %v639
    %v643 = vpack.c.bf16 %v629, %v629
    %645 = vrot.lane.b32.xlu0 %v643, 32
    %v646 = vpop.permute.xlu0 %645
    %v648 = vsel %vm148, %v646, 0
    %650 = vmatprep.subr.bf16.mxu0 0
    %651 = vmatpush1.bf16.msra.mxu0 %v144
    %652 = vmatprep.subr.bf16.mxu0 0
    %653 = vmatpush1.bf16.msra.mxu0 %v145
    %654 = vmatprep.subr.bf16.mxu0 0
    %655 = vmatpush1.bf16.msra.mxu0 0
    %656 = vmatprep.subr.bf16.mxu0 0
    %657 = vmatpush1.bf16.msra.mxu0 0
    %658 = vmatprep.subr.bf16.mxu0 0
    %659 = vmatpush1.bf16.msra.mxu0 0
    %660 = vmatprep.subr.bf16.mxu0 0
    %661 = vmatpush1.bf16.msra.mxu0 0
    %662 = vmatprep.subr.bf16.mxu0 0
    %663 = vmatpush1.bf16.msra.mxu0 0
    %664 = vmatprep.subr.bf16.mxu0 0
    %665 = vmatpush1.bf16.msra.mxu0 0
    %666 = vmatprep.subr.bf16.mxu0 0
    %667 = vmatpush1.bf16.msra.mxu0 0
    %668 = vmatprep.subr.bf16.mxu0 0
    %669 = vmatpush1.bf16.msra.mxu0 0
    %670 = vmatprep.subr.bf16.mxu0 0
    %671 = vmatpush1.bf16.msra.mxu0 0
    %672 = vmatprep.subr.bf16.mxu0 0
    %673 = vmatpush1.bf16.msra.mxu0 0
    %674 = vmatprep.subr.bf16.mxu0 0
    %675 = vmatpush1.bf16.msra.mxu0 0
    %676 = vmatprep.subr.bf16.mxu0 0
    %677 = vmatpush1.bf16.msra.mxu0 0
    %678 = vmatprep.subr.bf16.mxu0 0
    %679 = vmatpush1.bf16.msra.mxu0 0
    %680 = vmatprep.subr.bf16.mxu0 0
    %681 = vmatpush1.bf16.msra.mxu0 0
    %682 = vmatprep.mubr.bf16.mxu0 0
    %683 = vmatmul.mubr.bf16.gmra.mrb[0].mxu0 %v648
    %v684 = vpop.f32.mrb[0].mxu0
    %v685 = vadd.f32 0.0, %v684
    %v686 = vpop.f32.mrb[0].mxu0
    %v687 = vpop.f32.mrb[0].mxu0
    %v688 = vpop.f32.mrb[0].mxu0
    %689 = vdwg.mxu0
    %v690 = vadd.f32 %v125, %v685
    %v691 = vmul.f32 %v690, 0.5
    %v692 = vtanh.pop %v691
    %v693 = vmul.f32 %v692, 0.5
    %v694 = vadd.f32 %v693, 0.5
    %v695 = vtanh.pop %v690
    %v696 = vmul.f32 %v694, %v623
    %698 = vrot.lane.b32.xlu0 %v695, 64
    %v699 = vpop.permute.xlu0 %698
    %v701 = vmul.f32 %v694, %v699
    %703 = vrot.lane.b32.xlu0 %v701, 32
    %v704 = vpop.permute.xlu0 %703
    %v706 = vadd.f32 %v696, %v704
    %v707 = vtanh.pop %v706
    %709 = vrot.lane.b32.xlu0 %v707, 64
    %v710 = vpop.permute.xlu0 %709
    %v712 = vmul.f32 %v694, %v710
    %v715 = vunpack.c.l.s4 1983009808
    %v716 = vunpack.c.0.s8 %v715
    %v717 = vlaneseq
    %v718 = vshrl.u32 %v717, 7
    %v719 = vsub.s32 %v716, %v718
    %v720 = vrot.slane %v712, %v719
    %721 = vrot.lane.b32.xlu0 %v720, 32
    %v722 = vpop.permute.xlu0 %721
    %s724 = scalar_lea.vmem [#allocation2], 12
    %725 = vst.msk [vmem:[%s724] sm:$0x3] %vm226, %v722
    %v726 = vpack.c.bf16 %v712, %v712
    %728 = vrot.lane.b32.xlu0 %v726, 32
    %v729 = vpop.permute.xlu0 %728
    %v731 = vsel %vm148, %v729, 0
    %733 = vmatprep.subr.bf16.mxu0 0
    %734 = vmatpush1.bf16.msra.mxu0 %v144
    %735 = vmatprep.subr.bf16.mxu0 0
    %736 = vmatpush1.bf16.msra.mxu0 %v145
    %737 = vmatprep.subr.bf16.mxu0 0
    %738 = vmatpush1.bf16.msra.mxu0 0
    %739 = vmatprep.subr.bf16.mxu0 0
    %740 = vmatpush1.bf16.msra.mxu0 0
    %741 = vmatprep.subr.bf16.mxu0 0
    %742 = vmatpush1.bf16.msra.mxu0 0
    %743 = vmatprep.subr.bf16.mxu0 0
    %744 = vmatpush1.bf16.msra.mxu0 0
    %745 = vmatprep.subr.bf16.mxu0 0
    %746 = vmatpush1.bf16.msra.mxu0 0
    %747 = vmatprep.subr.bf16.mxu0 0
    %748 = vmatpush1.bf16.msra.mxu0 0
    %749 = vmatprep.subr.bf16.mxu0 0
    %750 = vmatpush1.bf16.msra.mxu0 0
    %751 = vmatprep.subr.bf16.mxu0 0
    %752 = vmatpush1.bf16.msra.mxu0 0
    %753 = vmatprep.subr.bf16.mxu0 0
    %754 = vmatpush1.bf16.msra.mxu0 0
    %755 = vmatprep.subr.bf16.mxu0 0
    %756 = vmatpush1.bf16.msra.mxu0 0
    %757 = vmatprep.subr.bf16.mxu0 0
    %758 = vmatpush1.bf16.msra.mxu0 0
    %759 = vmatprep.subr.bf16.mxu0 0
    %760 = vmatpush1.bf16.msra.mxu0 0
    %761 = vmatprep.subr.bf16.mxu0 0
    %762 = vmatpush1.bf16.msra.mxu0 0
    %763 = vmatprep.subr.bf16.mxu0 0
    %764 = vmatpush1.bf16.msra.mxu0 0
    %765 = vmatprep.mubr.bf16.mxu0 0
    %766 = vmatmul.mubr.bf16.gmra.mrb[0].mxu0 %v731
    %v767 = vpop.f32.mrb[0].mxu0
    %v768 = vadd.f32 0.0, %v767
    %v769 = vpop.f32.mrb[0].mxu0
    %v770 = vpop.f32.mrb[0].mxu0
    %v771 = vpop.f32.mrb[0].mxu0
    %772 = vdwg.mxu0
    %v773 = vadd.f32 %v127, %v768
    %v774 = vmul.f32 %v773, 0.5
    %v775 = vtanh.pop %v774
    %v776 = vmul.f32 %v775, 0.5
    %v777 = vadd.f32 %v776, 0.5
    %v778 = vtanh.pop %v773
    %v779 = vmul.f32 %v777, %v706
    %781 = vrot.lane.b32.xlu0 %v778, 64
    %v782 = vpop.permute.xlu0 %781
    %v784 = vmul.f32 %v777, %v782
    %786 = vrot.lane.b32.xlu0 %v784, 32
    %v787 = vpop.permute.xlu0 %786
    %v789 = vadd.f32 %v779, %v787
    %v790 = vtanh.pop %v789
    %792 = vrot.lane.b32.xlu0 %v790, 64
    %v793 = vpop.permute.xlu0 %792
    %v795 = vmul.f32 %v777, %v793
    %v798 = vunpack.c.l.s4 1983009808
    %v799 = vunpack.c.0.s8 %v798
    %v800 = vlaneseq
    %v801 = vshrl.u32 %v800, 7
    %v802 = vsub.s32 %v799, %v801
    %v803 = vrot.slane %v795, %v802
    %804 = vrot.lane.b32.xlu0 %v803, 32
    %v805 = vpop.permute.xlu0 %804
    %s807 = scalar_lea.vmem [#allocation2], 14
    %808 = vst.msk [vmem:[%s807] sm:$0x3] %vm226, %v805
    %v809 = vld [vmem:[#allocation2] sm:$0x3]
    %v810 = vld [vmem:[#allocation2 + $0x2] sm:$0x3]
    %v811 = vld [vmem:[#allocation2 + $0x4] sm:$0x3]
    %v812 = vld [vmem:[#allocation2 + $0x6] sm:$0x3]
    %v813 = vld [vmem:[#allocation2 + $0x8] sm:$0x3]
    %v814 = vld [vmem:[#allocation2 + $0xa] sm:$0x3]
    %v815 = vld [vmem:[#allocation2 + $0xc] sm:$0x3]
    %v816 = vld [vmem:[#allocation2 + $0xe] sm:$0x3]
    %v825 = vcombine.low %v809, %v810
    %v826 = vcombine.low %v811, %v812
    %v828 = vunpack.c.l.s4 1983009808
    %v829 = vunpack.c.0.s8 %v828
    %v830 = vlaneseq
    %v831 = vshrl.u32 %v830, 7
    %v832 = vsub.s32 %v829, %v831
    %v833 = vrot.slane %v825, %v832
    %v835 = vunpack.c.l.s4 1983009808
    %v836 = vunpack.c.0.s8 %v835
    %v837 = vlaneseq
    %v838 = vshrl.u32 %v837, 7
    %v839 = vsub.s32 %v836, %v838
    %v840 = vrot.slane %v826, %v839
    %v841 = vcombine.low %v833, %v840
    %v842 = vcombine.low %v813, %v814
    %v843 = vcombine.low %v815, %v816
    %v845 = vunpack.c.l.s4 1983009808
    %v846 = vunpack.c.0.s8 %v845
    %v847 = vlaneseq
    %v848 = vshrl.u32 %v847, 7
    %v849 = vsub.s32 %v846, %v848
    %v850 = vrot.slane %v842, %v849
    %v852 = vunpack.c.l.s4 1983009808
    %v853 = vunpack.c.0.s8 %v852
    %v854 = vlaneseq
    %v855 = vshrl.u32 %v854, 7
    %v856 = vsub.s32 %v853, %v855
    %v857 = vrot.slane %v843, %v856
    %v858 = vcombine.low %v850, %v857
    %v861 = vpack.c.bf16 %v858, %v841
    %v862 = vld [vmem:[#allocation5 + $0x18] sm:$0xf]
    %v863 = vld [vmem:[#allocation5 + $0x1c] sm:$0xf]
    %v864 = vld [vmem:[#allocation5 + $0x20] sm:$0xf]
    %v865 = vld [vmem:[#allocation5 + $0x24] sm:$0xf]
    %v866 = vld [vmem:[#allocation5 + $0x28] sm:$0xf]
    %v867 = vld [vmem:[#allocation5 + $0x2c] sm:$0xf]
    %v868 = vld [vmem:[#allocation5 + $0x30] sm:$0xf]
    %v869 = vld [vmem:[#allocation5 + $0x34] sm:$0xf]
    %v870 = vlaneseq
    %v871 = vshrl.u32 %v870, 7
    %v872 = vsub.s32 1, %v871
    %v873 = vrot.slane %v30, %v872
    %v878 = vunpack.c.l.b16 %v862
    %v879 = vunpack.c.l.b16 %v863
    %v880 = vunpack.c.l.b16 %v864
    %v881 = vunpack.c.l.b16 %v865
    %v882 = vpack.c.b16 %v879, %v878
    %v883 = vpack.c.b16 %v881, %v880
    %v887 = vsel %vm148, %v861, 0
    %889 = vmatprep.subr.bf16.mxu0 0
    %890 = vmatpush1.bf16.msra.mxu0 %v882
    %891 = vmatprep.subr.bf16.mxu0 0
    %892 = vmatpush1.bf16.msra.mxu0 %v883
    %893 = vmatprep.subr.bf16.mxu0 0
    %894 = vmatpush1.bf16.msra.mxu0 0
    %895 = vmatprep.subr.bf16.mxu0 0
    %896 = vmatpush1.bf16.msra.mxu0 0
    %897 = vmatprep.subr.bf16.mxu0 0
    %898 = vmatpush1.bf16.msra.mxu0 0
    %899 = vmatprep.subr.bf16.mxu0 0
    %900 = vmatpush1.bf16.msra.mxu0 0
    %901 = vmatprep.subr.bf16.mxu0 0
    %902 = vmatpush1.bf16.msra.mxu0 0
    %903 = vmatprep.subr.bf16.mxu0 0
    %904 = vmatpush1.bf16.msra.mxu0 0
    %905 = vmatprep.subr.bf16.mxu0 0
    %906 = vmatpush1.bf16.msra.mxu0 0
    %907 = vmatprep.subr.bf16.mxu0 0
    %908 = vmatpush1.bf16.msra.mxu0 0
    %909 = vmatprep.subr.bf16.mxu0 0
    %910 = vmatpush1.bf16.msra.mxu0 0
    %911 = vmatprep.subr.bf16.mxu0 0
    %912 = vmatpush1.bf16.msra.mxu0 0
    %913 = vmatprep.subr.bf16.mxu0 0
    %914 = vmatpush1.bf16.msra.mxu0 0
    %915 = vmatprep.subr.bf16.mxu0 0
    %916 = vmatpush1.bf16.msra.mxu0 0
    %917 = vmatprep.subr.bf16.mxu0 0
    %918 = vmatpush1.bf16.msra.mxu0 0
    %919 = vmatprep.subr.bf16.mxu0 0
    %920 = vmatpush1.bf16.msra.mxu0 0
    %921 = vmatprep.mubr.bf16.mxu0 0
    %922 = vmatmul.mubr.bf16.gmra.mrb[0].mxu0 %v887
    %v923 = vpop.f32.mrb[0].mxu0
    %v924 = vadd.f32 %v873, %v923
    %v925 = vpop.f32.mrb[0].mxu0
    %v926 = vpop.f32.mrb[0].mxu0
    %v927 = vadd.f32 %v873, %v926
    %v928 = vpop.f32.mrb[0].mxu0
    %929 = vdwg.mxu0
    %v932 = vcombine.high %v924, %v924
    %v934 = vunpack.c.l.s4 1983009808
    %v935 = vunpack.c.0.s8 %v934
    %v936 = vlaneseq
    %v937 = vshrl.u32 %v936, 7
    %v938 = vsub.s32 %v935, %v937
    %v939 = vrot.slane %v924, %v938
    %v941 = vunpack.c.l.s4 1983009808
    %v942 = vunpack.c.0.s8 %v941
    %v943 = vlaneseq
    %v944 = vshrl.u32 %v943, 7
    %v945 = vsub.s32 %v942, %v944
    %v946 = vrot.slane %v932, %v945
    %v947 = vcombine.high %v939, %v939
    %v948 = vcombine.high %v946, %v946
    %v949 = vcombine.high %v927, %v927
    %v951 = vunpack.c.l.s4 1983009808
    %v952 = vunpack.c.0.s8 %v951
    %v953 = vlaneseq
    %v954 = vshrl.u32 %v953, 7
    %v955 = vsub.s32 %v952, %v954
    %v956 = vrot.slane %v927, %v955
    %v958 = vunpack.c.l.s4 1983009808
    %v959 = vunpack.c.0.s8 %v958
    %v960 = vlaneseq
    %v961 = vshrl.u32 %v960, 7
    %v962 = vsub.s32 %v959, %v961
    %v963 = vrot.slane %v949, %v962
    %v964 = vcombine.high %v956, %v956
    %v965 = vcombine.high %v963, %v963
    %v978 = vunpack.c.l.b16 %v866
    %v979 = vunpack.c.l.b16 %v867
    %v980 = vunpack.c.l.b16 %v868
    %v981 = vunpack.c.l.b16 %v869
    %v982 = vpack.c.b16 %v979, %v978
    %v983 = vpack.c.b16 %v981, %v980
    %986 = vmatprep.subr.bf16.mxu0 0
    %987 = vmatpush1.bf16.msra.mxu0 %v982
    %988 = vmatprep.subr.bf16.mxu0 0
    %989 = vmatpush1.bf16.msra.mxu0 %v983
    %990 = vmatprep.subr.bf16.mxu0 0
    %991 = vmatpush1.bf16.msra.mxu0 0
    %992 = vmatprep.subr.bf16.mxu0 0
    %993 = vmatpush1.bf16.msra.mxu0 0
    %994 = vmatprep.subr.bf16.mxu0 0
    %995 = vmatpush1.bf16.msra.mxu0 0
    %996 = vmatprep.subr.bf16.mxu0 0
    %997 = vmatpush1.bf16.msra.mxu0 0
    %998 = vmatprep.subr.bf16.mxu0 0
    %999 = vmatpush1.bf16.msra.mxu0 0
    %1000 = vmatprep.subr.bf16.mxu0 0
    %1001 = vmatpush1.bf16.msra.mxu0 0
    %1002 = vmatprep.subr.bf16.mxu0 0
    %1003 = vmatpush1.bf16.msra.mxu0 0
    %1004 = vmatprep.subr.bf16.mxu0 0
    %1005 = vmatpush1.bf16.msra.mxu0 0
    %1006 = vmatprep.subr.bf16.mxu0 0
    %1007 = vmatpush1.bf16.msra.mxu0 0
    %1008 = vmatprep.subr.bf16.mxu0 0
    %1009 = vmatpush1.bf16.msra.mxu0 0
    %1010 = vmatprep.subr.bf16.mxu0 0
    %1011 = vmatpush1.bf16.msra.mxu0 0
    %1012 = vmatprep.subr.bf16.mxu0 0
    %1013 = vmatpush1.bf16.msra.mxu0 0
    %1014 = vmatprep.subr.bf16.mxu0 0
    %1015 = vmatpush1.bf16.msra.mxu0 0
    %1016 = vmatprep.subr.bf16.mxu0 0
    %1017 = vmatpush1.bf16.msra.mxu0 0
    %1018 = vmatprep.mubr.bf16.mxu0 0
    %1019 = vmatmul.mubr.bf16.gmra.mrb[0].mxu0 %v150
    %v1020 = vpop.f32.mrb[0].mxu0
    %v1021 = vadd.f32 0.0, %v1020
    %v1022 = vpop.f32.mrb[0].mxu0
    %v1023 = vpop.f32.mrb[0].mxu0
    %v1024 = vpop.f32.mrb[0].mxu0
    %1025 = vdwg.mxu0
    %v1026 = vadd.f32 %v939, %v1021
    %v1027 = vmul.f32 %v1026, 0.5
    %v1028 = vtanh.pop %v1027
    %v1029 = vmul.f32 %v1028, 0.5
    %v1030 = vadd.f32 %v1029, 0.5
    %v1031 = vtanh.pop %v1026
    %v1032 = vmul.f32 %v1030, 0.0
    %1034 = vrot.lane.b32.xlu0 %v1031, 64
    %v1035 = vpop.permute.xlu0 %1034
    %v1037 = vmul.f32 %v1030, %v1035
    %1039 = vrot.lane.b32.xlu0 %v1037, 32
    %v1040 = vpop.permute.xlu0 %1039
    %v1042 = vadd.f32 %v1032, %v1040
    %v1043 = vtanh.pop %v1042
    %1045 = vrot.lane.b32.xlu0 %v1043, 64
    %v1046 = vpop.permute.xlu0 %1045
    %v1048 = vmul.f32 %v1030, %v1046
    %v1051 = vunpack.c.l.s4 1983009808
    %v1052 = vunpack.c.0.s8 %v1051
    %v1053 = vlaneseq
    %v1054 = vshrl.u32 %v1053, 7
    %v1055 = vsub.s32 %v1052, %v1054
    %v1056 = vrot.slane %v1048, %v1055
    %1057 = vrot.lane.b32.xlu0 %v1056, 32
    %v1058 = vpop.permute.xlu0 %1057
    %1060 = vst.msk [vmem:[#allocation3] sm:$0x3] %vm226, %v1058
    %v1061 = vpack.c.bf16 %v1048, %v1048
    %1063 = vrot.lane.b32.xlu0 %v1061, 32
    %v1064 = vpop.permute.xlu0 %1063
    %v1066 = vsel %vm148, %v1064, 0
    %1068 = vmatprep.subr.bf16.mxu0 0
    %1069 = vmatpush1.bf16.msra.mxu0 %v982
    %1070 = vmatprep.subr.bf16.mxu0 0
    %1071 = vmatpush1.bf16.msra.mxu0 %v983
    %1072 = vmatprep.subr.bf16.mxu0 0
    %1073 = vmatpush1.bf16.msra.mxu0 0
    %1074 = vmatprep.subr.bf16.mxu0 0
    %1075 = vmatpush1.bf16.msra.mxu0 0
    %1076 = vmatprep.subr.bf16.mxu0 0
    %1077 = vmatpush1.bf16.msra.mxu0 0
    %1078 = vmatprep.subr.bf16.mxu0 0
    %1079 = vmatpush1.bf16.msra.mxu0 0
    %1080 = vmatprep.subr.bf16.mxu0 0
    %1081 = vmatpush1.bf16.msra.mxu0 0
    %1082 = vmatprep.subr.bf16.mxu0 0
    %1083 = vmatpush1.bf16.msra.mxu0 0
    %1084 = vmatprep.subr.bf16.mxu0 0
    %1085 = vmatpush1.bf16.msra.mxu0 0
    %1086 = vmatprep.subr.bf16.mxu0 0
    %1087 = vmatpush1.bf16.msra.mxu0 0
    %1088 = vmatprep.subr.bf16.mxu0 0
    %1089 = vmatpush1.bf16.msra.mxu0 0
    %1090 = vmatprep.subr.bf16.mxu0 0
    %1091 = vmatpush1.bf16.msra.mxu0 0
    %1092 = vmatprep.subr.bf16.mxu0 0
    %1093 = vmatpush1.bf16.msra.mxu0 0
    %1094 = vmatprep.subr.bf16.mxu0 0
    %1095 = vmatpush1.bf16.msra.mxu0 0
    %1096 = vmatprep.subr.bf16.mxu0 0
    %1097 = vmatpush1.bf16.msra.mxu0 0
    %1098 = vmatprep.subr.bf16.mxu0 0
    %1099 = vmatpush1.bf16.msra.mxu0 0
    %1100 = vmatprep.mubr.bf16.mxu0 0
    %1101 = vmatmul.mubr.bf16.gmra.mrb[0].mxu0 %v1066
    %v1102 = vpop.f32.mrb[0].mxu0
    %v1103 = vadd.f32 0.0, %v1102
    %v1104 = vpop.f32.mrb[0].mxu0
    %v1105 = vpop.f32.mrb[0].mxu0
    %v1106 = vpop.f32.mrb[0].mxu0
    %1107 = vdwg.mxu0
    %v1108 = vadd.f32 %v947, %v1103
    %v1109 = vmul.f32 %v1108, 0.5
    %v1110 = vtanh.pop %v1109
    %v1111 = vmul.f32 %v1110, 0.5
    %v1112 = vadd.f32 %v1111, 0.5
    %v1113 = vtanh.pop %v1108
    %v1114 = vmul.f32 %v1112, %v1042
    %1116 = vrot.lane.b32.xlu0 %v1113, 64
    %v1117 = vpop.permute.xlu0 %1116
    %v1119 = vmul.f32 %v1112, %v1117
    %1121 = vrot.lane.b32.xlu0 %v1119, 32
    %v1122 = vpop.permute.xlu0 %1121
    %v1124 = vadd.f32 %v1114, %v1122
    %v1125 = vtanh.pop %v1124
    %1127 = vrot.lane.b32.xlu0 %v1125, 64
    %v1128 = vpop.permute.xlu0 %1127
    %v1130 = vmul.f32 %v1112, %v1128
    %v1133 = vunpack.c.l.s4 1983009808
    %v1134 = vunpack.c.0.s8 %v1133
    %v1135 = vlaneseq
    %v1136 = vshrl.u32 %v1135, 7
    %v1137 = vsub.s32 %v1134, %v1136
    %v1138 = vrot.slane %v1130, %v1137
    %1139 = vrot.lane.b32.xlu0 %v1138, 32
    %v1140 = vpop.permute.xlu0 %1139
    %s1142 = scalar_lea.vmem [#allocation3], 2
    %1143 = vst.msk [vmem:[%s1142] sm:$0x3] %vm226, %v1140
    %v1144 = vpack.c.bf16 %v1130, %v1130
    %1146 = vrot.lane.b32.xlu0 %v1144, 32
    %v1147 = vpop.permute.xlu0 %1146
    %v1149 = vsel %vm148, %v1147, 0
    %1151 = vmatprep.subr.bf16.mxu0 0
    %1152 = vmatpush1.bf16.msra.mxu0 %v982
    %1153 = vmatprep.subr.bf16.mxu0 0
    %1154 = vmatpush1.bf16.msra.mxu0 %v983
    %1155 = vmatprep.subr.bf16.mxu0 0
    %1156 = vmatpush1.bf16.msra.mxu0 0
    %1157 = vmatprep.subr.bf16.mxu0 0
    %1158 = vmatpush1.bf16.msra.mxu0 0
    %1159 = vmatprep.subr.bf16.mxu0 0
    %1160 = vmatpush1.bf16.msra.mxu0 0
    %1161 = vmatprep.subr.bf16.mxu0 0
    %1162 = vmatpush1.bf16.msra.mxu0 0
    %1163 = vmatprep.subr.bf16.mxu0 0
    %1164 = vmatpush1.bf16.msra.mxu0 0
    %1165 = vmatprep.subr.bf16.mxu0 0
    %1166 = vmatpush1.bf16.msra.mxu0 0
    %1167 = vmatprep.subr.bf16.mxu0 0
    %1168 = vmatpush1.bf16.msra.mxu0 0
    %1169 = vmatprep.subr.bf16.mxu0 0
    %1170 = vmatpush1.bf16.msra.mxu0 0
    %1171 = vmatprep.subr.bf16.mxu0 0
    %1172 = vmatpush1.bf16.msra.mxu0 0
    %1173 = vmatprep.subr.bf16.mxu0 0
    %1174 = vmatpush1.bf16.msra.mxu0 0
    %1175 = vmatprep.subr.bf16.mxu0 0
    %1176 = vmatpush1.bf16.msra.mxu0 0
    %1177 = vmatprep.subr.bf16.mxu0 0
    %1178 = vmatpush1.bf16.msra.mxu0 0
    %1179 = vmatprep.subr.bf16.mxu0 0
    %1180 = vmatpush1.bf16.msra.mxu0 0
    %1181 = vmatprep.subr.bf16.mxu0 0
    %1182 = vmatpush1.bf16.msra.mxu0 0
    %1183 = vmatprep.mubr.bf16.mxu0 0
    %1184 = vmatmul.mubr.bf16.gmra.mrb[0].mxu0 %v1149
    %v1185 = vpop.f32.mrb[0].mxu0
    %v1186 = vadd.f32 0.0, %v1185
    %v1187 = vpop.f32.mrb[0].mxu0
    %v1188 = vpop.f32.mrb[0].mxu0
    %v1189 = vpop.f32.mrb[0].mxu0
    %1190 = vdwg.mxu0
    %v1191 = vadd.f32 %v946, %v1186
    %v1192 = vmul.f32 %v1191, 0.5
    %v1193 = vtanh.pop %v1192
    %v1194 = vmul.f32 %v1193, 0.5
    %v1195 = vadd.f32 %v1194, 0.5
    %v1196 = vtanh.pop %v1191
    %v1197 = vmul.f32 %v1195, %v1124
    %1199 = vrot.lane.b32.xlu0 %v1196, 64
    %v1200 = vpop.permute.xlu0 %1199
    %v1202 = vmul.f32 %v1195, %v1200
    %1204 = vrot.lane.b32.xlu0 %v1202, 32
    %v1205 = vpop.permute.xlu0 %1204
    %v1207 = vadd.f32 %v1197, %v1205
    %v1208 = vtanh.pop %v1207
    %1210 = vrot.lane.b32.xlu0 %v1208, 64
    %v1211 = vpop.permute.xlu0 %1210
    %v1213 = vmul.f32 %v1195, %v1211
    %v1216 = vunpack.c.l.s4 1983009808
    %v1217 = vunpack.c.0.s8 %v1216
    %v1218 = vlaneseq
    %v1219 = vshrl.u32 %v1218, 7
    %v1220 = vsub.s32 %v1217, %v1219
    %v1221 = vrot.slane %v1213, %v1220
    %1222 = vrot.lane.b32.xlu0 %v1221, 32
    %v1223 = vpop.permute.xlu0 %1222
    %s1225 = scalar_lea.vmem [#allocation3], 4
    %1226 = vst.msk [vmem:[%s1225] sm:$0x3] %vm226, %v1223
    %v1227 = vpack.c.bf16 %v1213, %v1213
    %1229 = vrot.lane.b32.xlu0 %v1227, 32
    %v1230 = vpop.permute.xlu0 %1229
    %v1232 = vsel %vm148, %v1230, 0
    %1234 = vmatprep.subr.bf16.mxu0 0
    %1235 = vmatpush1.bf16.msra.mxu0 %v982
    %1236 = vmatprep.subr.bf16.mxu0 0
    %1237 = vmatpush1.bf16.msra.mxu0 %v983
    %1238 = vmatprep.subr.bf16.mxu0 0
    %1239 = vmatpush1.bf16.msra.mxu0 0
    %1240 = vmatprep.subr.bf16.mxu0 0
    %1241 = vmatpush1.bf16.msra.mxu0 0
    %1242 = vmatprep.subr.bf16.mxu0 0
    %1243 = vmatpush1.bf16.msra.mxu0 0
    %1244 = vmatprep.subr.bf16.mxu0 0
    %1245 = vmatpush1.bf16.msra.mxu0 0
    %1246 = vmatprep.subr.bf16.mxu0 0
    %1247 = vmatpush1.bf16.msra.mxu0 0
    %1248 = vmatprep.subr.bf16.mxu0 0
    %1249 = vmatpush1.bf16.msra.mxu0 0
    %1250 = vmatprep.subr.bf16.mxu0 0
    %1251 = vmatpush1.bf16.msra.mxu0 0
    %1252 = vmatprep.subr.bf16.mxu0 0
    %1253 = vmatpush1.bf16.msra.mxu0 0
    %1254 = vmatprep.subr.bf16.mxu0 0
    %1255 = vmatpush1.bf16.msra.mxu0 0
    %1256 = vmatprep.subr.bf16.mxu0 0
    %1257 = vmatpush1.bf16.msra.mxu0 0
    %1258 = vmatprep.subr.bf16.mxu0 0
    %1259 = vmatpush1.bf16.msra.mxu0 0
    %1260 = vmatprep.subr.bf16.mxu0 0
    %1261 = vmatpush1.bf16.msra.mxu0 0
    %1262 = vmatprep.subr.bf16.mxu0 0
    %1263 = vmatpush1.bf16.msra.mxu0 0
    %1264 = vmatprep.subr.bf16.mxu0 0
    %1265 = vmatpush1.bf16.msra.mxu0 0
    %1266 = vmatprep.mubr.bf16.mxu0 0
    %1267 = vmatmul.mubr.bf16.gmra.mrb[0].mxu0 %v1232
    %v1268 = vpop.f32.mrb[0].mxu0
    %v1269 = vadd.f32 0.0, %v1268
    %v1270 = vpop.f32.mrb[0].mxu0
    %v1271 = vpop.f32.mrb[0].mxu0
    %v1272 = vpop.f32.mrb[0].mxu0
    %1273 = vdwg.mxu0
    %v1274 = vadd.f32 %v948, %v1269
    %v1275 = vmul.f32 %v1274, 0.5
    %v1276 = vtanh.pop %v1275
    %v1277 = vmul.f32 %v1276, 0.5
    %v1278 = vadd.f32 %v1277, 0.5
    %v1279 = vtanh.pop %v1274
    %v1280 = vmul.f32 %v1278, %v1207
    %1282 = vrot.lane.b32.xlu0 %v1279, 64
    %v1283 = vpop.permute.xlu0 %1282
    %v1285 = vmul.f32 %v1278, %v1283
    %1287 = vrot.lane.b32.xlu0 %v1285, 32
    %v1288 = vpop.permute.xlu0 %1287
    %v1290 = vadd.f32 %v1280, %v1288
    %v1291 = vtanh.pop %v1290
    %1293 = vrot.lane.b32.xlu0 %v1291, 64
    %v1294 = vpop.permute.xlu0 %1293
    %v1296 = vmul.f32 %v1278, %v1294
    %v1299 = vunpack.c.l.s4 1983009808
    %v1300 = vunpack.c.0.s8 %v1299
    %v1301 = vlaneseq
    %v1302 = vshrl.u32 %v1301, 7
    %v1303 = vsub.s32 %v1300, %v1302
    %v1304 = vrot.slane %v1296, %v1303
    %1305 = vrot.lane.b32.xlu0 %v1304, 32
    %v1306 = vpop.permute.xlu0 %1305
    %s1308 = scalar_lea.vmem [#allocation3], 6
    %1309 = vst.msk [vmem:[%s1308] sm:$0x3] %vm226, %v1306
    %v1310 = vpack.c.bf16 %v1296, %v1296
    %1312 = vrot.lane.b32.xlu0 %v1310, 32
    %v1313 = vpop.permute.xlu0 %1312
    %v1315 = vsel %vm148, %v1313, 0
    %1317 = vmatprep.subr.bf16.mxu0 0
    %1318 = vmatpush1.bf16.msra.mxu0 %v982
    %1319 = vmatprep.subr.bf16.mxu0 0
    %1320 = vmatpush1.bf16.msra.mxu0 %v983
    %1321 = vmatprep.subr.bf16.mxu0 0
    %1322 = vmatpush1.bf16.msra.mxu0 0
    %1323 = vmatprep.subr.bf16.mxu0 0
    %1324 = vmatpush1.bf16.msra.mxu0 0
    %1325 = vmatprep.subr.bf16.mxu0 0
    %1326 = vmatpush1.bf16.msra.mxu0 0
    %1327 = vmatprep.subr.bf16.mxu0 0
    %1328 = vmatpush1.bf16.msra.mxu0 0
    %1329 = vmatprep.subr.bf16.mxu0 0
    %1330 = vmatpush1.bf16.msra.mxu0 0
    %1331 = vmatprep.subr.bf16.mxu0 0
    %1332 = vmatpush1.bf16.msra.mxu0 0
    %1333 = vmatprep.subr.bf16.mxu0 0
    %1334 = vmatpush1.bf16.msra.mxu0 0
    %1335 = vmatprep.subr.bf16.mxu0 0
    %1336 = vmatpush1.bf16.msra.mxu0 0
    %1337 = vmatprep.subr.bf16.mxu0 0
    %1338 = vmatpush1.bf16.msra.mxu0 0
    %1339 = vmatprep.subr.bf16.mxu0 0
    %1340 = vmatpush1.bf16.msra.mxu0 0
    %1341 = vmatprep.subr.bf16.mxu0 0
    %1342 = vmatpush1.bf16.msra.mxu0 0
    %1343 = vmatprep.subr.bf16.mxu0 0
    %1344 = vmatpush1.bf16.msra.mxu0 0
    %1345 = vmatprep.subr.bf16.mxu0 0
    %1346 = vmatpush1.bf16.msra.mxu0 0
    %1347 = vmatprep.subr.bf16.mxu0 0
    %1348 = vmatpush1.bf16.msra.mxu0 0
    %1349 = vmatprep.mubr.bf16.mxu0 0
    %1350 = vmatmul.mubr.bf16.gmra.mrb[0].mxu0 %v1315
    %v1351 = vpop.f32.mrb[0].mxu0
    %v1352 = vadd.f32 0.0, %v1351
    %v1353 = vpop.f32.mrb[0].mxu0
    %v1354 = vpop.f32.mrb[0].mxu0
    %v1355 = vpop.f32.mrb[0].mxu0
    %1356 = vdwg.mxu0
    %v1357 = vadd.f32 %v956, %v1352
    %v1358 = vmul.f32 %v1357, 0.5
    %v1359 = vtanh.pop %v1358
    %v1360 = vmul.f32 %v1359, 0.5
    %v1361 = vadd.f32 %v1360, 0.5
    %v1362 = vtanh.pop %v1357
    %v1363 = vmul.f32 %v1361, %v1290
    %1365 = vrot.lane.b32.xlu0 %v1362, 64
    %v1366 = vpop.permute.xlu0 %1365
    %v1368 = vmul.f32 %v1361, %v1366
    %1370 = vrot.lane.b32.xlu0 %v1368, 32
    %v1371 = vpop.permute.xlu0 %1370
    %v1373 = vadd.f32 %v1363, %v1371
    %v1374 = vtanh.pop %v1373
    %1376 = vrot.lane.b32.xlu0 %v1374, 64
    %v1377 = vpop.permute.xlu0 %1376
    %v1379 = vmul.f32 %v1361, %v1377
    %v1382 = vunpack.c.l.s4 1983009808
    %v1383 = vunpack.c.0.s8 %v1382
    %v1384 = vlaneseq
    %v1385 = vshrl.u32 %v1384, 7
    %v1386 = vsub.s32 %v1383, %v1385
    %v1387 = vrot.slane %v1379, %v1386
    %1388 = vrot.lane.b32.xlu0 %v1387, 32
    %v1389 = vpop.permute.xlu0 %1388
    %s1391 = scalar_lea.vmem [#allocation3], 8
    %1392 = vst.msk [vmem:[%s1391] sm:$0x3] %vm226, %v1389
    %v1393 = vpack.c.bf16 %v1379, %v1379
    %1395 = vrot.lane.b32.xlu0 %v1393, 32
    %v1396 = vpop.permute.xlu0 %1395
    %v1398 = vsel %vm148, %v1396, 0
    %1400 = vmatprep.subr.bf16.mxu0 0
    %1401 = vmatpush1.bf16.msra.mxu0 %v982
    %1402 = vmatprep.subr.bf16.mxu0 0
    %1403 = vmatpush1.bf16.msra.mxu0 %v983
    %1404 = vmatprep.subr.bf16.mxu0 0
    %1405 = vmatpush1.bf16.msra.mxu0 0
    %1406 = vmatprep.subr.bf16.mxu0 0
    %1407 = vmatpush1.bf16.msra.mxu0 0
    %1408 = vmatprep.subr.bf16.mxu0 0
    %1409 = vmatpush1.bf16.msra.mxu0 0
    %1410 = vmatprep.subr.bf16.mxu0 0
    %1411 = vmatpush1.bf16.msra.mxu0 0
    %1412 = vmatprep.subr.bf16.mxu0 0
    %1413 = vmatpush1.bf16.msra.mxu0 0
    %1414 = vmatprep.subr.bf16.mxu0 0
    %1415 = vmatpush1.bf16.msra.mxu0 0
    %1416 = vmatprep.subr.bf16.mxu0 0
    %1417 = vmatpush1.bf16.msra.mxu0 0
    %1418 = vmatprep.subr.bf16.mxu0 0
    %1419 = vmatpush1.bf16.msra.mxu0 0
    %1420 = vmatprep.subr.bf16.mxu0 0
    %1421 = vmatpush1.bf16.msra.mxu0 0
    %1422 = vmatprep.subr.bf16.mxu0 0
    %1423 = vmatpush1.bf16.msra.mxu0 0
    %1424 = vmatprep.subr.bf16.mxu0 0
    %1425 = vmatpush1.bf16.msra.mxu0 0
    %1426 = vmatprep.subr.bf16.mxu0 0
    %1427 = vmatpush1.bf16.msra.mxu0 0
    %1428 = vmatprep.subr.bf16.mxu0 0
    %1429 = vmatpush1.bf16.msra.mxu0 0
    %1430 = vmatprep.subr.bf16.mxu0 0
    %1431 = vmatpush1.bf16.msra.mxu0 0
    %1432 = vmatprep.mubr.bf16.mxu0 0
    %1433 = vmatmul.mubr.bf16.gmra.mrb[0].mxu0 %v1398
    %v1434 = vpop.f32.mrb[0].mxu0
    %v1435 = vadd.f32 0.0, %v1434
    %v1436 = vpop.f32.mrb[0].mxu0
    %v1437 = vpop.f32.mrb[0].mxu0
    %v1438 = vpop.f32.mrb[0].mxu0
    %1439 = vdwg.mxu0
    %v1440 = vadd.f32 %v964, %v1435
    %v1441 = vmul.f32 %v1440, 0.5
    %v1442 = vtanh.pop %v1441
    %v1443 = vmul.f32 %v1442, 0.5
    %v1444 = vadd.f32 %v1443, 0.5
    %v1445 = vtanh.pop %v1440
    %v1446 = vmul.f32 %v1444, %v1373
    %1448 = vrot.lane.b32.xlu0 %v1445, 64
    %v1449 = vpop.permute.xlu0 %1448
    %v1451 = vmul.f32 %v1444, %v1449
    %1453 = vrot.lane.b32.xlu0 %v1451, 32
    %v1454 = vpop.permute.xlu0 %1453
    %v1456 = vadd.f32 %v1446, %v1454
    %v1457 = vtanh.pop %v1456
    %1459 = vrot.lane.b32.xlu0 %v1457, 64
    %v1460 = vpop.permute.xlu0 %1459
    %v1462 = vmul.f32 %v1444, %v1460
    %v1465 = vunpack.c.l.s4 1983009808
    %v1466 = vunpack.c.0.s8 %v1465
    %v1467 = vlaneseq
    %v1468 = vshrl.u32 %v1467, 7
    %v1469 = vsub.s32 %v1466, %v1468
    %v1470 = vrot.slane %v1462, %v1469
    %1471 = vrot.lane.b32.xlu0 %v1470, 32
    %v1472 = vpop.permute.xlu0 %1471
    %s1474 = scalar_lea.vmem [#allocation3], 10
    %1475 = vst.msk [vmem:[%s1474] sm:$0x3] %vm226, %v1472
    %v1476 = vpack.c.bf16 %v1462, %v1462
    %1478 = vrot.lane.b32.xlu0 %v1476, 32
    %v1479 = vpop.permute.xlu0 %1478
    %v1481 = vsel %vm148, %v1479, 0
    %1483 = vmatprep.subr.bf16.mxu0 0
    %1484 = vmatpush1.bf16.msra.mxu0 %v982
    %1485 = vmatprep.subr.bf16.mxu0 0
    %1486 = vmatpush1.bf16.msra.mxu0 %v983
    %1487 = vmatprep.subr.bf16.mxu0 0
    %1488 = vmatpush1.bf16.msra.mxu0 0
    %1489 = vmatprep.subr.bf16.mxu0 0
    %1490 = vmatpush1.bf16.msra.mxu0 0
    %1491 = vmatprep.subr.bf16.mxu0 0
    %1492 = vmatpush1.bf16.msra.mxu0 0
    %1493 = vmatprep.subr.bf16.mxu0 0
    %1494 = vmatpush1.bf16.msra.mxu0 0
    %1495 = vmatprep.subr.bf16.mxu0 0
    %1496 = vmatpush1.bf16.msra.mxu0 0
    %1497 = vmatprep.subr.bf16.mxu0 0
    %1498 = vmatpush1.bf16.msra.mxu0 0
    %1499 = vmatprep.subr.bf16.mxu0 0
    %1500 = vmatpush1.bf16.msra.mxu0 0
    %1501 = vmatprep.subr.bf16.mxu0 0
    %1502 = vmatpush1.bf16.msra.mxu0 0
    %1503 = vmatprep.subr.bf16.mxu0 0
    %1504 = vmatpush1.bf16.msra.mxu0 0
    %1505 = vmatprep.subr.bf16.mxu0 0
    %1506 = vmatpush1.bf16.msra.mxu0 0
    %1507 = vmatprep.subr.bf16.mxu0 0
    %1508 = vmatpush1.bf16.msra.mxu0 0
    %1509 = vmatprep.subr.bf16.mxu0 0
    %1510 = vmatpush1.bf16.msra.mxu0 0
    %1511 = vmatprep.subr.bf16.mxu0 0
    %1512 = vmatpush1.bf16.msra.mxu0 0
    %1513 = vmatprep.subr.bf16.mxu0 0
    %1514 = vmatpush1.bf16.msra.mxu0 0
    %1515 = vmatprep.mubr.bf16.mxu0 0
    %1516 = vmatmul.mubr.bf16.gmra.mrb[0].mxu0 %v1481
    %v1517 = vpop.f32.mrb[0].mxu0
    %v1518 = vadd.f32 0.0, %v1517
    %v1519 = vpop.f32.mrb[0].mxu0
    %v1520 = vpop.f32.mrb[0].mxu0
    %v1521 = vpop.f32.mrb[0].mxu0
    %1522 = vdwg.mxu0
    %v1523 = vadd.f32 %v963, %v1518
    %v1524 = vmul.f32 %v1523, 0.5
    %v1525 = vtanh.pop %v1524
    %v1526 = vmul.f32 %v1525, 0.5
    %v1527 = vadd.f32 %v1526, 0.5
    %v1528 = vtanh.pop %v1523
    %v1529 = vmul.f32 %v1527, %v1456
    %1531 = vrot.lane.b32.xlu0 %v1528, 64
    %v1532 = vpop.permute.xlu0 %1531
    %v1534 = vmul.f32 %v1527, %v1532
    %1536 = vrot.lane.b32.xlu0 %v1534, 32
    %v1537 = vpop.permute.xlu0 %1536
    %v1539 = vadd.f32 %v1529, %v1537
    %v1540 = vtanh.pop %v1539
    %1542 = vrot.lane.b32.xlu0 %v1540, 64
    %v1543 = vpop.permute.xlu0 %1542
    %v1545 = vmul.f32 %v1527, %v1543
    %v1548 = vunpack.c.l.s4 1983009808
    %v1549 = vunpack.c.0.s8 %v1548
    %v1550 = vlaneseq
    %v1551 = vshrl.u32 %v1550, 7
    %v1552 = vsub.s32 %v1549, %v1551
    %v1553 = vrot.slane %v1545, %v1552
    %1554 = vrot.lane.b32.xlu0 %v1553, 32
    %v1555 = vpop.permute.xlu0 %1554
    %s1557 = scalar_lea.vmem [#allocation3], 12
    %1558 = vst.msk [vmem:[%s1557] sm:$0x3] %vm226, %v1555
    %v1559 = vpack.c.bf16 %v1545, %v1545
    %1561 = vrot.lane.b32.xlu0 %v1559, 32
    %v1562 = vpop.permute.xlu0 %1561
    %v1564 = vsel %vm148, %v1562, 0
    %1566 = vmatprep.subr.bf16.mxu0 0
    %1567 = vmatpush1.bf16.msra.mxu0 %v982
    %1568 = vmatprep.subr.bf16.mxu0 0
    %1569 = vmatpush1.bf16.msra.mxu0 %v983
    %1570 = vmatprep.subr.bf16.mxu0 0
    %1571 = vmatpush1.bf16.msra.mxu0 0
    %1572 = vmatprep.subr.bf16.mxu0 0
    %1573 = vmatpush1.bf16.msra.mxu0 0
    %1574 = vmatprep.subr.bf16.mxu0 0
    %1575 = vmatpush1.bf16.msra.mxu0 0
    %1576 = vmatprep.subr.bf16.mxu0 0
    %1577 = vmatpush1.bf16.msra.mxu0 0
    %1578 = vmatprep.subr.bf16.mxu0 0
    %1579 = vmatpush1.bf16.msra.mxu0 0
    %1580 = vmatprep.subr.bf16.mxu0 0
    %1581 = vmatpush1.bf16.msra.mxu0 0
    %1582 = vmatprep.subr.bf16.mxu0 0
    %1583 = vmatpush1.bf16.msra.mxu0 0
    %1584 = vmatprep.subr.bf16.mxu0 0
    %1585 = vmatpush1.bf16.msra.mxu0 0
    %1586 = vmatprep.subr.bf16.mxu0 0
    %1587 = vmatpush1.bf16.msra.mxu0 0
    %1588 = vmatprep.subr.bf16.mxu0 0
    %1589 = vmatpush1.bf16.msra.mxu0 0
    %1590 = vmatprep.subr.bf16.mxu0 0
    %1591 = vmatpush1.bf16.msra.mxu0 0
    %1592 = vmatprep.subr.bf16.mxu0 0
    %1593 = vmatpush1.bf16.msra.mxu0 0
    %1594 = vmatprep.subr.bf16.mxu0 0
    %1595 = vmatpush1.bf16.msra.mxu0 0
    %1596 = vmatprep.subr.bf16.mxu0 0
    %1597 = vmatpush1.bf16.msra.mxu0 0
    %1598 = vmatprep.mubr.bf16.mxu0 0
    %1599 = vmatmul.mubr.bf16.gmra.mrb[0].mxu0 %v1564
    %v1600 = vpop.f32.mrb[0].mxu0
    %v1601 = vadd.f32 0.0, %v1600
    %v1602 = vpop.f32.mrb[0].mxu0
    %v1603 = vpop.f32.mrb[0].mxu0
    %v1604 = vpop.f32.mrb[0].mxu0
    %1605 = vdwg.mxu0
    %v1606 = vadd.f32 %v965, %v1601
    %v1607 = vmul.f32 %v1606, 0.5
    %v1608 = vtanh.pop %v1607
    %v1609 = vmul.f32 %v1608, 0.5
    %v1610 = vadd.f32 %v1609, 0.5
    %v1611 = vtanh.pop %v1606
    %v1612 = vmul.f32 %v1610, %v1539
    %1614 = vrot.lane.b32.xlu0 %v1611, 64
    %v1615 = vpop.permute.xlu0 %1614
    %v1617 = vmul.f32 %v1610, %v1615
    %1619 = vrot.lane.b32.xlu0 %v1617, 32
    %v1620 = vpop.permute.xlu0 %1619
    %v1622 = vadd.f32 %v1612, %v1620
    %v1623 = vtanh.pop %v1622
    %1625 = vrot.lane.b32.xlu0 %v1623, 64
    %v1626 = vpop.permute.xlu0 %1625
    %v1628 = vmul.f32 %v1610, %v1626
    %v1631 = vunpack.c.l.s4 1983009808
    %v1632 = vunpack.c.0.s8 %v1631
    %v1633 = vlaneseq
    %v1634 = vshrl.u32 %v1633, 7
    %v1635 = vsub.s32 %v1632, %v1634
    %v1636 = vrot.slane %v1628, %v1635
    %1637 = vrot.lane.b32.xlu0 %v1636, 32
    %v1638 = vpop.permute.xlu0 %1637
    %s1640 = scalar_lea.vmem [#allocation3], 14
    %1641 = vst.msk [vmem:[%s1640] sm:$0x3] %vm226, %v1638
    %v1642 = vld [vmem:[#allocation3] sm:$0x3]
    %v1643 = vld [vmem:[#allocation3 + $0x2] sm:$0x3]
    %v1644 = vld [vmem:[#allocation3 + $0x4] sm:$0x3]
    %v1645 = vld [vmem:[#allocation3 + $0x6] sm:$0x3]
    %v1646 = vld [vmem:[#allocation3 + $0x8] sm:$0x3]
    %v1647 = vld [vmem:[#allocation3 + $0xa] sm:$0x3]
    %v1648 = vld [vmem:[#allocation3 + $0xc] sm:$0x3]
    %v1649 = vld [vmem:[#allocation3 + $0xe] sm:$0x3]
    %v1658 = vcombine.low %v1642, %v1643
    %v1659 = vcombine.low %v1644, %v1645
    %v1661 = vunpack.c.l.s4 1983009808
    %v1662 = vunpack.c.0.s8 %v1661
    %v1663 = vlaneseq
    %v1664 = vshrl.u32 %v1663, 7
    %v1665 = vsub.s32 %v1662, %v1664
    %v1666 = vrot.slane %v1658, %v1665
    %v1668 = vunpack.c.l.s4 1983009808
    %v1669 = vunpack.c.0.s8 %v1668
    %v1670 = vlaneseq
    %v1671 = vshrl.u32 %v1670, 7
    %v1672 = vsub.s32 %v1669, %v1671
    %v1673 = vrot.slane %v1659, %v1672
    %v1674 = vcombine.low %v1666, %v1673
    %v1675 = vcombine.low %v1646, %v1647
    %v1676 = vcombine.low %v1648, %v1649
    %v1678 = vunpack.c.l.s4 1983009808
    %v1679 = vunpack.c.0.s8 %v1678
    %v1680 = vlaneseq
    %v1681 = vshrl.u32 %v1680, 7
    %v1682 = vsub.s32 %v1679, %v1681
    %v1683 = vrot.slane %v1675, %v1682
    %v1685 = vunpack.c.l.s4 1983009808
    %v1686 = vunpack.c.0.s8 %v1685
    %v1687 = vlaneseq
    %v1688 = vshrl.u32 %v1687, 7
    %v1689 = vsub.s32 %v1686, %v1688
    %v1690 = vrot.slane %v1676, %v1689
    %v1691 = vcombine.low %v1683, %v1690
    %v1694 = vpack.c.bf16 %v1691, %v1674
    %v1695 = vld [vmem:[#allocation5 + $0x38] sm:$0xf]
    %v1696 = vld [vmem:[#allocation5 + $0x3c] sm:$0xf]
    %v1697 = vld [vmem:[#allocation5 + $0x40] sm:$0xf]
    %v1698 = vld [vmem:[#allocation5 + $0x44] sm:$0xf]
    %v1699 = vld [vmem:[#allocation5 + $0x48] sm:$0xf]
    %v1700 = vld [vmem:[#allocation5 + $0x4c] sm:$0xf]
    %v1701 = vlaneseq
    %v1702 = vshrl.u32 %v1701, 7
    %v1703 = vsub.s32 2, %v1702
    %v1704 = vrot.slane %v30, %v1703
    %v1709 = vunpack.c.l.b16 %v1695
    %v1710 = vunpack.c.l.b16 %v1696
    %v1711 = vunpack.c.l.b16 %v1697
    %v1712 = vunpack.c.l.b16 %v1698
    %v1713 = vpack.c.b16 %v1710, %v1709
    %v1714 = vpack.c.b16 %v1712, %v1711
    %v1718 = vsel %vm148, %v1694, 0
    %1720 = vmatprep.subr.bf16.mxu0 0
    %1721 = vmatpush1.bf16.msra.mxu0 %v1713
    %1722 = vmatprep.subr.bf16.mxu0 0
    %1723 = vmatpush1.bf16.msra.mxu0 %v1714
    %1724 = vmatprep.subr.bf16.mxu0 0
    %1725 = vmatpush1.bf16.msra.mxu0 0
    %1726 = vmatprep.subr.bf16.mxu0 0
    %1727 = vmatpush1.bf16.msra.mxu0 0
    %1728 = vmatprep.subr.bf16.mxu0 0
    %1729 = vmatpush1.bf16.msra.mxu0 0
    %1730 = vmatprep.subr.bf16.mxu0 0
    %1731 = vmatpush1.bf16.msra.mxu0 0
    %1732 = vmatprep.subr.bf16.mxu0 0
    %1733 = vmatpush1.bf16.msra.mxu0 0
    %1734 = vmatprep.subr.bf16.mxu0 0
    %1735 = vmatpush1.bf16.msra.mxu0 0
    %1736 = vmatprep.subr.bf16.mxu0 0
    %1737 = vmatpush1.bf16.msra.mxu0 0
    %1738 = vmatprep.subr.bf16.mxu0 0
    %1739 = vmatpush1.bf16.msra.mxu0 0
    %1740 = vmatprep.subr.bf16.mxu0 0
    %1741 = vmatpush1.bf16.msra.mxu0 0
    %1742 = vmatprep.subr.bf16.mxu0 0
    %1743 = vmatpush1.bf16.msra.mxu0 0
    %1744 = vmatprep.subr.bf16.mxu0 0
    %1745 = vmatpush1.bf16.msra.mxu0 0
    %1746 = vmatprep.subr.bf16.mxu0 0
    %1747 = vmatpush1.bf16.msra.mxu0 0
    %1748 = vmatprep.subr.bf16.mxu0 0
    %1749 = vmatpush1.bf16.msra.mxu0 0
    %1750 = vmatprep.subr.bf16.mxu0 0
    %1751 = vmatpush1.bf16.msra.mxu0 0
    %1752 = vmatprep.mubr.bf16.mxu0 0
    %1753 = vmatmul.mubr.bf16.gmra.mrb[0].mxu0 %v1718
    %v1754 = vpop.f32.mrb[0].mxu0
    %v1755 = vadd.f32 %v1704, %v1754
    %v1756 = vpop.f32.mrb[0].mxu0
    %v1757 = vpop.f32.mrb[0].mxu0
    %v1758 = vadd.f32 %v1704, %v1757
    %v1759 = vpop.f32.mrb[0].mxu0
    %1760 = vdwg.mxu0
    %v1763 = vcombine.high %v1755, %v1755
    %v1765 = vunpack.c.l.s4 1983009808
    %v1766 = vunpack.c.0.s8 %v1765
    %v1767 = vlaneseq
    %v1768 = vshrl.u32 %v1767, 7
    %v1769 = vsub.s32 %v1766, %v1768
    %v1770 = vrot.slane %v1755, %v1769
    %v1772 = vunpack.c.l.s4 1983009808
    %v1773 = vunpack.c.0.s8 %v1772
    %v1774 = vlaneseq
    %v1775 = vshrl.u32 %v1774, 7
    %v1776 = vsub.s32 %v1773, %v1775
    %v1777 = vrot.slane %v1763, %v1776
    %v1778 = vcombine.high %v1770, %v1770
    %v1779 = vcombine.high %v1777, %v1777
    %v1780 = vcombine.high %v1758, %v1758
    %v1782 = vunpack.c.l.s4 1983009808
    %v1783 = vunpack.c.0.s8 %v1782
    %v1784 = vlaneseq
    %v1785 = vshrl.u32 %v1784, 7
    %v1786 = vsub.s32 %v1783, %v1785
    %v1787 = vrot.slane %v1758, %v1786
    %v1789 = vunpack.c.l.s4 1983009808
    %v1790 = vunpack.c.0.s8 %v1789
    %v1791 = vlaneseq
    %v1792 = vshrl.u32 %v1791, 7
    %v1793 = vsub.s32 %v1790, %v1792
    %v1794 = vrot.slane %v1780, %v1793
    %v1795 = vcombine.high %v1787, %v1787
    %v1796 = vcombine.high %v1794, %v1794
    %v1807 = vunpack.c.l.b16 %v1699
    %v1808 = vunpack.c.l.b16 %v1700
    %v1809 = vpack.c.b16 %v1808, %v1807
    %vm1811 = vcmask 130048
    %v1812 = vsel %vm1811, 0, 0
    %1814 = vmatprep.subr.bf16.mxu0 0
    %1815 = vmatpush1.bf16.msra.mxu0 %v1809
    %1816 = vmatprep.subr.bf16.mxu0 0
    %1817 = vmatpush1.bf16.msra.mxu0 0
    %1818 = vmatprep.subr.bf16.mxu0 0
    %1819 = vmatpush1.bf16.msra.mxu0 0
    %1820 = vmatprep.subr.bf16.mxu0 0
    %1821 = vmatpush1.bf16.msra.mxu0 0
    %1822 = vmatprep.subr.bf16.mxu0 0
    %1823 = vmatpush1.bf16.msra.mxu0 0
    %1824 = vmatprep.subr.bf16.mxu0 0
    %1825 = vmatpush1.bf16.msra.mxu0 0
    %1826 = vmatprep.subr.bf16.mxu0 0
    %1827 = vmatpush1.bf16.msra.mxu0 0
    %1828 = vmatprep.subr.bf16.mxu0 0
    %1829 = vmatpush1.bf16.msra.mxu0 0
    %1830 = vmatprep.subr.bf16.mxu0 0
    %1831 = vmatpush1.bf16.msra.mxu0 0
    %1832 = vmatprep.subr.bf16.mxu0 0
    %1833 = vmatpush1.bf16.msra.mxu0 0
    %1834 = vmatprep.subr.bf16.mxu0 0
    %1835 = vmatpush1.bf16.msra.mxu0 0
    %1836 = vmatprep.subr.bf16.mxu0 0
    %1837 = vmatpush1.bf16.msra.mxu0 0
    %1838 = vmatprep.subr.bf16.mxu0 0
    %1839 = vmatpush1.bf16.msra.mxu0 0
    %1840 = vmatprep.subr.bf16.mxu0 0
    %1841 = vmatpush1.bf16.msra.mxu0 0
    %1842 = vmatprep.subr.bf16.mxu0 0
    %1843 = vmatpush1.bf16.msra.mxu0 0
    %1844 = vmatprep.subr.bf16.mxu0 0
    %1845 = vmatpush1.bf16.msra.mxu0 0
    %1846 = vmatprep.mubr.bf16.mxu0 0
    %1847 = vmatmul.mubr.bf16.gmra.mrb[0].mxu0 %v1812
    %v1848 = vpop.f32.mrb[0].mxu0
    %v1849 = vadd.f32 0.0, %v1848
    %v1850 = vpop.f32.mrb[0].mxu0
    %v1851 = vpop.f32.mrb[0].mxu0
    %v1852 = vpop.f32.mrb[0].mxu0
    %1853 = vdwg.mxu0
    %v1854 = vadd.f32 %v1770, %v1849
    %v1855 = vmul.f32 %v1854, 0.5
    %v1856 = vtanh.pop %v1855
    %v1857 = vmul.f32 %v1856, 0.5
    %v1858 = vadd.f32 %v1857, 0.5
    %v1859 = vtanh.pop %v1854
    %v1860 = vmul.f32 %v1858, 0.0
    %1862 = vrot.lane.b32.xlu0 %v1859, 96
    %v1863 = vpop.permute.xlu0 %1862
    %v1865 = vmul.f32 %v1858, %v1863
    %1867 = vrot.lane.b32.xlu0 %v1865, 16
    %v1868 = vpop.permute.xlu0 %1867
    %v1870 = vadd.f32 %v1860, %v1868
    %v1871 = vtanh.pop %v1870
    %1873 = vrot.lane.b32.xlu0 %v1871, 32
    %v1874 = vpop.permute.xlu0 %1873
    %v1876 = vmul.f32 %v1858, %v1874
    %v1879 = vunpack.c.l.s4 1983009808
    %v1880 = vunpack.c.0.s8 %v1879
    %v1881 = vlaneseq
    %v1882 = vshrl.u32 %v1881, 7
    %v1883 = vsub.s32 %v1880, %v1882
    %v1884 = vrot.slane %v1876, %v1883
    %1885 = vrot.lane.b32.xlu0 %v1884, 80
    %v1886 = vpop.permute.xlu0 %1885
    %vm1888 = vcmask 123904
    %1889 = vst.msk [vmem:[#allocation4] sm:$0x3] %vm1888, %v1886
    %v1890 = vpack.c.bf16 %v1876, %v1876
    %1892 = vrot.lane.b32.xlu0 %v1890, 80
    %v1893 = vpop.permute.xlu0 %1892
    %v1895 = vsel %vm1811, %v1893, 0
    %1897 = vmatprep.subr.bf16.mxu0 0
    %1898 = vmatpush1.bf16.msra.mxu0 %v1809
    %1899 = vmatprep.subr.bf16.mxu0 0
    %1900 = vmatpush1.bf16.msra.mxu0 0
    %1901 = vmatprep.subr.bf16.mxu0 0
    %1902 = vmatpush1.bf16.msra.mxu0 0
    %1903 = vmatprep.subr.bf16.mxu0 0
    %1904 = vmatpush1.bf16.msra.mxu0 0
    %1905 = vmatprep.subr.bf16.mxu0 0
    %1906 = vmatpush1.bf16.msra.mxu0 0
    %1907 = vmatprep.subr.bf16.mxu0 0
    %1908 = vmatpush1.bf16.msra.mxu0 0
    %1909 = vmatprep.subr.bf16.mxu0 0
    %1910 = vmatpush1.bf16.msra.mxu0 0
    %1911 = vmatprep.subr.bf16.mxu0 0
    %1912 = vmatpush1.bf16.msra.mxu0 0
    %1913 = vmatprep.subr.bf16.mxu0 0
    %1914 = vmatpush1.bf16.msra.mxu0 0
    %1915 = vmatprep.subr.bf16.mxu0 0
    %1916 = vmatpush1.bf16.msra.mxu0 0
    %1917 = vmatprep.subr.bf16.mxu0 0
    %1918 = vmatpush1.bf16.msra.mxu0 0
    %1919 = vmatprep.subr.bf16.mxu0 0
    %1920 = vmatpush1.bf16.msra.mxu0 0
    %1921 = vmatprep.subr.bf16.mxu0 0
    %1922 = vmatpush1.bf16.msra.mxu0 0
    %1923 = vmatprep.subr.bf16.mxu0 0
    %1924 = vmatpush1.bf16.msra.mxu0 0
    %1925 = vmatprep.subr.bf16.mxu0 0
    %1926 = vmatpush1.bf16.msra.mxu0 0
    %1927 = vmatprep.subr.bf16.mxu0 0
    %1928 = vmatpush1.bf16.msra.mxu0 0
    %1929 = vmatprep.mubr.bf16.mxu0 0
    %1930 = vmatmul.mubr.bf16.gmra.mrb[0].mxu0 %v1895
    %v1931 = vpop.f32.mrb[0].mxu0
    %v1932 = vadd.f32 0.0, %v1931
    %v1933 = vpop.f32.mrb[0].mxu0
    %v1934 = vpop.f32.mrb[0].mxu0
    %v1935 = vpop.f32.mrb[0].mxu0
    %1936 = vdwg.mxu0
    %v1937 = vadd.f32 %v1778, %v1932
    %v1938 = vmul.f32 %v1937, 0.5
    %v1939 = vtanh.pop %v1938
    %v1940 = vmul.f32 %v1939, 0.5
    %v1941 = vadd.f32 %v1940, 0.5
    %v1942 = vtanh.pop %v1937
    %v1943 = vmul.f32 %v1941, %v1870
    %1945 = vrot.lane.b32.xlu0 %v1942, 96
    %v1946 = vpop.permute.xlu0 %1945
    %v1948 = vmul.f32 %v1941, %v1946
    %1950 = vrot.lane.b32.xlu0 %v1948, 16
    %v1951 = vpop.permute.xlu0 %1950
    %v1953 = vadd.f32 %v1943, %v1951
    %v1954 = vtanh.pop %v1953
    %1956 = vrot.lane.b32.xlu0 %v1954, 32
    %v1957 = vpop.permute.xlu0 %1956
    %v1959 = vmul.f32 %v1941, %v1957
    %v1962 = vunpack.c.l.s4 1983009808
    %v1963 = vunpack.c.0.s8 %v1962
    %v1964 = vlaneseq
    %v1965 = vshrl.u32 %v1964, 7
    %v1966 = vsub.s32 %v1963, %v1965
    %v1967 = vrot.slane %v1959, %v1966
    %1968 = vrot.lane.b32.xlu0 %v1967, 80
    %v1969 = vpop.permute.xlu0 %1968
    %s1971 = scalar_lea.vmem [#allocation4], 2
    %1972 = vst.msk [vmem:[%s1971] sm:$0x3] %vm1888, %v1969
    %v1973 = vpack.c.bf16 %v1959, %v1959
    %1975 = vrot.lane.b32.xlu0 %v1973, 80
    %v1976 = vpop.permute.xlu0 %1975
    %v1978 = vsel %vm1811, %v1976, 0
    %1980 = vmatprep.subr.bf16.mxu0 0
    %1981 = vmatpush1.bf16.msra.mxu0 %v1809
    %1982 = vmatprep.subr.bf16.mxu0 0
    %1983 = vmatpush1.bf16.msra.mxu0 0
    %1984 = vmatprep.subr.bf16.mxu0 0
    %1985 = vmatpush1.bf16.msra.mxu0 0
    %1986 = vmatprep.subr.bf16.mxu0 0
    %1987 = vmatpush1.bf16.msra.mxu0 0
    %1988 = vmatprep.subr.bf16.mxu0 0
    %1989 = vmatpush1.bf16.msra.mxu0 0
    %1990 = vmatprep.subr.bf16.mxu0 0
    %1991 = vmatpush1.bf16.msra.mxu0 0
    %1992 = vmatprep.subr.bf16.mxu0 0
    %1993 = vmatpush1.bf16.msra.mxu0 0
    %1994 = vmatprep.subr.bf16.mxu0 0
    %1995 = vmatpush1.bf16.msra.mxu0 0
    %1996 = vmatprep.subr.bf16.mxu0 0
    %1997 = vmatpush1.bf16.msra.mxu0 0
    %1998 = vmatprep.subr.bf16.mxu0 0
    %1999 = vmatpush1.bf16.msra.mxu0 0
    %2000 = vmatprep.subr.bf16.mxu0 0
    %2001 = vmatpush1.bf16.msra.mxu0 0
    %2002 = vmatprep.subr.bf16.mxu0 0
    %2003 = vmatpush1.bf16.msra.mxu0 0
    %2004 = vmatprep.subr.bf16.mxu0 0
    %2005 = vmatpush1.bf16.msra.mxu0 0
    %2006 = vmatprep.subr.bf16.mxu0 0
    %2007 = vmatpush1.bf16.msra.mxu0 0
    %2008 = vmatprep.subr.bf16.mxu0 0
    %2009 = vmatpush1.bf16.msra.mxu0 0
    %2010 = vmatprep.subr.bf16.mxu0 0
    %2011 = vmatpush1.bf16.msra.mxu0 0
    %2012 = vmatprep.mubr.bf16.mxu0 0
    %2013 = vmatmul.mubr.bf16.gmra.mrb[0].mxu0 %v1978
    %v2014 = vpop.f32.mrb[0].mxu0
    %v2015 = vadd.f32 0.0, %v2014
    %v2016 = vpop.f32.mrb[0].mxu0
    %v2017 = vpop.f32.mrb[0].mxu0
    %v2018 = vpop.f32.mrb[0].mxu0
    %2019 = vdwg.mxu0
    %v2020 = vadd.f32 %v1777, %v2015
    %v2021 = vmul.f32 %v2020, 0.5
    %v2022 = vtanh.pop %v2021
    %v2023 = vmul.f32 %v2022, 0.5
    %v2024 = vadd.f32 %v2023, 0.5
    %v2025 = vtanh.pop %v2020
    %v2026 = vmul.f32 %v2024, %v1953
    %2028 = vrot.lane.b32.xlu0 %v2025, 96
    %v2029 = vpop.permute.xlu0 %2028
    %v2031 = vmul.f32 %v2024, %v2029
    %2033 = vrot.lane.b32.xlu0 %v2031, 16
    %v2034 = vpop.permute.xlu0 %2033
    %v2036 = vadd.f32 %v2026, %v2034
    %v2037 = vtanh.pop %v2036
    %2039 = vrot.lane.b32.xlu0 %v2037, 32
    %v2040 = vpop.permute.xlu0 %2039
    %v2042 = vmul.f32 %v2024, %v2040
    %v2045 = vunpack.c.l.s4 1983009808
    %v2046 = vunpack.c.0.s8 %v2045
    %v2047 = vlaneseq
    %v2048 = vshrl.u32 %v2047, 7
    %v2049 = vsub.s32 %v2046, %v2048
    %v2050 = vrot.slane %v2042, %v2049
    %2051 = vrot.lane.b32.xlu0 %v2050, 80
    %v2052 = vpop.permute.xlu0 %2051
    %s2054 = scalar_lea.vmem [#allocation4], 4
    %2055 = vst.msk [vmem:[%s2054] sm:$0x3] %vm1888, %v2052
    %v2056 = vpack.c.bf16 %v2042, %v2042
    %2058 = vrot.lane.b32.xlu0 %v2056, 80
    %v2059 = vpop.permute.xlu0 %2058
    %v2061 = vsel %vm1811, %v2059, 0
    %2063 = vmatprep.subr.bf16.mxu0 0
    %2064 = vmatpush1.bf16.msra.mxu0 %v1809
    %2065 = vmatprep.subr.bf16.mxu0 0
    %2066 = vmatpush1.bf16.msra.mxu0 0
    %2067 = vmatprep.subr.bf16.mxu0 0
    %2068 = vmatpush1.bf16.msra.mxu0 0
    %2069 = vmatprep.subr.bf16.mxu0 0
    %2070 = vmatpush1.bf16.msra.mxu0 0
    %2071 = vmatprep.subr.bf16.mxu0 0
    %2072 = vmatpush1.bf16.msra.mxu0 0
    %2073 = vmatprep.subr.bf16.mxu0 0
    %2074 = vmatpush1.bf16.msra.mxu0 0
    %2075 = vmatprep.subr.bf16.mxu0 0
    %2076 = vmatpush1.bf16.msra.mxu0 0
    %2077 = vmatprep.subr.bf16.mxu0 0
    %2078 = vmatpush1.bf16.msra.mxu0 0
    %2079 = vmatprep.subr.bf16.mxu0 0
    %2080 = vmatpush1.bf16.msra.mxu0 0
    %2081 = vmatprep.subr.bf16.mxu0 0
    %2082 = vmatpush1.bf16.msra.mxu0 0
    %2083 = vmatprep.subr.bf16.mxu0 0
    %2084 = vmatpush1.bf16.msra.mxu0 0
    %2085 = vmatprep.subr.bf16.mxu0 0
    %2086 = vmatpush1.bf16.msra.mxu0 0
    %2087 = vmatprep.subr.bf16.mxu0 0
    %2088 = vmatpush1.bf16.msra.mxu0 0
    %2089 = vmatprep.subr.bf16.mxu0 0
    %2090 = vmatpush1.bf16.msra.mxu0 0
    %2091 = vmatprep.subr.bf16.mxu0 0
    %2092 = vmatpush1.bf16.msra.mxu0 0
    %2093 = vmatprep.subr.bf16.mxu0 0
    %2094 = vmatpush1.bf16.msra.mxu0 0
    %2095 = vmatprep.mubr.bf16.mxu0 0
    %2096 = vmatmul.mubr.bf16.gmra.mrb[0].mxu0 %v2061
    %v2097 = vpop.f32.mrb[0].mxu0
    %v2098 = vadd.f32 0.0, %v2097
    %v2099 = vpop.f32.mrb[0].mxu0
    %v2100 = vpop.f32.mrb[0].mxu0
    %v2101 = vpop.f32.mrb[0].mxu0
    %2102 = vdwg.mxu0
    %v2103 = vadd.f32 %v1779, %v2098
    %v2104 = vmul.f32 %v2103, 0.5
    %v2105 = vtanh.pop %v2104
    %v2106 = vmul.f32 %v2105, 0.5
    %v2107 = vadd.f32 %v2106, 0.5
    %v2108 = vtanh.pop %v2103
    %v2109 = vmul.f32 %v2107, %v2036
    %2111 = vrot.lane.b32.xlu0 %v2108, 96
    %v2112 = vpop.permute.xlu0 %2111
    %v2114 = vmul.f32 %v2107, %v2112
    %2116 = vrot.lane.b32.xlu0 %v2114, 16
    %v2117 = vpop.permute.xlu0 %2116
    %v2119 = vadd.f32 %v2109, %v2117
    %v2120 = vtanh.pop %v2119
    %2122 = vrot.lane.b32.xlu0 %v2120, 32
    %v2123 = vpop.permute.xlu0 %2122
    %v2125 = vmul.f32 %v2107, %v2123
    %v2128 = vunpack.c.l.s4 1983009808
    %v2129 = vunpack.c.0.s8 %v2128
    %v2130 = vlaneseq
    %v2131 = vshrl.u32 %v2130, 7
    %v2132 = vsub.s32 %v2129, %v2131
    %v2133 = vrot.slane %v2125, %v2132
    %2134 = vrot.lane.b32.xlu0 %v2133, 80
    %v2135 = vpop.permute.xlu0 %2134
    %s2137 = scalar_lea.vmem [#allocation4], 6
    %2138 = vst.msk [vmem:[%s2137] sm:$0x3] %vm1888, %v2135
    %v2139 = vpack.c.bf16 %v2125, %v2125
    %2141 = vrot.lane.b32.xlu0 %v2139, 80
    %v2142 = vpop.permute.xlu0 %2141
    %v2144 = vsel %vm1811, %v2142, 0
    %2146 = vmatprep.subr.bf16.mxu0 0
    %2147 = vmatpush1.bf16.msra.mxu0 %v1809
    %2148 = vmatprep.subr.bf16.mxu0 0
    %2149 = vmatpush1.bf16.msra.mxu0 0
    %2150 = vmatprep.subr.bf16.mxu0 0
    %2151 = vmatpush1.bf16.msra.mxu0 0
    %2152 = vmatprep.subr.bf16.mxu0 0
    %2153 = vmatpush1.bf16.msra.mxu0 0
    %2154 = vmatprep.subr.bf16.mxu0 0
    %2155 = vmatpush1.bf16.msra.mxu0 0
    %2156 = vmatprep.subr.bf16.mxu0 0
    %2157 = vmatpush1.bf16.msra.mxu0 0
    %2158 = vmatprep.subr.bf16.mxu0 0
    %2159 = vmatpush1.bf16.msra.mxu0 0
    %2160 = vmatprep.subr.bf16.mxu0 0
    %2161 = vmatpush1.bf16.msra.mxu0 0
    %2162 = vmatprep.subr.bf16.mxu0 0
    %2163 = vmatpush1.bf16.msra.mxu0 0
    %2164 = vmatprep.subr.bf16.mxu0 0
    %2165 = vmatpush1.bf16.msra.mxu0 0
    %2166 = vmatprep.subr.bf16.mxu0 0
    %2167 = vmatpush1.bf16.msra.mxu0 0
    %2168 = vmatprep.subr.bf16.mxu0 0
    %2169 = vmatpush1.bf16.msra.mxu0 0
    %2170 = vmatprep.subr.bf16.mxu0 0
    %2171 = vmatpush1.bf16.msra.mxu0 0
    %2172 = vmatprep.subr.bf16.mxu0 0
    %2173 = vmatpush1.bf16.msra.mxu0 0
    %2174 = vmatprep.subr.bf16.mxu0 0
    %2175 = vmatpush1.bf16.msra.mxu0 0
    %2176 = vmatprep.subr.bf16.mxu0 0
    %2177 = vmatpush1.bf16.msra.mxu0 0
    %2178 = vmatprep.mubr.bf16.mxu0 0
    %2179 = vmatmul.mubr.bf16.gmra.mrb[0].mxu0 %v2144
    %v2180 = vpop.f32.mrb[0].mxu0
    %v2181 = vadd.f32 0.0, %v2180
    %v2182 = vpop.f32.mrb[0].mxu0
    %v2183 = vpop.f32.mrb[0].mxu0
    %v2184 = vpop.f32.mrb[0].mxu0
    %2185 = vdwg.mxu0
    %v2186 = vadd.f32 %v1787, %v2181
    %v2187 = vmul.f32 %v2186, 0.5
    %v2188 = vtanh.pop %v2187
    %v2189 = vmul.f32 %v2188, 0.5
    %v2190 = vadd.f32 %v2189, 0.5
    %v2191 = vtanh.pop %v2186
    %v2192 = vmul.f32 %v2190, %v2119
    %2194 = vrot.lane.b32.xlu0 %v2191, 96
    %v2195 = vpop.permute.xlu0 %2194
    %v2197 = vmul.f32 %v2190, %v2195
    %2199 = vrot.lane.b32.xlu0 %v2197, 16
    %v2200 = vpop.permute.xlu0 %2199
    %v2202 = vadd.f32 %v2192, %v2200
    %v2203 = vtanh.pop %v2202
    %2205 = vrot.lane.b32.xlu0 %v2203, 32
    %v2206 = vpop.permute.xlu0 %2205
    %v2208 = vmul.f32 %v2190, %v2206
    %v2211 = vunpack.c.l.s4 1983009808
    %v2212 = vunpack.c.0.s8 %v2211
    %v2213 = vlaneseq
    %v2214 = vshrl.u32 %v2213, 7
    %v2215 = vsub.s32 %v2212, %v2214
    %v2216 = vrot.slane %v2208, %v2215
    %2217 = vrot.lane.b32.xlu0 %v2216, 80
    %v2218 = vpop.permute.xlu0 %2217
    %s2220 = scalar_lea.vmem [#allocation4], 8
    %2221 = vst.msk [vmem:[%s2220] sm:$0x3] %vm1888, %v2218
    %v2222 = vpack.c.bf16 %v2208, %v2208
    %2224 = vrot.lane.b32.xlu0 %v2222, 80
    %v2225 = vpop.permute.xlu0 %2224
    %v2227 = vsel %vm1811, %v2225, 0
    %2229 = vmatprep.subr.bf16.mxu0 0
    %2230 = vmatpush1.bf16.msra.mxu0 %v1809
    %2231 = vmatprep.subr.bf16.mxu0 0
    %2232 = vmatpush1.bf16.msra.mxu0 0
    %2233 = vmatprep.subr.bf16.mxu0 0
    %2234 = vmatpush1.bf16.msra.mxu0 0
    %2235 = vmatprep.subr.bf16.mxu0 0
    %2236 = vmatpush1.bf16.msra.mxu0 0
    %2237 = vmatprep.subr.bf16.mxu0 0
    %2238 = vmatpush1.bf16.msra.mxu0 0
    %2239 = vmatprep.subr.bf16.mxu0 0
    %2240 = vmatpush1.bf16.msra.mxu0 0
    %2241 = vmatprep.subr.bf16.mxu0 0
    %2242 = vmatpush1.bf16.msra.mxu0 0
    %2243 = vmatprep.subr.bf16.mxu0 0
    %2244 = vmatpush1.bf16.msra.mxu0 0
    %2245 = vmatprep.subr.bf16.mxu0 0
    %2246 = vmatpush1.bf16.msra.mxu0 0
    %2247 = vmatprep.subr.bf16.mxu0 0
    %2248 = vmatpush1.bf16.msra.mxu0 0
    %2249 = vmatprep.subr.bf16.mxu0 0
    %2250 = vmatpush1.bf16.msra.mxu0 0
    %2251 = vmatprep.subr.bf16.mxu0 0
    %2252 = vmatpush1.bf16.msra.mxu0 0
    %2253 = vmatprep.subr.bf16.mxu0 0
    %2254 = vmatpush1.bf16.msra.mxu0 0
    %2255 = vmatprep.subr.bf16.mxu0 0
    %2256 = vmatpush1.bf16.msra.mxu0 0
    %2257 = vmatprep.subr.bf16.mxu0 0
    %2258 = vmatpush1.bf16.msra.mxu0 0
    %2259 = vmatprep.subr.bf16.mxu0 0
    %2260 = vmatpush1.bf16.msra.mxu0 0
    %2261 = vmatprep.mubr.bf16.mxu0 0
    %2262 = vmatmul.mubr.bf16.gmra.mrb[0].mxu0 %v2227
    %v2263 = vpop.f32.mrb[0].mxu0
    %v2264 = vadd.f32 0.0, %v2263
    %v2265 = vpop.f32.mrb[0].mxu0
    %v2266 = vpop.f32.mrb[0].mxu0
    %v2267 = vpop.f32.mrb[0].mxu0
    %2268 = vdwg.mxu0
    %v2269 = vadd.f32 %v1795, %v2264
    %v2270 = vmul.f32 %v2269, 0.5
    %v2271 = vtanh.pop %v2270
    %v2272 = vmul.f32 %v2271, 0.5
    %v2273 = vadd.f32 %v2272, 0.5
    %v2274 = vtanh.pop %v2269
    %v2275 = vmul.f32 %v2273, %v2202
    %2277 = vrot.lane.b32.xlu0 %v2274, 96
    %v2278 = vpop.permute.xlu0 %2277
    %v2280 = vmul.f32 %v2273, %v2278
    %2282 = vrot.lane.b32.xlu0 %v2280, 16
    %v2283 = vpop.permute.xlu0 %2282
    %v2285 = vadd.f32 %v2275, %v2283
    %v2286 = vtanh.pop %v2285
    %2288 = vrot.lane.b32.xlu0 %v2286, 32
    %v2289 = vpop.permute.xlu0 %2288
    %v2291 = vmul.f32 %v2273, %v2289
    %v2294 = vunpack.c.l.s4 1983009808
    %v2295 = vunpack.c.0.s8 %v2294
    %v2296 = vlaneseq
    %v2297 = vshrl.u32 %v2296, 7
    %v2298 = vsub.s32 %v2295, %v2297
    %v2299 = vrot.slane %v2291, %v2298
    %2300 = vrot.lane.b32.xlu0 %v2299, 80
    %v2301 = vpop.permute.xlu0 %2300
    %s2303 = scalar_lea.vmem [#allocation4], 10
    %2304 = vst.msk [vmem:[%s2303] sm:$0x3] %vm1888, %v2301
    %v2305 = vpack.c.bf16 %v2291, %v2291
    %2307 = vrot.lane.b32.xlu0 %v2305, 80
    %v2308 = vpop.permute.xlu0 %2307
    %v2310 = vsel %vm1811, %v2308, 0
    %2312 = vmatprep.subr.bf16.mxu0 0
    %2313 = vmatpush1.bf16.msra.mxu0 %v1809
    %2314 = vmatprep.subr.bf16.mxu0 0
    %2315 = vmatpush1.bf16.msra.mxu0 0
    %2316 = vmatprep.subr.bf16.mxu0 0
    %2317 = vmatpush1.bf16.msra.mxu0 0
    %2318 = vmatprep.subr.bf16.mxu0 0
    %2319 = vmatpush1.bf16.msra.mxu0 0
    %2320 = vmatprep.subr.bf16.mxu0 0
    %2321 = vmatpush1.bf16.msra.mxu0 0
    %2322 = vmatprep.subr.bf16.mxu0 0
    %2323 = vmatpush1.bf16.msra.mxu0 0
    %2324 = vmatprep.subr.bf16.mxu0 0
    %2325 = vmatpush1.bf16.msra.mxu0 0
    %2326 = vmatprep.subr.bf16.mxu0 0
    %2327 = vmatpush1.bf16.msra.mxu0 0
    %2328 = vmatprep.subr.bf16.mxu0 0
    %2329 = vmatpush1.bf16.msra.mxu0 0
    %2330 = vmatprep.subr.bf16.mxu0 0
    %2331 = vmatpush1.bf16.msra.mxu0 0
    %2332 = vmatprep.subr.bf16.mxu0 0
    %2333 = vmatpush1.bf16.msra.mxu0 0
    %2334 = vmatprep.subr.bf16.mxu0 0
    %2335 = vmatpush1.bf16.msra.mxu0 0
    %2336 = vmatprep.subr.bf16.mxu0 0
    %2337 = vmatpush1.bf16.msra.mxu0 0
    %2338 = vmatprep.subr.bf16.mxu0 0
    %2339 = vmatpush1.bf16.msra.mxu0 0
    %2340 = vmatprep.subr.bf16.mxu0 0
    %2341 = vmatpush1.bf16.msra.mxu0 0
    %2342 = vmatprep.subr.bf16.mxu0 0
    %2343 = vmatpush1.bf16.msra.mxu0 0
    %2344 = vmatprep.mubr.bf16.mxu0 0
    %2345 = vmatmul.mubr.bf16.gmra.mrb[0].mxu0 %v2310
    %v2346 = vpop.f32.mrb[0].mxu0
    %v2347 = vadd.f32 0.0, %v2346
    %v2348 = vpop.f32.mrb[0].mxu0
    %v2349 = vpop.f32.mrb[0].mxu0
    %v2350 = vpop.f32.mrb[0].mxu0
    %2351 = vdwg.mxu0
    %v2352 = vadd.f32 %v1794, %v2347
    %v2353 = vmul.f32 %v2352, 0.5
    %v2354 = vtanh.pop %v2353
    %v2355 = vmul.f32 %v2354, 0.5
    %v2356 = vadd.f32 %v2355, 0.5
    %v2357 = vtanh.pop %v2352
    %v2358 = vmul.f32 %v2356, %v2285
    %2360 = vrot.lane.b32.xlu0 %v2357, 96
    %v2361 = vpop.permute.xlu0 %2360
    %v2363 = vmul.f32 %v2356, %v2361
    %2365 = vrot.lane.b32.xlu0 %v2363, 16
    %v2366 = vpop.permute.xlu0 %2365
    %v2368 = vadd.f32 %v2358, %v2366
    %v2369 = vtanh.pop %v2368
    %2371 = vrot.lane.b32.xlu0 %v2369, 32
    %v2372 = vpop.permute.xlu0 %2371
    %v2374 = vmul.f32 %v2356, %v2372
    %v2377 = vunpack.c.l.s4 1983009808
    %v2378 = vunpack.c.0.s8 %v2377
    %v2379 = vlaneseq
    %v2380 = vshrl.u32 %v2379, 7
    %v2381 = vsub.s32 %v2378, %v2380
    %v2382 = vrot.slane %v2374, %v2381
    %2383 = vrot.lane.b32.xlu0 %v2382, 80
    %v2384 = vpop.permute.xlu0 %2383
    %s2386 = scalar_lea.vmem [#allocation4], 12
    %2387 = vst.msk [vmem:[%s2386] sm:$0x3] %vm1888, %v2384
    %v2388 = vpack.c.bf16 %v2374, %v2374
    %2390 = vrot.lane.b32.xlu0 %v2388, 80
    %v2391 = vpop.permute.xlu0 %2390
    %v2393 = vsel %vm1811, %v2391, 0
    %2395 = vmatprep.subr.bf16.mxu0 0
    %2396 = vmatpush1.bf16.msra.mxu0 %v1809
    %2397 = vmatprep.subr.bf16.mxu0 0
    %2398 = vmatpush1.bf16.msra.mxu0 0
    %2399 = vmatprep.subr.bf16.mxu0 0
    %2400 = vmatpush1.bf16.msra.mxu0 0
    %2401 = vmatprep.subr.bf16.mxu0 0
    %2402 = vmatpush1.bf16.msra.mxu0 0
    %2403 = vmatprep.subr.bf16.mxu0 0
    %2404 = vmatpush1.bf16.msra.mxu0 0
    %2405 = vmatprep.subr.bf16.mxu0 0
    %2406 = vmatpush1.bf16.msra.mxu0 0
    %2407 = vmatprep.subr.bf16.mxu0 0
    %2408 = vmatpush1.bf16.msra.mxu0 0
    %2409 = vmatprep.subr.bf16.mxu0 0
    %2410 = vmatpush1.bf16.msra.mxu0 0
    %2411 = vmatprep.subr.bf16.mxu0 0
    %2412 = vmatpush1.bf16.msra.mxu0 0
    %2413 = vmatprep.subr.bf16.mxu0 0
    %2414 = vmatpush1.bf16.msra.mxu0 0
    %2415 = vmatprep.subr.bf16.mxu0 0
    %2416 = vmatpush1.bf16.msra.mxu0 0
    %2417 = vmatprep.subr.bf16.mxu0 0
    %2418 = vmatpush1.bf16.msra.mxu0 0
    %2419 = vmatprep.subr.bf16.mxu0 0
    %2420 = vmatpush1.bf16.msra.mxu0 0
    %2421 = vmatprep.subr.bf16.mxu0 0
    %2422 = vmatpush1.bf16.msra.mxu0 0
    %2423 = vmatprep.subr.bf16.mxu0 0
    %2424 = vmatpush1.bf16.msra.mxu0 0
    %2425 = vmatprep.subr.bf16.mxu0 0
    %2426 = vmatpush1.bf16.msra.mxu0 0
    %2427 = vmatprep.mubr.bf16.mxu0 0
    %2428 = vmatmul.mubr.bf16.gmra.mrb[0].mxu0 %v2393
    %v2429 = vpop.f32.mrb[0].mxu0
    %v2430 = vadd.f32 0.0, %v2429
    %v2431 = vpop.f32.mrb[0].mxu0
    %v2432 = vpop.f32.mrb[0].mxu0
    %v2433 = vpop.f32.mrb[0].mxu0
    %2434 = vdwg.mxu0
    %v2435 = vadd.f32 %v1796, %v2430
    %v2436 = vmul.f32 %v2435, 0.5
    %v2437 = vtanh.pop %v2436
    %v2438 = vmul.f32 %v2437, 0.5
    %v2439 = vadd.f32 %v2438, 0.5
    %v2440 = vtanh.pop %v2435
    %v2441 = vmul.f32 %v2439, %v2368
    %2443 = vrot.lane.b32.xlu0 %v2440, 96
    %v2444 = vpop.permute.xlu0 %2443
    %v2446 = vmul.f32 %v2439, %v2444
    %2448 = vrot.lane.b32.xlu0 %v2446, 16
    %v2449 = vpop.permute.xlu0 %2448
    %v2451 = vadd.f32 %v2441, %v2449
    %v2452 = vtanh.pop %v2451
    %2454 = vrot.lane.b32.xlu0 %v2452, 32
    %v2455 = vpop.permute.xlu0 %2454
    %v2457 = vmul.f32 %v2439, %v2455
    %v2460 = vunpack.c.l.s4 1983009808
    %v2461 = vunpack.c.0.s8 %v2460
    %v2462 = vlaneseq
    %v2463 = vshrl.u32 %v2462, 7
    %v2464 = vsub.s32 %v2461, %v2463
    %v2465 = vrot.slane %v2457, %v2464
    %2466 = vrot.lane.b32.xlu0 %v2465, 80
    %v2467 = vpop.permute.xlu0 %2466
    %s2469 = scalar_lea.vmem [#allocation4], 14
    %2470 = vst.msk [vmem:[%s2469] sm:$0x3] %vm1888, %v2467
    %v2471 = vld [vmem:[#allocation4] sm:$0x3]
    %v2472 = vld [vmem:[#allocation4 + $0x2] sm:$0x3]
    %v2473 = vld [vmem:[#allocation4 + $0x4] sm:$0x3]
    %v2474 = vld [vmem:[#allocation4 + $0x6] sm:$0x3]
    %v2475 = vld [vmem:[#allocation4 + $0x8] sm:$0x3]
    %v2476 = vld [vmem:[#allocation4 + $0xa] sm:$0x3]
    %v2477 = vld [vmem:[#allocation4 + $0xc] sm:$0x3]
    %v2478 = vld [vmem:[#allocation4 + $0xe] sm:$0x3]
    %v2487 = vcombine.low %v2471, %v2472
    %v2488 = vcombine.low %v2473, %v2474
    %v2490 = vunpack.c.l.s4 1983009808
    %v2491 = vunpack.c.0.s8 %v2490
    %v2492 = vlaneseq
    %v2493 = vshrl.u32 %v2492, 7
    %v2494 = vsub.s32 %v2491, %v2493
    %v2495 = vrot.slane %v2487, %v2494
    %v2497 = vunpack.c.l.s4 1983009808
    %v2498 = vunpack.c.0.s8 %v2497
    %v2499 = vlaneseq
    %v2500 = vshrl.u32 %v2499, 7
    %v2501 = vsub.s32 %v2498, %v2500
    %v2502 = vrot.slane %v2488, %v2501
    %v2503 = vcombine.low %v2495, %v2502
    %v2504 = vcombine.low %v2475, %v2476
    %v2505 = vcombine.low %v2477, %v2478
    %v2507 = vunpack.c.l.s4 1983009808
    %v2508 = vunpack.c.0.s8 %v2507
    %v2509 = vlaneseq
    %v2510 = vshrl.u32 %v2509, 7
    %v2511 = vsub.s32 %v2508, %v2510
    %v2512 = vrot.slane %v2504, %v2511
    %v2514 = vunpack.c.l.s4 1983009808
    %v2515 = vunpack.c.0.s8 %v2514
    %v2516 = vlaneseq
    %v2517 = vshrl.u32 %v2516, 7
    %v2518 = vsub.s32 %v2515, %v2517
    %v2519 = vrot.slane %v2505, %v2518
    %v2520 = vcombine.low %v2512, %v2519
    %v2523 = vpack.c.bf16 %v2520, %v2503
    %v2524 = vld [vmem:[#allocation5 + $0x50] sm:$0xf]
    %v2525 = vld [vmem:[#allocation5 + $0x54] sm:$0xf]
    %v2526 = vld [vmem:[#allocation5 + $0x58] sm:$0xf]
    %v2527 = vld [vmem:[#allocation5 + $0x5c] sm:$0xf]
    %v2528 = vlaneseq
    %v2529 = vshrl.u32 %v2528, 7
    %v2530 = vsub.s32 3, %v2529
    %v2531 = vrot.slane %v30, %v2530
    %v2534 = vunpack.c.l.b16 %v2524
    %v2535 = vunpack.c.l.b16 %v2525
    %v2536 = vpack.c.b16 %v2535, %v2534
    %v2539 = vsel %vm1811, %v2523, 0
    %2541 = vmatprep.subr.bf16.mxu0 0
    %2542 = vmatpush1.bf16.msra.mxu0 %v2536
    %2543 = vmatprep.subr.bf16.mxu0 0
    %2544 = vmatpush1.bf16.msra.mxu0 0
    %2545 = vmatprep.subr.bf16.mxu0 0
    %2546 = vmatpush1.bf16.msra.mxu0 0
    %2547 = vmatprep.subr.bf16.mxu0 0
    %2548 = vmatpush1.bf16.msra.mxu0 0
    %2549 = vmatprep.subr.bf16.mxu0 0
    %2550 = vmatpush1.bf16.msra.mxu0 0
    %2551 = vmatprep.subr.bf16.mxu0 0
    %2552 = vmatpush1.bf16.msra.mxu0 0
    %2553 = vmatprep.subr.bf16.mxu0 0
    %2554 = vmatpush1.bf16.msra.mxu0 0
    %2555 = vmatprep.subr.bf16.mxu0 0
    %2556 = vmatpush1.bf16.msra.mxu0 0
    %2557 = vmatprep.subr.bf16.mxu0 0
    %2558 = vmatpush1.bf16.msra.mxu0 0
    %2559 = vmatprep.subr.bf16.mxu0 0
    %2560 = vmatpush1.bf16.msra.mxu0 0
    %2561 = vmatprep.subr.bf16.mxu0 0
    %2562 = vmatpush1.bf16.msra.mxu0 0
    %2563 = vmatprep.subr.bf16.mxu0 0
    %2564 = vmatpush1.bf16.msra.mxu0 0
    %2565 = vmatprep.subr.bf16.mxu0 0
    %2566 = vmatpush1.bf16.msra.mxu0 0
    %2567 = vmatprep.subr.bf16.mxu0 0
    %2568 = vmatpush1.bf16.msra.mxu0 0
    %2569 = vmatprep.subr.bf16.mxu0 0
    %2570 = vmatpush1.bf16.msra.mxu0 0
    %2571 = vmatprep.subr.bf16.mxu0 0
    %2572 = vmatpush1.bf16.msra.mxu0 0
    %2573 = vmatprep.mubr.bf16.mxu0 0
    %2574 = vmatmul.mubr.bf16.gmra.mrb[0].mxu0 %v2539
    %v2575 = vpop.f32.mrb[0].mxu0
    %v2576 = vadd.f32 %v2531, %v2575
    %v2577 = vpop.f32.mrb[0].mxu0
    %v2578 = vpop.f32.mrb[0].mxu0
    %v2579 = vadd.f32 %v2531, %v2578
    %v2580 = vpop.f32.mrb[0].mxu0
    %2581 = vdwg.mxu0
    %v2584 = vcombine.high %v2576, %v2576
    %v2586 = vunpack.c.l.s4 1983009808
    %v2587 = vunpack.c.0.s8 %v2586
    %v2588 = vlaneseq
    %v2589 = vshrl.u32 %v2588, 7
    %v2590 = vsub.s32 %v2587, %v2589
    %v2591 = vrot.slane %v2576, %v2590
    %v2593 = vunpack.c.l.s4 1983009808
    %v2594 = vunpack.c.0.s8 %v2593
    %v2595 = vlaneseq
    %v2596 = vshrl.u32 %v2595, 7
    %v2597 = vsub.s32 %v2594, %v2596
    %v2598 = vrot.slane %v2584, %v2597
    %v2599 = vcombine.high %v2591, %v2591
    %v2600 = vcombine.high %v2598, %v2598
    %v2601 = vcombine.high %v2579, %v2579
    %v2603 = vunpack.c.l.s4 1983009808
    %v2604 = vunpack.c.0.s8 %v2603
    %v2605 = vlaneseq
    %v2606 = vshrl.u32 %v2605, 7
    %v2607 = vsub.s32 %v2604, %v2606
    %v2608 = vrot.slane %v2579, %v2607
    %v2610 = vunpack.c.l.s4 1983009808
    %v2611 = vunpack.c.0.s8 %v2610
    %v2612 = vlaneseq
    %v2613 = vshrl.u32 %v2612, 7
    %v2614 = vsub.s32 %v2611, %v2613
    %v2615 = vrot.slane %v2601, %v2614
    %v2616 = vcombine.high %v2608, %v2608
    %v2617 = vcombine.high %v2615, %v2615
    %v2628 = vunpack.c.l.b16 %v2526
    %v2629 = vunpack.c.l.b16 %v2527
    %v2630 = vpack.c.b16 %v2629, %v2628
    %2632 = vmatprep.subr.bf16.mxu0 0
    %2633 = vmatpush1.bf16.msra.mxu0 %v2630
    %2634 = vmatprep.subr.bf16.mxu0 0
    %2635 = vmatpush1.bf16.msra.mxu0 0
    %2636 = vmatprep.subr.bf16.mxu0 0
    %2637 = vmatpush1.bf16.msra.mxu0 0
    %2638 = vmatprep.subr.bf16.mxu0 0
    %2639 = vmatpush1.bf16.msra.mxu0 0
    %2640 = vmatprep.subr.bf16.mxu0 0
    %2641 = vmatpush1.bf16.msra.mxu0 0
    %2642 = vmatprep.subr.bf16.mxu0 0
    %2643 = vmatpush1.bf16.msra.mxu0 0
    %2644 = vmatprep.subr.bf16.mxu0 0
    %2645 = vmatpush1.bf16.msra.mxu0 0
    %2646 = vmatprep.subr.bf16.mxu0 0
    %2647 = vmatpush1.bf16.msra.mxu0 0
    %2648 = vmatprep.subr.bf16.mxu0 0
    %2649 = vmatpush1.bf16.msra.mxu0 0
    %2650 = vmatprep.subr.bf16.mxu0 0
    %2651 = vmatpush1.bf16.msra.mxu0 0
    %2652 = vmatprep.subr.bf16.mxu0 0
    %2653 = vmatpush1.bf16.msra.mxu0 0
    %2654 = vmatprep.subr.bf16.mxu0 0
    %2655 = vmatpush1.bf16.msra.mxu0 0
    %2656 = vmatprep.subr.bf16.mxu0 0
    %2657 = vmatpush1.bf16.msra.mxu0 0
    %2658 = vmatprep.subr.bf16.mxu0 0
    %2659 = vmatpush1.bf16.msra.mxu0 0
    %2660 = vmatprep.subr.bf16.mxu0 0
    %2661 = vmatpush1.bf16.msra.mxu0 0
    %2662 = vmatprep.subr.bf16.mxu0 0
    %2663 = vmatpush1.bf16.msra.mxu0 0
    %2664 = vmatprep.mubr.bf16.mxu0 0
    %2665 = vmatmul.mubr.bf16.gmra.mrb[0].mxu0 %v1812
    %v2666 = vpop.f32.mrb[0].mxu0
    %v2667 = vadd.f32 0.0, %v2666
    %v2668 = vpop.f32.mrb[0].mxu0
    %v2669 = vpop.f32.mrb[0].mxu0
    %v2670 = vpop.f32.mrb[0].mxu0
    %2671 = vdwg.mxu0
    %v2672 = vadd.f32 %v2591, %v2667
    %v2673 = vmul.f32 %v2672, 0.5
    %v2674 = vtanh.pop %v2673
    %v2675 = vmul.f32 %v2674, 0.5
    %v2676 = vadd.f32 %v2675, 0.5
    %v2677 = vtanh.pop %v2672
    %v2678 = vmul.f32 %v2676, 0.0
    %2680 = vrot.lane.b32.xlu0 %v2677, 96
    %v2681 = vpop.permute.xlu0 %2680
    %v2683 = vmul.f32 %v2676, %v2681
    %2685 = vrot.lane.b32.xlu0 %v2683, 16
    %v2686 = vpop.permute.xlu0 %2685
    %v2688 = vadd.f32 %v2678, %v2686
    %v2689 = vtanh.pop %v2688
    %2691 = vrot.lane.b32.xlu0 %v2689, 32
    %v2692 = vpop.permute.xlu0 %2691
    %v2694 = vmul.f32 %v2676, %v2692
    %v2697 = vunpack.c.l.s4 1983009808
    %v2698 = vunpack.c.0.s8 %v2697
    %v2699 = vlaneseq
    %v2700 = vshrl.u32 %v2699, 7
    %v2701 = vsub.s32 %v2698, %v2700
    %v2702 = vrot.slane %v2694, %v2701
    %2703 = vrot.lane.b32.xlu0 %v2702, 80
    %v2704 = vpop.permute.xlu0 %2703
    %2706 = vst.msk [vmem:[#allocation8] sm:$0x3] %vm1888, %v2704
    %v2707 = vpack.c.bf16 %v2694, %v2694
    %2709 = vrot.lane.b32.xlu0 %v2707, 80
    %v2710 = vpop.permute.xlu0 %2709
    %v2712 = vsel %vm1811, %v2710, 0
    %2714 = vmatprep.subr.bf16.mxu0 0
    %2715 = vmatpush1.bf16.msra.mxu0 %v2630
    %2716 = vmatprep.subr.bf16.mxu0 0
    %2717 = vmatpush1.bf16.msra.mxu0 0
    %2718 = vmatprep.subr.bf16.mxu0 0
    %2719 = vmatpush1.bf16.msra.mxu0 0
    %2720 = vmatprep.subr.bf16.mxu0 0
    %2721 = vmatpush1.bf16.msra.mxu0 0
    %2722 = vmatprep.subr.bf16.mxu0 0
    %2723 = vmatpush1.bf16.msra.mxu0 0
    %2724 = vmatprep.subr.bf16.mxu0 0
    %2725 = vmatpush1.bf16.msra.mxu0 0
    %2726 = vmatprep.subr.bf16.mxu0 0
    %2727 = vmatpush1.bf16.msra.mxu0 0
    %2728 = vmatprep.subr.bf16.mxu0 0
    %2729 = vmatpush1.bf16.msra.mxu0 0
    %2730 = vmatprep.subr.bf16.mxu0 0
    %2731 = vmatpush1.bf16.msra.mxu0 0
    %2732 = vmatprep.subr.bf16.mxu0 0
    %2733 = vmatpush1.bf16.msra.mxu0 0
    %2734 = vmatprep.subr.bf16.mxu0 0
    %2735 = vmatpush1.bf16.msra.mxu0 0
    %2736 = vmatprep.subr.bf16.mxu0 0
    %2737 = vmatpush1.bf16.msra.mxu0 0
    %2738 = vmatprep.subr.bf16.mxu0 0
    %2739 = vmatpush1.bf16.msra.mxu0 0
    %2740 = vmatprep.subr.bf16.mxu0 0
    %2741 = vmatpush1.bf16.msra.mxu0 0
    %2742 = vmatprep.subr.bf16.mxu0 0
    %2743 = vmatpush1.bf16.msra.mxu0 0
    %2744 = vmatprep.subr.bf16.mxu0 0
    %2745 = vmatpush1.bf16.msra.mxu0 0
    %2746 = vmatprep.mubr.bf16.mxu0 0
    %2747 = vmatmul.mubr.bf16.gmra.mrb[0].mxu0 %v2712
    %v2748 = vpop.f32.mrb[0].mxu0
    %v2749 = vadd.f32 0.0, %v2748
    %v2750 = vpop.f32.mrb[0].mxu0
    %v2751 = vpop.f32.mrb[0].mxu0
    %v2752 = vpop.f32.mrb[0].mxu0
    %2753 = vdwg.mxu0
    %v2754 = vadd.f32 %v2599, %v2749
    %v2755 = vmul.f32 %v2754, 0.5
    %v2756 = vtanh.pop %v2755
    %v2757 = vmul.f32 %v2756, 0.5
    %v2758 = vadd.f32 %v2757, 0.5
    %v2759 = vtanh.pop %v2754
    %v2760 = vmul.f32 %v2758, %v2688
    %2762 = vrot.lane.b32.xlu0 %v2759, 96
    %v2763 = vpop.permute.xlu0 %2762
    %v2765 = vmul.f32 %v2758, %v2763
    %2767 = vrot.lane.b32.xlu0 %v2765, 16
    %v2768 = vpop.permute.xlu0 %2767
    %v2770 = vadd.f32 %v2760, %v2768
    %v2771 = vtanh.pop %v2770
    %2773 = vrot.lane.b32.xlu0 %v2771, 32
    %v2774 = vpop.permute.xlu0 %2773
    %v2776 = vmul.f32 %v2758, %v2774
    %v2779 = vunpack.c.l.s4 1983009808
    %v2780 = vunpack.c.0.s8 %v2779
    %v2781 = vlaneseq
    %v2782 = vshrl.u32 %v2781, 7
    %v2783 = vsub.s32 %v2780, %v2782
    %v2784 = vrot.slane %v2776, %v2783
    %2785 = vrot.lane.b32.xlu0 %v2784, 96
    %v2786 = vpop.permute.xlu0 %2785
    %vm2788 = vcmask 255104
    %2789 = vst.msk [vmem:[#allocation8] sm:$0x3] %vm2788, %v2786
    %v2790 = vpack.c.bf16 %v2776, %v2776
    %2792 = vrot.lane.b32.xlu0 %v2790, 80
    %v2793 = vpop.permute.xlu0 %2792
    %v2795 = vsel %vm1811, %v2793, 0
    %2797 = vmatprep.subr.bf16.mxu0 0
    %2798 = vmatpush1.bf16.msra.mxu0 %v2630
    %2799 = vmatprep.subr.bf16.mxu0 0
    %2800 = vmatpush1.bf16.msra.mxu0 0
    %2801 = vmatprep.subr.bf16.mxu0 0
    %2802 = vmatpush1.bf16.msra.mxu0 0
    %2803 = vmatprep.subr.bf16.mxu0 0
    %2804 = vmatpush1.bf16.msra.mxu0 0
    %2805 = vmatprep.subr.bf16.mxu0 0
    %2806 = vmatpush1.bf16.msra.mxu0 0
    %2807 = vmatprep.subr.bf16.mxu0 0
    %2808 = vmatpush1.bf16.msra.mxu0 0
    %2809 = vmatprep.subr.bf16.mxu0 0
    %2810 = vmatpush1.bf16.msra.mxu0 0
    %2811 = vmatprep.subr.bf16.mxu0 0
    %2812 = vmatpush1.bf16.msra.mxu0 0
    %2813 = vmatprep.subr.bf16.mxu0 0
    %2814 = vmatpush1.bf16.msra.mxu0 0
    %2815 = vmatprep.subr.bf16.mxu0 0
    %2816 = vmatpush1.bf16.msra.mxu0 0
    %2817 = vmatprep.subr.bf16.mxu0 0
    %2818 = vmatpush1.bf16.msra.mxu0 0
    %2819 = vmatprep.subr.bf16.mxu0 0
    %2820 = vmatpush1.bf16.msra.mxu0 0
    %2821 = vmatprep.subr.bf16.mxu0 0
    %2822 = vmatpush1.bf16.msra.mxu0 0
    %2823 = vmatprep.subr.bf16.mxu0 0
    %2824 = vmatpush1.bf16.msra.mxu0 0
    %2825 = vmatprep.subr.bf16.mxu0 0
    %2826 = vmatpush1.bf16.msra.mxu0 0
    %2827 = vmatprep.subr.bf16.mxu0 0
    %2828 = vmatpush1.bf16.msra.mxu0 0
    %2829 = vmatprep.mubr.bf16.mxu0 0
    %2830 = vmatmul.mubr.bf16.gmra.mrb[0].mxu0 %v2795
    %v2831 = vpop.f32.mrb[0].mxu0
    %v2832 = vadd.f32 0.0, %v2831
    %v2833 = vpop.f32.mrb[0].mxu0
    %v2834 = vpop.f32.mrb[0].mxu0
    %v2835 = vpop.f32.mrb[0].mxu0
    %2836 = vdwg.mxu0
    %v2837 = vadd.f32 %v2598, %v2832
    %v2838 = vmul.f32 %v2837, 0.5
    %v2839 = vtanh.pop %v2838
    %v2840 = vmul.f32 %v2839, 0.5
    %v2841 = vadd.f32 %v2840, 0.5
    %v2842 = vtanh.pop %v2837
    %v2843 = vmul.f32 %v2841, %v2770
    %2845 = vrot.lane.b32.xlu0 %v2842, 96
    %v2846 = vpop.permute.xlu0 %2845
    %v2848 = vmul.f32 %v2841, %v2846
    %2850 = vrot.lane.b32.xlu0 %v2848, 16
    %v2851 = vpop.permute.xlu0 %2850
    %v2853 = vadd.f32 %v2843, %v2851
    %v2854 = vtanh.pop %v2853
    %2856 = vrot.lane.b32.xlu0 %v2854, 32
    %v2857 = vpop.permute.xlu0 %2856
    %v2859 = vmul.f32 %v2841, %v2857
    %v2862 = vunpack.c.l.s4 1983009808
    %v2863 = vunpack.c.0.s8 %v2862
    %v2864 = vlaneseq
    %v2865 = vshrl.u32 %v2864, 7
    %v2866 = vsub.s32 %v2863, %v2865
    %v2867 = vrot.slane %v2859, %v2866
    %2868 = vrot.lane.b32.xlu0 %v2867, 112
    %v2869 = vpop.permute.xlu0 %2868
    %vm2871 = vcmask 386304
    %2872 = vst.msk [vmem:[#allocation8] sm:$0x3] %vm2871, %v2869
    %v2873 = vpack.c.bf16 %v2859, %v2859
    %2875 = vrot.lane.b32.xlu0 %v2873, 80
    %v2876 = vpop.permute.xlu0 %2875
    %v2878 = vsel %vm1811, %v2876, 0
    %2880 = vmatprep.subr.bf16.mxu0 0
    %2881 = vmatpush1.bf16.msra.mxu0 %v2630
    %2882 = vmatprep.subr.bf16.mxu0 0
    %2883 = vmatpush1.bf16.msra.mxu0 0
    %2884 = vmatprep.subr.bf16.mxu0 0
    %2885 = vmatpush1.bf16.msra.mxu0 0
    %2886 = vmatprep.subr.bf16.mxu0 0
    %2887 = vmatpush1.bf16.msra.mxu0 0
    %2888 = vmatprep.subr.bf16.mxu0 0
    %2889 = vmatpush1.bf16.msra.mxu0 0
    %2890 = vmatprep.subr.bf16.mxu0 0
    %2891 = vmatpush1.bf16.msra.mxu0 0
    %2892 = vmatprep.subr.bf16.mxu0 0
    %2893 = vmatpush1.bf16.msra.mxu0 0
    %2894 = vmatprep.subr.bf16.mxu0 0
    %2895 = vmatpush1.bf16.msra.mxu0 0
    %2896 = vmatprep.subr.bf16.mxu0 0
    %2897 = vmatpush1.bf16.msra.mxu0 0
    %2898 = vmatprep.subr.bf16.mxu0 0
    %2899 = vmatpush1.bf16.msra.mxu0 0
    %2900 = vmatprep.subr.bf16.mxu0 0
    %2901 = vmatpush1.bf16.msra.mxu0 0
    %2902 = vmatprep.subr.bf16.mxu0 0
    %2903 = vmatpush1.bf16.msra.mxu0 0
    %2904 = vmatprep.subr.bf16.mxu0 0
    %2905 = vmatpush1.bf16.msra.mxu0 0
    %2906 = vmatprep.subr.bf16.mxu0 0
    %2907 = vmatpush1.bf16.msra.mxu0 0
    %2908 = vmatprep.subr.bf16.mxu0 0
    %2909 = vmatpush1.bf16.msra.mxu0 0
    %2910 = vmatprep.subr.bf16.mxu0 0
    %2911 = vmatpush1.bf16.msra.mxu0 0
    %2912 = vmatprep.mubr.bf16.mxu0 0
    %2913 = vmatmul.mubr.bf16.gmra.mrb[0].mxu0 %v2878
    %v2914 = vpop.f32.mrb[0].mxu0
    %v2915 = vadd.f32 0.0, %v2914
    %v2916 = vpop.f32.mrb[0].mxu0
    %v2917 = vpop.f32.mrb[0].mxu0
    %v2918 = vpop.f32.mrb[0].mxu0
    %2919 = vdwg.mxu0
    %v2920 = vadd.f32 %v2600, %v2915
    %v2921 = vmul.f32 %v2920, 0.5
    %v2922 = vtanh.pop %v2921
    %v2923 = vmul.f32 %v2922, 0.5
    %v2924 = vadd.f32 %v2923, 0.5
    %v2925 = vtanh.pop %v2920
    %v2926 = vmul.f32 %v2924, %v2853
    %2928 = vrot.lane.b32.xlu0 %v2925, 96
    %v2929 = vpop.permute.xlu0 %2928
    %v2931 = vmul.f32 %v2924, %v2929
    %2933 = vrot.lane.b32.xlu0 %v2931, 16
    %v2934 = vpop.permute.xlu0 %2933
    %v2936 = vadd.f32 %v2926, %v2934
    %v2937 = vtanh.pop %v2936
    %2939 = vrot.lane.b32.xlu0 %v2937, 32
    %v2940 = vpop.permute.xlu0 %2939
    %v2942 = vmul.f32 %v2924, %v2940
    %vm2943 = vcmask 517504
    %2944 = vst.msk [vmem:[#allocation8] sm:$0x3] %vm2943, %v2942
    %v2945 = vpack.c.bf16 %v2942, %v2942
    %2947 = vrot.lane.b32.xlu0 %v2945, 80
    %v2948 = vpop.permute.xlu0 %2947
    %v2950 = vsel %vm1811, %v2948, 0
    %2952 = vmatprep.subr.bf16.mxu0 0
    %2953 = vmatpush1.bf16.msra.mxu0 %v2630
    %2954 = vmatprep.subr.bf16.mxu0 0
    %2955 = vmatpush1.bf16.msra.mxu0 0
    %2956 = vmatprep.subr.bf16.mxu0 0
    %2957 = vmatpush1.bf16.msra.mxu0 0
    %2958 = vmatprep.subr.bf16.mxu0 0
    %2959 = vmatpush1.bf16.msra.mxu0 0
    %2960 = vmatprep.subr.bf16.mxu0 0
    %2961 = vmatpush1.bf16.msra.mxu0 0
    %2962 = vmatprep.subr.bf16.mxu0 0
    %2963 = vmatpush1.bf16.msra.mxu0 0
    %2964 = vmatprep.subr.bf16.mxu0 0
    %2965 = vmatpush1.bf16.msra.mxu0 0
    %2966 = vmatprep.subr.bf16.mxu0 0
    %2967 = vmatpush1.bf16.msra.mxu0 0
    %2968 = vmatprep.subr.bf16.mxu0 0
    %2969 = vmatpush1.bf16.msra.mxu0 0
    %2970 = vmatprep.subr.bf16.mxu0 0
    %2971 = vmatpush1.bf16.msra.mxu0 0
    %2972 = vmatprep.subr.bf16.mxu0 0
    %2973 = vmatpush1.bf16.msra.mxu0 0
    %2974 = vmatprep.subr.bf16.mxu0 0
    %2975 = vmatpush1.bf16.msra.mxu0 0
    %2976 = vmatprep.subr.bf16.mxu0 0
    %2977 = vmatpush1.bf16.msra.mxu0 0
    %2978 = vmatprep.subr.bf16.mxu0 0
    %2979 = vmatpush1.bf16.msra.mxu0 0
    %2980 = vmatprep.subr.bf16.mxu0 0
    %2981 = vmatpush1.bf16.msra.mxu0 0
    %2982 = vmatprep.subr.bf16.mxu0 0
    %2983 = vmatpush1.bf16.msra.mxu0 0
    %2984 = vmatprep.mubr.bf16.mxu0 0
    %2985 = vmatmul.mubr.bf16.gmra.mrb[0].mxu0 %v2950
    %v2986 = vpop.f32.mrb[0].mxu0
    %v2987 = vadd.f32 0.0, %v2986
    %v2988 = vpop.f32.mrb[0].mxu0
    %v2989 = vpop.f32.mrb[0].mxu0
    %v2990 = vpop.f32.mrb[0].mxu0
    %2991 = vdwg.mxu0
    %v2992 = vadd.f32 %v2608, %v2987
    %v2993 = vmul.f32 %v2992, 0.5
    %v2994 = vtanh.pop %v2993
    %v2995 = vmul.f32 %v2994, 0.5
    %v2996 = vadd.f32 %v2995, 0.5
    %v2997 = vtanh.pop %v2992
    %v2998 = vmul.f32 %v2996, %v2936
    %3000 = vrot.lane.b32.xlu0 %v2997, 96
    %v3001 = vpop.permute.xlu0 %3000
    %v3003 = vmul.f32 %v2996, %v3001
    %3005 = vrot.lane.b32.xlu0 %v3003, 16
    %v3006 = vpop.permute.xlu0 %3005
    %v3008 = vadd.f32 %v2998, %v3006
    %v3009 = vtanh.pop %v3008
    %3011 = vrot.lane.b32.xlu0 %v3009, 32
    %v3012 = vpop.permute.xlu0 %3011
    %v3014 = vmul.f32 %v2996, %v3012
    %v3017 = vunpack.c.l.s4 1983009808
    %v3018 = vunpack.c.0.s8 %v3017
    %v3019 = vlaneseq
    %v3020 = vshrl.u32 %v3019, 7
    %v3021 = vsub.s32 %v3018, %v3020
    %v3022 = vrot.slane %v3014, %v3021
    %3023 = vrot.lane.b32.xlu0 %v3022, 16
    %v3024 = vpop.permute.xlu0 %3023
    %vm3026 = vcmask 648704
    %3027 = vst.msk [vmem:[#allocation8] sm:$0x3] %vm3026, %v3024
    %v3028 = vpack.c.bf16 %v3014, %v3014
    %3030 = vrot.lane.b32.xlu0 %v3028, 80
    %v3031 = vpop.permute.xlu0 %3030
    %v3033 = vsel %vm1811, %v3031, 0
    %3035 = vmatprep.subr.bf16.mxu0 0
    %3036 = vmatpush1.bf16.msra.mxu0 %v2630
    %3037 = vmatprep.subr.bf16.mxu0 0
    %3038 = vmatpush1.bf16.msra.mxu0 0
    %3039 = vmatprep.subr.bf16.mxu0 0
    %3040 = vmatpush1.bf16.msra.mxu0 0
    %3041 = vmatprep.subr.bf16.mxu0 0
    %3042 = vmatpush1.bf16.msra.mxu0 0
    %3043 = vmatprep.subr.bf16.mxu0 0
    %3044 = vmatpush1.bf16.msra.mxu0 0
    %3045 = vmatprep.subr.bf16.mxu0 0
    %3046 = vmatpush1.bf16.msra.mxu0 0
    %3047 = vmatprep.subr.bf16.mxu0 0
    %3048 = vmatpush1.bf16.msra.mxu0 0
    %3049 = vmatprep.subr.bf16.mxu0 0
    %3050 = vmatpush1.bf16.msra.mxu0 0
    %3051 = vmatprep.subr.bf16.mxu0 0
    %3052 = vmatpush1.bf16.msra.mxu0 0
    %3053 = vmatprep.subr.bf16.mxu0 0
    %3054 = vmatpush1.bf16.msra.mxu0 0
    %3055 = vmatprep.subr.bf16.mxu0 0
    %3056 = vmatpush1.bf16.msra.mxu0 0
    %3057 = vmatprep.subr.bf16.mxu0 0
    %3058 = vmatpush1.bf16.msra.mxu0 0
    %3059 = vmatprep.subr.bf16.mxu0 0
    %3060 = vmatpush1.bf16.msra.mxu0 0
    %3061 = vmatprep.subr.bf16.mxu0 0
    %3062 = vmatpush1.bf16.msra.mxu0 0
    %3063 = vmatprep.subr.bf16.mxu0 0
    %3064 = vmatpush1.bf16.msra.mxu0 0
    %3065 = vmatprep.subr.bf16.mxu0 0
    %3066 = vmatpush1.bf16.msra.mxu0 0
    %3067 = vmatprep.mubr.bf16.mxu0 0
    %3068 = vmatmul.mubr.bf16.gmra.mrb[0].mxu0 %v3033
    %v3069 = vpop.f32.mrb[0].mxu0
    %v3070 = vadd.f32 0.0, %v3069
    %v3071 = vpop.f32.mrb[0].mxu0
    %v3072 = vpop.f32.mrb[0].mxu0
    %v3073 = vpop.f32.mrb[0].mxu0
    %3074 = vdwg.mxu0
    %v3075 = vadd.f32 %v2616, %v3070
    %v3076 = vmul.f32 %v3075, 0.5
    %v3077 = vtanh.pop %v3076
    %v3078 = vmul.f32 %v3077, 0.5
    %v3079 = vadd.f32 %v3078, 0.5
    %v3080 = vtanh.pop %v3075
    %v3081 = vmul.f32 %v3079, %v3008
    %3083 = vrot.lane.b32.xlu0 %v3080, 96
    %v3084 = vpop.permute.xlu0 %3083
    %v3086 = vmul.f32 %v3079, %v3084
    %3088 = vrot.lane.b32.xlu0 %v3086, 16
    %v3089 = vpop.permute.xlu0 %3088
    %v3091 = vadd.f32 %v3081, %v3089
    %v3092 = vtanh.pop %v3091
    %3094 = vrot.lane.b32.xlu0 %v3092, 32
    %v3095 = vpop.permute.xlu0 %3094
    %v3097 = vmul.f32 %v3079, %v3095
    %v3100 = vunpack.c.l.s4 1983009808
    %v3101 = vunpack.c.0.s8 %v3100
    %v3102 = vlaneseq
    %v3103 = vshrl.u32 %v3102, 7
    %v3104 = vsub.s32 %v3101, %v3103
    %v3105 = vrot.slane %v3097, %v3104
    %3106 = vrot.lane.b32.xlu0 %v3105, 32
    %v3107 = vpop.permute.xlu0 %3106
    %vm3109 = vcmask 779904
    %3110 = vst.msk [vmem:[#allocation8] sm:$0x3] %vm3109, %v3107
    %v3111 = vpack.c.bf16 %v3097, %v3097
    %3113 = vrot.lane.b32.xlu0 %v3111, 80
    %v3114 = vpop.permute.xlu0 %3113
    %v3116 = vsel %vm1811, %v3114, 0
    %3118 = vmatprep.subr.bf16.mxu0 0
    %3119 = vmatpush1.bf16.msra.mxu0 %v2630
    %3120 = vmatprep.subr.bf16.mxu0 0
    %3121 = vmatpush1.bf16.msra.mxu0 0
    %3122 = vmatprep.subr.bf16.mxu0 0
    %3123 = vmatpush1.bf16.msra.mxu0 0
    %3124 = vmatprep.subr.bf16.mxu0 0
    %3125 = vmatpush1.bf16.msra.mxu0 0
    %3126 = vmatprep.subr.bf16.mxu0 0
    %3127 = vmatpush1.bf16.msra.mxu0 0
    %3128 = vmatprep.subr.bf16.mxu0 0
    %3129 = vmatpush1.bf16.msra.mxu0 0
    %3130 = vmatprep.subr.bf16.mxu0 0
    %3131 = vmatpush1.bf16.msra.mxu0 0
    %3132 = vmatprep.subr.bf16.mxu0 0
    %3133 = vmatpush1.bf16.msra.mxu0 0
    %3134 = vmatprep.subr.bf16.mxu0 0
    %3135 = vmatpush1.bf16.msra.mxu0 0
    %3136 = vmatprep.subr.bf16.mxu0 0
    %3137 = vmatpush1.bf16.msra.mxu0 0
    %3138 = vmatprep.subr.bf16.mxu0 0
    %3139 = vmatpush1.bf16.msra.mxu0 0
    %3140 = vmatprep.subr.bf16.mxu0 0
    %3141 = vmatpush1.bf16.msra.mxu0 0
    %3142 = vmatprep.subr.bf16.mxu0 0
    %3143 = vmatpush1.bf16.msra.mxu0 0
    %3144 = vmatprep.subr.bf16.mxu0 0
    %3145 = vmatpush1.bf16.msra.mxu0 0
    %3146 = vmatprep.subr.bf16.mxu0 0
    %3147 = vmatpush1.bf16.msra.mxu0 0
    %3148 = vmatprep.subr.bf16.mxu0 0
    %3149 = vmatpush1.bf16.msra.mxu0 0
    %3150 = vmatprep.mubr.bf16.mxu0 0
    %3151 = vmatmul.mubr.bf16.gmra.mrb[0].mxu0 %v3116
    %v3152 = vpop.f32.mrb[0].mxu0
    %v3153 = vadd.f32 0.0, %v3152
    %v3154 = vpop.f32.mrb[0].mxu0
    %v3155 = vpop.f32.mrb[0].mxu0
    %v3156 = vpop.f32.mrb[0].mxu0
    %3157 = vdwg.mxu0
    %v3158 = vadd.f32 %v2615, %v3153
    %v3159 = vmul.f32 %v3158, 0.5
    %v3160 = vtanh.pop %v3159
    %v3161 = vmul.f32 %v3160, 0.5
    %v3162 = vadd.f32 %v3161, 0.5
    %v3163 = vtanh.pop %v3158
    %v3164 = vmul.f32 %v3162, %v3091
    %3166 = vrot.lane.b32.xlu0 %v3163, 96
    %v3167 = vpop.permute.xlu0 %3166
    %v3169 = vmul.f32 %v3162, %v3167
    %3171 = vrot.lane.b32.xlu0 %v3169, 16
    %v3172 = vpop.permute.xlu0 %3171
    %v3174 = vadd.f32 %v3164, %v3172
    %v3175 = vtanh.pop %v3174
    %3177 = vrot.lane.b32.xlu0 %v3175, 32
    %v3178 = vpop.permute.xlu0 %3177
    %v3180 = vmul.f32 %v3162, %v3178
    %v3183 = vunpack.c.l.s4 1983009808
    %v3184 = vunpack.c.0.s8 %v3183
    %v3185 = vlaneseq
    %v3186 = vshrl.u32 %v3185, 7
    %v3187 = vsub.s32 %v3184, %v3186
    %v3188 = vrot.slane %v3180, %v3187
    %3189 = vrot.lane.b32.xlu0 %v3188, 48
    %v3190 = vpop.permute.xlu0 %3189
    %vm3192 = vcmask 911104
    %3193 = vst.msk [vmem:[#allocation8] sm:$0x3] %vm3192, %v3190
    %v3194 = vpack.c.bf16 %v3180, %v3180
    %3196 = vrot.lane.b32.xlu0 %v3194, 80
    %v3197 = vpop.permute.xlu0 %3196
    %v3199 = vsel %vm1811, %v3197, 0
    %3201 = vmatprep.subr.bf16.mxu0 0
    %3202 = vmatpush1.bf16.msra.mxu0 %v2630
    %3203 = vmatprep.subr.bf16.mxu0 0
    %3204 = vmatpush1.bf16.msra.mxu0 0
    %3205 = vmatprep.subr.bf16.mxu0 0
    %3206 = vmatpush1.bf16.msra.mxu0 0
    %3207 = vmatprep.subr.bf16.mxu0 0
    %3208 = vmatpush1.bf16.msra.mxu0 0
    %3209 = vmatprep.subr.bf16.mxu0 0
    %3210 = vmatpush1.bf16.msra.mxu0 0
    %3211 = vmatprep.subr.bf16.mxu0 0
    %3212 = vmatpush1.bf16.msra.mxu0 0
    %3213 = vmatprep.subr.bf16.mxu0 0
    %3214 = vmatpush1.bf16.msra.mxu0 0
    %3215 = vmatprep.subr.bf16.mxu0 0
    %3216 = vmatpush1.bf16.msra.mxu0 0
    %3217 = vmatprep.subr.bf16.mxu0 0
    %3218 = vmatpush1.bf16.msra.mxu0 0
    %3219 = vmatprep.subr.bf16.mxu0 0
    %3220 = vmatpush1.bf16.msra.mxu0 0
    %3221 = vmatprep.subr.bf16.mxu0 0
    %3222 = vmatpush1.bf16.msra.mxu0 0
    %3223 = vmatprep.subr.bf16.mxu0 0
    %3224 = vmatpush1.bf16.msra.mxu0 0
    %3225 = vmatprep.subr.bf16.mxu0 0
    %3226 = vmatpush1.bf16.msra.mxu0 0
    %3227 = vmatprep.subr.bf16.mxu0 0
    %3228 = vmatpush1.bf16.msra.mxu0 0
    %3229 = vmatprep.subr.bf16.mxu0 0
    %3230 = vmatpush1.bf16.msra.mxu0 0
    %3231 = vmatprep.subr.bf16.mxu0 0
    %3232 = vmatpush1.bf16.msra.mxu0 0
    %3233 = vmatprep.mubr.bf16.mxu0 0
    %3234 = vmatmul.mubr.bf16.gmra.mrb[0].mxu0 %v3199
    %v3235 = vpop.f32.mrb[0].mxu0
    %v3236 = vadd.f32 0.0, %v3235
    %v3237 = vpop.f32.mrb[0].mxu0
    %v3238 = vpop.f32.mrb[0].mxu0
    %v3239 = vpop.f32.mrb[0].mxu0
    %3240 = vdwg.mxu0
    %v3241 = vadd.f32 %v2617, %v3236
    %v3242 = vmul.f32 %v3241, 0.5
    %v3243 = vtanh.pop %v3242
    %v3244 = vmul.f32 %v3243, 0.5
    %v3245 = vadd.f32 %v3244, 0.5
    %v3246 = vtanh.pop %v3241
    %v3247 = vmul.f32 %v3245, %v3174
    %3249 = vrot.lane.b32.xlu0 %v3246, 96
    %v3250 = vpop.permute.xlu0 %3249
    %v3252 = vmul.f32 %v3245, %v3250
    %3254 = vrot.lane.b32.xlu0 %v3252, 16
    %v3255 = vpop.permute.xlu0 %3254
    %v3257 = vadd.f32 %v3247, %v3255
    %v3258 = vtanh.pop %v3257
    %3260 = vrot.lane.b32.xlu0 %v3258, 32
    %v3261 = vpop.permute.xlu0 %3260
    %v3263 = vmul.f32 %v3245, %v3261
    %v3266 = vunpack.c.l.s4 1983009808
    %v3267 = vunpack.c.0.s8 %v3266
    %v3268 = vlaneseq
    %v3269 = vshrl.u32 %v3268, 7
    %v3270 = vsub.s32 %v3267, %v3269
    %v3271 = vrot.slane %v3263, %v3270
    %3272 = vrot.lane.b32.xlu0 %v3271, 64
    %v3273 = vpop.permute.xlu0 %3272
    %vm3275 = vcmask 1042304
    %3276 = vst.msk [vmem:[#allocation8] sm:$0x3] %vm3275, %v3273
    // Predicated region
    $region18: #{tpu_custom_call.1} parent=1 // pred_check
      _
    $region19: #{tpu_custom_call.1} parent=1 // pred_check_branch
      %3278 = sbr.rel (0) target = $region21
    $region20: #{tpu_custom_call.1} parent=1 // pred_region
      %s3280 = ssub.s32 32, 32
      %3281 = vsyncadd [#allocation7], %s3280
      %s3283 = sshll.u32 [#allocation8], 4
      %s3284 = int_to_ptr.vmem [resolvable:$true] %s3283
      %3286 = dma.vmem_to_hbm [thread:$0]  %s3284, 32, %s3, [#allocation7]
    $region21: #{tpu_custom_call.1} parent=1 // pred_fallthru
      _
    // Predicated region
    $region22: #{tpu_custom_call.1} parent=1 // pred_check
      _
    $region23: #{tpu_custom_call.1} parent=1 // pred_check_branch
      %3288 = sbr.rel (0) target = $region25
    $region24: #{tpu_custom_call.1} parent=1 // pred_region
      %3289 = dma.done [#allocation7], 32
    $region25: #{tpu_custom_call.1} parent=1 // pred_fallthru
      _
    %3290 = vsyncpa [#allocation6], 1
    %3291 = vsyncpa [#allocation7], 1

</llo_original>
